<compile_context>
chip_gen: v6e
topology: v6e:2x2x1
jax: 0.10.0
libtpu: 0.0.40
codegen_flags: <defaults>
</compile_context>

<pallas_src>
import jax
import jax.numpy as jnp
from jax.experimental import pallas as pl
from jax.experimental.pallas import tpu as pltpu

LANE = 128


def _round_up(n, m):
    return ((n + m - 1) // m) * m


def _cdiv(a, b):
    return (a + b - 1) // b


def end2end_kernel(x_ref, w1_ref, b1_ref, w2_ref, b2_ref,
                   w3_ref, b3_ref, w4_ref, b4_ref, o_ref):
    """Fused VideoFrameCNN-rep + FinalNN stack for one batch tile.

    Four matmuls on the MXU (bf16 inputs, f32 accumulation); cast + bias +
    ReLU on the VPU; everything for the tile stays in VMEM.
    """
    x = x_ref[...].astype(jnp.bfloat16)                                # f32->bf16 fused here
    h1 = jnp.dot(x, w1_ref[...], preferred_element_type=jnp.float32) + b1_ref[...]
    h1 = jnp.maximum(h1, 0.0).astype(jnp.bfloat16)
    rep = jnp.dot(h1, w2_ref[...], preferred_element_type=jnp.float32) + b2_ref[...]
    rep = jnp.maximum(rep, 0.0).astype(jnp.bfloat16)                   # padded cols are exactly 0
    # FinalNN: Linear -> ReLU -> Dropout(eval: identity) -> Linear
    h2 = jnp.dot(rep, w3_ref[...], preferred_element_type=jnp.float32) + b3_ref[...]
    h2 = jnp.maximum(h2, 0.0).astype(jnp.bfloat16)
    out = jnp.dot(h2, w4_ref[...], preferred_element_type=jnp.float32) + b4_ref[...]
    o_ref[...] = out.astype(o_ref.dtype)                               # lane-dense (TILE_B, 128)


def end2end_video_nn(x, params, *, n_classes=2, tile_b=512):
    """x: (B, C, H, W) frames.  Returns (B, n_classes) float32 logits."""
    B = x.shape[0]
    x2 = x.reshape(B, -1)                      # stays f32; bf16 cast happens in-kernel
    d_in = x2.shape[1]

    w1, b1 = params["w1"], params["b1"]
    w2, b2 = params["w2"], params["b2"]
    w3, b3 = params["w3"], params["b3"]
    w4, b4 = params["w4"], params["b4"]
    n_pad = w4.shape[1]

    # --- tile selection ------------------------------------------------------
    # Clamp to the batch (no 64x over-compute on tiny B); if a large batch
    # would collapse to a single grid step, split it so >=2 steps exist for
    # v7x's two TensorCores / megacore sharding.
    tile = min(tile_b, _round_up(max(B, 1), 8))
    if B >= 2 * LANE and _cdiv(B, tile) < 2:
        tile = _round_up(_cdiv(B, 2), 8)
    grid = (_cdiv(B, tile),)

    # --- VMEM budget guard ---------------------------------------------------
    # Weights are kept VMEM-resident via constant index_maps; the pipeline
    # still double-buffers them, so budget 2x.  Fail loudly (add a K-tiled
    # grid axis for layer 1) before this silently stops fitting on v7x (64 MiB).
    vmem_limit = 32 * 1024 * 1024
    weight_bytes = sum(int(p.size) * p.dtype.itemsize
                       for p in (w1, b1, w2, b2, w3, b3, w4, b4))
    act_bytes = tile * (d_in + n_pad) * 4                      # f32 in/out tiles
    inter_bytes = tile * (w1.shape[1] + w2.shape[1] + w3.shape[1]) * 4
    assert 2 * (weight_bytes + act_bytes) + inter_bytes < int(0.8 * vmem_limit), (
        "resident weights + activation tiles exceed the VMEM budget; "
        "add an inner 'arbitrary' K-tiling axis for layer 1 before scaling d_in")
    # TODO(synk): pipeline_mode=pl.Buffered(1) on the constant-index_map weight
    #             specs would drop the redundant second weight buffer; left at
    #             the default since the resident footprint is only ~3 MiB here.

    # Activation tiles pipeline over the batch grid; every weight/bias uses a
    # constant index_map so it is fetched once and stays VMEM-resident.
    const = lambda i: (0, 0)
    in_specs = [
        pl.BlockSpec((tile, d_in), lambda i: (i, 0)),
        pl.BlockSpec(w1.shape, const), pl.BlockSpec(b1.shape, const),
        pl.BlockSpec(w2.shape, const), pl.BlockSpec(b2.shape, const),
        pl.BlockSpec(w3.shape, const), pl.BlockSpec(b3.shape, const),
        pl.BlockSpec(w4.shape, const), pl.BlockSpec(b4.shape, const),
    ]
    out_spec = pl.BlockSpec((tile, n_pad), lambda i: (i, 0))

    rows = grid[0] * tile                                       # rows actually computed
    flops = 2 * rows * (d_in * w1.shape[1] + w2.shape[0] * w2.shape[1]
                        + w3.shape[0] * w3.shape[1] + w4.shape[0] * w4.shape[1])
    bytes_accessed = (x2.size * x2.dtype.itemsize               # f32 input, read once
                      + weight_bytes
                      + B * n_pad * 4)                          # f32 padded logits

    out = pl.pallas_call(
        end2end_kernel,
        out_shape=jax.ShapeDtypeStruct((B, n_pad), jnp.float32),
        grid_spec=pltpu.PrefetchScalarGridSpec(
            num_scalar_prefetch=0,
            grid=grid,
            in_specs=in_specs,
            out_specs=out_spec,
        ),
        compiler_params=pltpu.CompilerParams(
            dimension_semantics=("parallel",),      # batch tiles independent (megacore / v7x)
            vmem_limit_bytes=vmem_limit,            # explicit, fits v5e/v6e/v7x with headroom
        ),
        cost_estimate=pl.CostEstimate(
            flops=flops, transcendentals=0, bytes_accessed=bytes_accessed),
    )(x2, w1, b1, w2, b2, w3, b3, w4, b4)

    return out[:, :n_classes]


def _linear_init(key, fan_in, fan_out):
    """Deterministic PyTorch-nn.Linear-style init: U(-1/sqrt(fan_in), 1/sqrt(fan_in))."""
    kw, kb = jax.random.split(key)
    bound = 1.0 / jnp.sqrt(jnp.asarray(fan_in, jnp.float32))
    w = jax.random.uniform(kw, (fan_in, fan_out), jnp.float32, -bound, bound)
    b = jax.random.uniform(kb, (1, fan_out), jnp.float32, -bound, bound)
    return w, b


def make_params(key, d_in, cnn_hidden, rep_dim, hidden, n_classes):
    """Params with feature dims zero-padded to 128-multiples (lane-dense).

    Padded rows/cols are zero-initialized so they cannot leak into real
    outputs.  Weights stored bf16 (MXU fast path), biases f32.
    """
    k1, k2, k3, k4 = jax.random.split(key, 4)
    rep_pad = _round_up(rep_dim, LANE)
    hid_pad = _round_up(hidden, LANE)
    n_pad = _round_up(n_classes, LANE)

    w1, b1 = _linear_init(k1, d_in, cnn_hidden)      # VideoFrameCNN fc1
    w2, b2 = _linear_init(k2, cnn_hidden, rep_dim)   # VideoFrameCNN fc2 -> 300
    w3, b3 = _linear_init(k3, rep_dim, hidden)       # FinalNN fc1
    w4, b4 = _linear_init(k4, hidden, n_classes)     # FinalNN fc2 -> 2

    pad_w = lambda w, r, c: jnp.pad(w, ((0, r - w.shape[0]), (0, c - w.shape[1])))
    pad_b = lambda b, c: jnp.pad(b, ((0, 0), (0, c - b.shape[1])))

    params = dict(
        w1=pad_w(w1, d_in, cnn_hidden).astype(jnp.bfloat16), b1=pad_b(b1, cnn_hidden),
        w2=pad_w(w2, cnn_hidden, rep_pad).astype(jnp.bfloat16), b2=pad_b(b2, rep_pad),
        w3=pad_w(w3, rep_pad, hid_pad).astype(jnp.bfloat16), b3=pad_b(b3, hid_pad),
        w4=pad_w(w4, hid_pad, n_pad).astype(jnp.bfloat16), b4=pad_b(b4, n_pad),
    )
    meta = dict(rep_dim=rep_dim, hidden=hidden, n_classes=n_classes)
    return params, meta


def reference_forward(x, p, meta):
    """Pure-JAX reference with the same precision path, using UNPADDED weight slices."""
    B = x.shape[0]
    rep_dim, hidden, n_classes = meta["rep_dim"], meta["hidden"], meta["n_classes"]
    xb = x.reshape(B, -1).astype(jnp.bfloat16)

    def lin(h, w, b):
        return jnp.dot(h, w, preferred_element_type=jnp.float32) + b

    h1 = jnp.maximum(lin(xb, p["w1"], p["b1"]), 0.0).astype(jnp.bfloat16)
    rep = jnp.maximum(lin(h1, p["w2"][:, :rep_dim], p["b2"][:, :rep_dim]), 0.0).astype(jnp.bfloat16)
    h2 = jnp.maximum(lin(rep, p["w3"][:rep_dim, :hidden], p["b3"][:, :hidden]), 0.0).astype(jnp.bfloat16)
    return lin(h2, p["w4"][:hidden, :n_classes], p["b4"][:, :n_classes])


if __name__ == "__main__":
    key = jax.random.PRNGKey(0)
    k_x, k_p = jax.random.split(key)

    B, C, H, W = 2, 3, 16, 16     # small synthetic video-frame batch
    D_IN = C * H * W              # 768 (already a 128-multiple)
    CNN_HIDDEN = 1024
    REP_DIM = 300                 # VideoFrameCNN output / FinalNN input_size
    HIDDEN = 1024                 # FinalNN hidden_size (module default)
    N_CLASSES = 2

    x = jax.random.normal(k_x, (B, C, H, W), jnp.float32)
    params, meta = make_params(k_p, D_IN, CNN_HIDDEN, REP_DIM, HIDDEN, N_CLASSES)

    out = end2end_video_nn(x, params, n_classes=N_CLASSES)
    out = jax.block_until_ready(out)

    ref = reference_forward(x, params, meta)
    assert out.shape == (B, N_CLASSES), out.shape
    assert jnp.allclose(out, ref, atol=1e-2, rtol=1e-2), "mismatch vs JAX reference"

    print("KERNEL_OK")
</pallas_src>

<mosaic_0001>
module attributes {stable_mosaic.version = 11 : i64} {
  func.func @end2end_kernel(%arg0: i32, %arg1: memref<8x768xf32, #tpu.memory_space<vmem>>, %arg2: memref<768x1024xbf16, #tpu.memory_space<vmem>>, %arg3: memref<1x1024xf32, #tpu.memory_space<vmem>>, %arg4: memref<1024x384xbf16, #tpu.memory_space<vmem>>, %arg5: memref<1x384xf32, #tpu.memory_space<vmem>>, %arg6: memref<384x1024xbf16, #tpu.memory_space<vmem>>, %arg7: memref<1x1024xf32, #tpu.memory_space<vmem>>, %arg8: memref<1024x128xbf16, #tpu.memory_space<vmem>>, %arg9: memref<1x128xf32, #tpu.memory_space<vmem>>, %arg10: memref<8x128xf32, #tpu.memory_space<vmem>>) attributes {dimension_semantics = [#tpu.dimension_semantics<parallel>], iteration_bounds = array<i64: 1>, scalar_prefetch = 0 : i64, scratch_operands = 0 : i64, tpu.core_type = #tpu.core_type<tc>, window_params = [{transform_indices = @transform_0, window_bounds = array<i64: 8, 768>}, {pipeline_mode = #tpu.pipeline_mode<synchronous>, transform_indices = @transform_1, window_bounds = array<i64: 768, 1024>}, {pipeline_mode = #tpu.pipeline_mode<synchronous>, transform_indices = @transform_2, window_bounds = array<i64: 1, 1024>}, {pipeline_mode = #tpu.pipeline_mode<synchronous>, transform_indices = @transform_3, window_bounds = array<i64: 1024, 384>}, {pipeline_mode = #tpu.pipeline_mode<synchronous>, transform_indices = @transform_4, window_bounds = array<i64: 1, 384>}, {pipeline_mode = #tpu.pipeline_mode<synchronous>, transform_indices = @transform_5, window_bounds = array<i64: 384, 1024>}, {pipeline_mode = #tpu.pipeline_mode<synchronous>, transform_indices = @transform_6, window_bounds = array<i64: 1, 1024>}, {pipeline_mode = #tpu.pipeline_mode<synchronous>, transform_indices = @transform_7, window_bounds = array<i64: 1024, 128>}, {pipeline_mode = #tpu.pipeline_mode<synchronous>, transform_indices = @transform_8, window_bounds = array<i64: 1, 128>}, {transform_indices = @transform_9, window_bounds = array<i64: 8, 128>}]} {
    %c0 = arith.constant 0 : index
    %c0_0 = arith.constant 0 : index
    %0 = vector.load %arg1[%c0, %c0_0] : memref<8x768xf32, #tpu.memory_space<vmem>>, vector<8x768xf32>
    %1 = arith.truncf %0 : vector<8x768xf32> to vector<8x768xbf16>
    %c0_1 = arith.constant 0 : index
    %c0_2 = arith.constant 0 : index
    %2 = vector.load %arg2[%c0_1, %c0_2] : memref<768x1024xbf16, #tpu.memory_space<vmem>>, vector<768x1024xbf16>
    %cst = arith.constant dense<0.000000e+00> : vector<8x1024xf32>
    %3 = tpu.matmul %1, %2, %cst {dimension_numbers = #tpu.dot_dimension_numbers<[1], [0], [0], [1], [0, 0, 1, 1], [], []>} : vector<8x768xbf16>, vector<768x1024xbf16>, vector<8x1024xf32> -> vector<8x1024xf32>
    %c0_3 = arith.constant 0 : index
    %c0_4 = arith.constant 0 : index
    %4 = vector.load %arg3[%c0_3, %c0_4] : memref<1x1024xf32, #tpu.memory_space<vmem>>, vector<1x1024xf32>
    %5 = vector.broadcast %4 : vector<1x1024xf32> to vector<8x1024xf32>
    %6 = arith.addf %3, %5 : vector<8x1024xf32>
    %cst_5 = arith.constant 0.000000e+00 : f32
    %7 = vector.broadcast %cst_5 : f32 to vector<8x1024xf32>
    %8 = arith.maximumf %6, %7 : vector<8x1024xf32>
    %9 = arith.truncf %8 : vector<8x1024xf32> to vector<8x1024xbf16>
    %c0_6 = arith.constant 0 : index
    %c0_7 = arith.constant 0 : index
    %10 = vector.load %arg4[%c0_6, %c0_7] : memref<1024x384xbf16, #tpu.memory_space<vmem>>, vector<1024x384xbf16>
    %cst_8 = arith.constant dense<0.000000e+00> : vector<8x384xf32>
    %11 = tpu.matmul %9, %10, %cst_8 {dimension_numbers = #tpu.dot_dimension_numbers<[1], [0], [0], [1], [0, 0, 1, 1], [], []>} : vector<8x1024xbf16>, vector<1024x384xbf16>, vector<8x384xf32> -> vector<8x384xf32>
    %c0_9 = arith.constant 0 : index
    %c0_10 = arith.constant 0 : index
    %12 = vector.load %arg5[%c0_9, %c0_10] : memref<1x384xf32, #tpu.memory_space<vmem>>, vector<1x384xf32>
    %13 = vector.broadcast %12 : vector<1x384xf32> to vector<8x384xf32>
    %14 = arith.addf %11, %13 : vector<8x384xf32>
    %cst_11 = arith.constant 0.000000e+00 : f32
    %15 = vector.broadcast %cst_11 : f32 to vector<8x384xf32>
    %16 = arith.maximumf %14, %15 : vector<8x384xf32>
    %17 = arith.truncf %16 : vector<8x384xf32> to vector<8x384xbf16>
    %c0_12 = arith.constant 0 : index
    %c0_13 = arith.constant 0 : index
    %18 = vector.load %arg6[%c0_12, %c0_13] : memref<384x1024xbf16, #tpu.memory_space<vmem>>, vector<384x1024xbf16>
    %cst_14 = arith.constant dense<0.000000e+00> : vector<8x1024xf32>
    %19 = tpu.matmul %17, %18, %cst_14 {dimension_numbers = #tpu.dot_dimension_numbers<[1], [0], [0], [1], [0, 0, 1, 1], [], []>} : vector<8x384xbf16>, vector<384x1024xbf16>, vector<8x1024xf32> -> vector<8x1024xf32>
    %c0_15 = arith.constant 0 : index
    %c0_16 = arith.constant 0 : index
    %20 = vector.load %arg7[%c0_15, %c0_16] : memref<1x1024xf32, #tpu.memory_space<vmem>>, vector<1x1024xf32>
    %21 = vector.broadcast %20 : vector<1x1024xf32> to vector<8x1024xf32>
    %22 = arith.addf %19, %21 : vector<8x1024xf32>
    %cst_17 = arith.constant 0.000000e+00 : f32
    %23 = vector.broadcast %cst_17 : f32 to vector<8x1024xf32>
    %24 = arith.maximumf %22, %23 : vector<8x1024xf32>
    %25 = arith.truncf %24 : vector<8x1024xf32> to vector<8x1024xbf16>
    %c0_18 = arith.constant 0 : index
    %c0_19 = arith.constant 0 : index
    %26 = vector.load %arg8[%c0_18, %c0_19] : memref<1024x128xbf16, #tpu.memory_space<vmem>>, vector<1024x128xbf16>
    %cst_20 = arith.constant dense<0.000000e+00> : vector<8x128xf32>
    %27 = tpu.matmul %25, %26, %cst_20 {dimension_numbers = #tpu.dot_dimension_numbers<[1], [0], [0], [1], [0, 0, 1, 1], [], []>} : vector<8x1024xbf16>, vector<1024x128xbf16>, vector<8x128xf32> -> vector<8x128xf32>
    %c0_21 = arith.constant 0 : index
    %c0_22 = arith.constant 0 : index
    %28 = vector.load %arg9[%c0_21, %c0_22] : memref<1x128xf32, #tpu.memory_space<vmem>>, vector<1x128xf32>
    %29 = vector.broadcast %28 : vector<1x128xf32> to vector<8x128xf32>
    %30 = arith.addf %27, %29 : vector<8x128xf32>
    %c0_23 = arith.constant 0 : index
    %c0_24 = arith.constant 0 : index
    %31 = vector.load %arg10[%c0_23, %c0_24] : memref<8x128xf32, #tpu.memory_space<vmem>>, vector<8x128xf32>
    tpu.vector_store %arg10[%c0_23, %c0_24], %30 {strides = array<i32>} : memref<8x128xf32, #tpu.memory_space<vmem>>, vector<8x128xf32>,
    return
  }
  func.func @transform_0(%arg0: i32) -> (i32, i32) {
    %c0_i32 = arith.constant 0 : i32
    %c0_i32_0 = arith.constant 0 : i32
    return %arg0, %c0_i32 : i32, i32
  }
  func.func @transform_1(%arg0: i32) -> (i32, i32) {
    %c0_i32 = arith.constant 0 : i32
    %c0_i32_0 = arith.constant 0 : i32
    %c0_i32_1 = arith.constant 0 : i32
    return %c0_i32, %c0_i32_0 : i32, i32
  }
  func.func @transform_2(%arg0: i32) -> (i32, i32) {
    %c0_i32 = arith.constant 0 : i32
    %c0_i32_0 = arith.constant 0 : i32
    %c0_i32_1 = arith.constant 0 : i32
    return %c0_i32, %c0_i32_0 : i32, i32
  }
  func.func @transform_3(%arg0: i32) -> (i32, i32) {
    %c0_i32 = arith.constant 0 : i32
    %c0_i32_0 = arith.constant 0 : i32
    %c0_i32_1 = arith.constant 0 : i32
    return %c0_i32, %c0_i32_0 : i32, i32
  }
  func.func @transform_4(%arg0: i32) -> (i32, i32) {
    %c0_i32 = arith.constant 0 : i32
    %c0_i32_0 = arith.constant 0 : i32
    %c0_i32_1 = arith.constant 0 : i32
    return %c0_i32, %c0_i32_0 : i32, i32
  }
  func.func @transform_5(%arg0: i32) -> (i32, i32) {
    %c0_i32 = arith.constant 0 : i32
    %c0_i32_0 = arith.constant 0 : i32
    %c0_i32_1 = arith.constant 0 : i32
    return %c0_i32, %c0_i32_0 : i32, i32
  }
  func.func @transform_6(%arg0: i32) -> (i32, i32) {
    %c0_i32 = arith.constant 0 : i32
    %c0_i32_0 = arith.constant 0 : i32
    %c0_i32_1 = arith.constant 0 : i32
    return %c0_i32, %c0_i32_0 : i32, i32
  }
  func.func @transform_7(%arg0: i32) -> (i32, i32) {
    %c0_i32 = arith.constant 0 : i32
    %c0_i32_0 = arith.constant 0 : i32
    %c0_i32_1 = arith.constant 0 : i32
    return %c0_i32, %c0_i32_0 : i32, i32
  }
  func.func @transform_8(%arg0: i32) -> (i32, i32) {
    %c0_i32 = arith.constant 0 : i32
    %c0_i32_0 = arith.constant 0 : i32
    %c0_i32_1 = arith.constant 0 : i32
    return %c0_i32, %c0_i32_0 : i32, i32
  }
  func.func @transform_9(%arg0: i32) -> (i32, i32) {
    %c0_i32 = arith.constant 0 : i32
    %c0_i32_0 = arith.constant 0 : i32
    return %arg0, %c0_i32 : i32, i32
  }
}

</mosaic_0001>

<llo_original>
// kernel: tpu_custom_call.1
$region0: #{tpu_custom_call.1}
  #allocation0 [shape = 'u32[]', space=smem, size = 0x4, offset = 0x4, fixed_abs, tag = 'smem constant byte address 0x4 - core index']
  #allocation1 [shape = 'u32[144,128]{1,0:T(1,128)}', space=vmem, size = 0x12000, scoped, tag = 'internal scratch']
  %s0 = inlined_call_operand.hbm [shape: f32[2,768], index: 0, kind: input, shape index: {}]
  %s1 = inlined_call_operand.hbm [shape: bf16[768,1024], index: 1, kind: input, shape index: {}]
  %s2 = inlined_call_operand.hbm [shape: f32[1,1024], index: 2, kind: input, shape index: {}]
  %s3 = inlined_call_operand.hbm [shape: bf16[1024,384], index: 3, kind: input, shape index: {}]
  %s4 = inlined_call_operand.hbm [shape: f32[1,384], index: 4, kind: input, shape index: {}]
  %s5 = inlined_call_operand.hbm [shape: bf16[384,1024], index: 5, kind: input, shape index: {}]
  %s6 = inlined_call_operand.hbm [shape: f32[1,1024], index: 6, kind: input, shape index: {}]
  %s7 = inlined_call_operand.hbm [shape: bf16[1024,128], index: 7, kind: input, shape index: {}]
  %s8 = inlined_call_operand.hbm [shape: f32[1,128], index: 8, kind: input, shape index: {}]
  %s9 = inlined_call_operand.hbm [shape: f32[2,128], index: 9, kind: output, shape index: {}]
  %s10 = sld [smem:[#allocation0]]
  $region82: #{tpu_custom_call.1} parent=0
    _
  %s12 = ssub.s32 1, %s10
  %s13 = scalar_select 0, %s12, %s10
  $region1: #{tpu_custom_call.1} parent=0
    #allocation2 [shape = 'u8[24576]{0}', space=vmem, size = 0x6000, scoped, tag = 'input window, operand 0, single buffered']
    #allocation3 [shape = 's32[1]{0}', space=sflag, size = 0x4, scoped, tag = 'scoped memory for tpu_custom_call.1']
    #allocation4 [shape = 's32[1]{0}', space=sflag, size = 0x4, scoped, tag = 'scoped memory for tpu_custom_call.1']
    #allocation5 [shape = 'u8[1572864]{0}', space=vmem, size = 0x180000, scoped, tag = 'input window, operand 1, single buffered']
    #allocation6 [shape = 's32[1]{0}', space=sflag, size = 0x4, scoped, tag = 'scoped memory for tpu_custom_call.1']
    #allocation7 [shape = 'u8[4096]{0}', space=vmem, size = 0x1000, scoped, tag = 'input window, operand 2, single buffered']
    #allocation8 [shape = 'u8[786432]{0}', space=vmem, size = 0xc0000, scoped, tag = 'input window, operand 3, single buffered']
    #allocation9 [shape = 's32[1]{0}', space=sflag, size = 0x4, scoped, tag = 'scoped memory for tpu_custom_call.1']
    #allocation10 [shape = 'u8[1536]{0}', space=vmem, size = 0x800, scoped, tag = 'input window, operand 4, single buffered']
    #allocation11 [shape = 'u8[786432]{0}', space=vmem, size = 0xc0000, scoped, tag = 'input window, operand 5, single buffered']
    #allocation12 [shape = 's32[1]{0}', space=sflag, size = 0x4, scoped, tag = 'scoped memory for tpu_custom_call.1']
    #allocation13 [shape = 'u8[4096]{0}', space=vmem, size = 0x1000, scoped, tag = 'input window, operand 6, single buffered']
    #allocation14 [shape = 'u8[262144]{0}', space=vmem, size = 0x40000, scoped, tag = 'input window, operand 7, single buffered']
    #allocation15 [shape = 's32[1]{0}', space=sflag, size = 0x4, scoped, tag = 'scoped memory for tpu_custom_call.1']
    #allocation16 [shape = 'u8[512]{0}', space=vmem, size = 0x400, scoped, tag = 'input window, operand 8, single buffered']
    #allocation17 [shape = 'u8[4096]{0}', space=vmem, size = 0x1000, scoped, tag = 'output window, operand 0, single buffered']
    %14 = vsyncpa [#allocation3], 0
    %15 = vsyncpa [#allocation6], 0
    %16 = vsyncpa [#allocation9], 0
    %17 = vsyncpa [#allocation12], 0
    %18 = vsyncpa [#allocation15], 0
    %19 = vsyncpa [#allocation4], 0
    // Predicated region
    $region2: #{tpu_custom_call.1} parent=1 // pred_check
      _
    $region3: #{tpu_custom_call.1} parent=1 // pred_check_branch
      %21 = sbr.rel (0) target = $region5
    $region4: #{tpu_custom_call.1} parent=1 // pred_region
      %s23 = ssub.s32 768, 192
      %24 = vsyncadd [#allocation3], %s23
      %s25 = sshll.u32 [#allocation2], 4
      %s26 = int_to_ptr.vmem [resolvable:$true] %s25
      %31 = dma.hbm_to_vmem [thread:$0]  %s0, 192, %s26, [#allocation3], 192, 192, 12
    $region5: #{tpu_custom_call.1} parent=1 // pred_fallthru
      _
    // Predicated region
    $region6: #{tpu_custom_call.1} parent=1 // pred_check
      _
    $region7: #{tpu_custom_call.1} parent=1 // pred_check_branch
      %33 = sbr.rel (0) target = $region9
    $region8: #{tpu_custom_call.1} parent=1 // pred_region
      %s35 = ssub.s32 49152, 49152
      %36 = vsyncadd [#allocation6], %s35
      %s37 = sshll.u32 [#allocation5], 4
      %s38 = int_to_ptr.vmem [resolvable:$true] %s37
      %43 = dma.hbm_to_vmem [thread:$0]  %s1, 49152, %s38, [#allocation6], 512, 512, 32
    $region9: #{tpu_custom_call.1} parent=1 // pred_fallthru
      _
    // Predicated region
    $region10: #{tpu_custom_call.1} parent=1 // pred_check
      _
    $region11: #{tpu_custom_call.1} parent=1 // pred_check_branch
      %45 = sbr.rel (0) target = $region13
    $region12: #{tpu_custom_call.1} parent=1 // pred_region
      %s47 = ssub.s32 128, 128
      %48 = vsyncadd [#allocation6], %s47
      %s50 = sshll.u32 [#allocation7], 4
      %s51 = int_to_ptr.vmem [resolvable:$true] %s50
      %53 = dma.hbm_to_vmem [thread:$0]  %s2, 128, %s51, [#allocation6]
    $region13: #{tpu_custom_call.1} parent=1 // pred_fallthru
      _
    // Predicated region
    $region14: #{tpu_custom_call.1} parent=1 // pred_check
      _
    $region15: #{tpu_custom_call.1} parent=1 // pred_check_branch
      %55 = sbr.rel (0) target = $region17
    $region16: #{tpu_custom_call.1} parent=1 // pred_region
      %s57 = ssub.s32 24576, 24576
      %58 = vsyncadd [#allocation9], %s57
      %s59 = sshll.u32 [#allocation8], 4
      %s60 = int_to_ptr.vmem [resolvable:$true] %s59
      %65 = dma.hbm_to_vmem [thread:$0]  %s3, 24576, %s60, [#allocation9], 192, 192, 12
    $region17: #{tpu_custom_call.1} parent=1 // pred_fallthru
      _
    // Predicated region
    $region18: #{tpu_custom_call.1} parent=1 // pred_check
      _
    $region19: #{tpu_custom_call.1} parent=1 // pred_check_branch
      %67 = sbr.rel (0) target = $region21
    $region20: #{tpu_custom_call.1} parent=1 // pred_region
      %s69 = ssub.s32 48, 48
      %70 = vsyncadd [#allocation9], %s69
      %s72 = sshll.u32 [#allocation10], 4
      %s73 = int_to_ptr.vmem [resolvable:$true] %s72
      %75 = dma.hbm_to_vmem [thread:$0]  %s4, 48, %s73, [#allocation9]
    $region21: #{tpu_custom_call.1} parent=1 // pred_fallthru
      _
    // Predicated region
    $region22: #{tpu_custom_call.1} parent=1 // pred_check
      _
    $region23: #{tpu_custom_call.1} parent=1 // pred_check_branch
      %77 = sbr.rel (0) target = $region25
    $region24: #{tpu_custom_call.1} parent=1 // pred_region
      %s79 = ssub.s32 24576, 24576
      %80 = vsyncadd [#allocation12], %s79
      %s81 = sshll.u32 [#allocation11], 4
      %s82 = int_to_ptr.vmem [resolvable:$true] %s81
      %87 = dma.hbm_to_vmem [thread:$0]  %s5, 24576, %s82, [#allocation12], 512, 512, 32
    $region25: #{tpu_custom_call.1} parent=1 // pred_fallthru
      _
    // Predicated region
    $region26: #{tpu_custom_call.1} parent=1 // pred_check
      _
    $region27: #{tpu_custom_call.1} parent=1 // pred_check_branch
      %89 = sbr.rel (0) target = $region29
    $region28: #{tpu_custom_call.1} parent=1 // pred_region
      %s91 = ssub.s32 128, 128
      %92 = vsyncadd [#allocation12], %s91
      %s94 = sshll.u32 [#allocation13], 4
      %s95 = int_to_ptr.vmem [resolvable:$true] %s94
      %97 = dma.hbm_to_vmem [thread:$0]  %s6, 128, %s95, [#allocation12]
    $region29: #{tpu_custom_call.1} parent=1 // pred_fallthru
      _
    // Predicated region
    $region30: #{tpu_custom_call.1} parent=1 // pred_check
      _
    $region31: #{tpu_custom_call.1} parent=1 // pred_check_branch
      %99 = sbr.rel (0) target = $region33
    $region32: #{tpu_custom_call.1} parent=1 // pred_region
      %s101 = ssub.s32 8192, 8192
      %102 = vsyncadd [#allocation15], %s101
      %s103 = sshll.u32 [#allocation14], 4
      %s104 = int_to_ptr.vmem [resolvable:$true] %s103
      %109 = dma.hbm_to_vmem [thread:$0]  %s7, 8192, %s104, [#allocation15], 64, 64, 4
    $region33: #{tpu_custom_call.1} parent=1 // pred_fallthru
      _
    // Predicated region
    $region34: #{tpu_custom_call.1} parent=1 // pred_check
      _
    $region35: #{tpu_custom_call.1} parent=1 // pred_check_branch
      %111 = sbr.rel (0) target = $region37
    $region36: #{tpu_custom_call.1} parent=1 // pred_region
      %s113 = ssub.s32 16, 16
      %114 = vsyncadd [#allocation15], %s113
      %s116 = sshll.u32 [#allocation16], 4
      %s117 = int_to_ptr.vmem [resolvable:$true] %s116
      %119 = dma.hbm_to_vmem [thread:$0]  %s8, 16, %s117, [#allocation15]
    $region37: #{tpu_custom_call.1} parent=1 // pred_fallthru
      _
    // Predicated region
    $region38: #{tpu_custom_call.1} parent=1 // pred_check
      _
    $region39: #{tpu_custom_call.1} parent=1 // pred_check_branch
      %121 = sbr.rel (0) target = $region41
    $region40: #{tpu_custom_call.1} parent=1 // pred_region
      %122 = dma.done [#allocation3], 768
    $region41: #{tpu_custom_call.1} parent=1 // pred_fallthru
      _
    // Predicated region
    $region42: #{tpu_custom_call.1} parent=1 // pred_check
      _
    $region43: #{tpu_custom_call.1} parent=1 // pred_check_branch
      %124 = sbr.rel (0) target = $region45
    $region44: #{tpu_custom_call.1} parent=1 // pred_region
      %125 = dma.done [#allocation6], 49152
    $region45: #{tpu_custom_call.1} parent=1 // pred_fallthru
      _
    // Predicated region
    $region46: #{tpu_custom_call.1} parent=1 // pred_check
      _
    $region47: #{tpu_custom_call.1} parent=1 // pred_check_branch
      %127 = sbr.rel (0) target = $region49
    $region48: #{tpu_custom_call.1} parent=1 // pred_region
      %128 = dma.done [#allocation6], 128
    $region49: #{tpu_custom_call.1} parent=1 // pred_fallthru
      _
    // Predicated region
    $region50: #{tpu_custom_call.1} parent=1 // pred_check
      _
    $region51: #{tpu_custom_call.1} parent=1 // pred_check_branch
      %130 = sbr.rel (0) target = $region53
    $region52: #{tpu_custom_call.1} parent=1 // pred_region
      %131 = dma.done [#allocation9], 24576
    $region53: #{tpu_custom_call.1} parent=1 // pred_fallthru
      _
    // Predicated region
    $region54: #{tpu_custom_call.1} parent=1 // pred_check
      _
    $region55: #{tpu_custom_call.1} parent=1 // pred_check_branch
      %133 = sbr.rel (0) target = $region57
    $region56: #{tpu_custom_call.1} parent=1 // pred_region
      %134 = dma.done [#allocation9], 48
    $region57: #{tpu_custom_call.1} parent=1 // pred_fallthru
      _
    // Predicated region
    $region58: #{tpu_custom_call.1} parent=1 // pred_check
      _
    $region59: #{tpu_custom_call.1} parent=1 // pred_check_branch
      %136 = sbr.rel (0) target = $region61
    $region60: #{tpu_custom_call.1} parent=1 // pred_region
      %137 = dma.done [#allocation12], 24576
    $region61: #{tpu_custom_call.1} parent=1 // pred_fallthru
      _
    // Predicated region
    $region62: #{tpu_custom_call.1} parent=1 // pred_check
      _
    $region63: #{tpu_custom_call.1} parent=1 // pred_check_branch
      %139 = sbr.rel (0) target = $region65
    $region64: #{tpu_custom_call.1} parent=1 // pred_region
      %140 = dma.done [#allocation12], 128
    $region65: #{tpu_custom_call.1} parent=1 // pred_fallthru
      _
    // Predicated region
    $region66: #{tpu_custom_call.1} parent=1 // pred_check
      _
    $region67: #{tpu_custom_call.1} parent=1 // pred_check_branch
      %142 = sbr.rel (0) target = $region69
    $region68: #{tpu_custom_call.1} parent=1 // pred_region
      %143 = dma.done [#allocation15], 8192
    $region69: #{tpu_custom_call.1} parent=1 // pred_fallthru
      _
    // Predicated region
    $region70: #{tpu_custom_call.1} parent=1 // pred_check
      _
    $region71: #{tpu_custom_call.1} parent=1 // pred_check_branch
      %145 = sbr.rel (0) target = $region73
    $region72: #{tpu_custom_call.1} parent=1 // pred_region
      %146 = dma.done [#allocation15], 16
    $region73: #{tpu_custom_call.1} parent=1 // pred_fallthru
      _
    %v148 = vld [vmem:[#allocation2] sm:$0xff]
    %v149 = vld [vmem:[#allocation2 + $0x8] sm:$0xf]
    %v150 = vld [vmem:[#allocation2 + $0xc] sm:$0xff]
    %v151 = vld [vmem:[#allocation2 + $0x14] sm:$0xf]
    %v152 = vld [vmem:[#allocation2 + $0x18] sm:$0xff]
    %v153 = vld [vmem:[#allocation2 + $0x20] sm:$0xf]
    %v154 = vld [vmem:[#allocation2 + $0x24] sm:$0xff]
    %v155 = vld [vmem:[#allocation2 + $0x2c] sm:$0xf]
    %v164 = vcombine.low %v148, %v150
    %v165 = vcombine.high %v148, %v150
    %v166 = vcombine.low %v152, %v154
    %v167 = vcombine.high %v152, %v154
    %v169 = vunpack.c.l.s4 1983009808
    %v170 = vunpack.c.0.s8 %v169
    %v171 = vlaneseq
    %v172 = vshrl.u32 %v171, 7
    %v173 = vsub.s32 %v170, %v172
    %v174 = vrot.slane %v164, %v173
    %v176 = vunpack.c.l.s4 1983009808
    %v177 = vunpack.c.0.s8 %v176
    %v178 = vlaneseq
    %v179 = vshrl.u32 %v178, 7
    %v180 = vsub.s32 %v177, %v179
    %v181 = vrot.slane %v165, %v180
    %v183 = vunpack.c.l.s4 1983009808
    %v184 = vunpack.c.0.s8 %v183
    %v185 = vlaneseq
    %v186 = vshrl.u32 %v185, 7
    %v187 = vsub.s32 %v184, %v186
    %v188 = vrot.slane %v166, %v187
    %v190 = vunpack.c.l.s4 1983009808
    %v191 = vunpack.c.0.s8 %v190
    %v192 = vlaneseq
    %v193 = vshrl.u32 %v192, 7
    %v194 = vsub.s32 %v191, %v193
    %v195 = vrot.slane %v167, %v194
    %v196 = vcombine.low %v174, %v188
    %v197 = vcombine.high %v174, %v188
    %v198 = vcombine.low %v181, %v195
    %v199 = vcombine.high %v181, %v195
    %v200 = vcombine.low %v149, %v151
    %v201 = vcombine.low %v153, %v155
    %v203 = vunpack.c.l.s4 1983009808
    %v204 = vunpack.c.0.s8 %v203
    %v205 = vlaneseq
    %v206 = vshrl.u32 %v205, 7
    %v207 = vsub.s32 %v204, %v206
    %v208 = vrot.slane %v200, %v207
    %v210 = vunpack.c.l.s4 1983009808
    %v211 = vunpack.c.0.s8 %v210
    %v212 = vlaneseq
    %v213 = vshrl.u32 %v212, 7
    %v214 = vsub.s32 %v211, %v213
    %v215 = vrot.slane %v201, %v214
    %v216 = vcombine.low %v208, %v215
    %v217 = vcombine.high %v208, %v215
    %v224 = vpack.c.bf16 %v196, %v196
    %v225 = vpack.c.bf16 %v197, %v197
    %v226 = vpack.c.bf16 %v198, %v198
    %v227 = vpack.c.bf16 %v199, %v199
    %v228 = vpack.c.bf16 %v216, %v216
    %v229 = vpack.c.bf16 %v217, %v217
    %v230 = vld [vmem:[#allocation5] sm:$0xff]
    %v231 = vld [vmem:[#allocation5 + $0x8] sm:$0xff]
    %v232 = vld [vmem:[#allocation5 + $0x10] sm:$0xff]
    %v233 = vld [vmem:[#allocation5 + $0x18] sm:$0xff]
    %v234 = vld [vmem:[#allocation5 + $0x20] sm:$0xff]
    %v235 = vld [vmem:[#allocation5 + $0x28] sm:$0xff]
    %v236 = vld [vmem:[#allocation5 + $0x30] sm:$0xff]
    %v237 = vld [vmem:[#allocation5 + $0x38] sm:$0xff]
    %v238 = vld [vmem:[#allocation5 + $0x40] sm:$0xff]
    %v239 = vld [vmem:[#allocation5 + $0x48] sm:$0xff]
    %v240 = vld [vmem:[#allocation5 + $0x50] sm:$0xff]
    %v241 = vld [vmem:[#allocation5 + $0x58] sm:$0xff]
    %v242 = vld [vmem:[#allocation5 + $0x60] sm:$0xff]
    %v243 = vld [vmem:[#allocation5 + $0x68] sm:$0xff]
    %v244 = vld [vmem:[#allocation5 + $0x70] sm:$0xff]
    %v245 = vld [vmem:[#allocation5 + $0x78] sm:$0xff]
    %v246 = vld [vmem:[#allocation5 + $0x80] sm:$0xff]
    %v247 = vld [vmem:[#allocation5 + $0x88] sm:$0xff]
    %v248 = vld [vmem:[#allocation5 + $0x90] sm:$0xff]
    %v249 = vld [vmem:[#allocation5 + $0x98] sm:$0xff]
    %v250 = vld [vmem:[#allocation5 + $0xa0] sm:$0xff]
    %v251 = vld [vmem:[#allocation5 + $0xa8] sm:$0xff]
    %v252 = vld [vmem:[#allocation5 + $0xb0] sm:$0xff]
    %v253 = vld [vmem:[#allocation5 + $0xb8] sm:$0xff]
    %v254 = vld [vmem:[#allocation5 + $0xc0] sm:$0xff]
    %v255 = vld [vmem:[#allocation5 + $0xc8] sm:$0xff]
    %v256 = vld [vmem:[#allocation5 + $0xd0] sm:$0xff]
    %v257 = vld [vmem:[#allocation5 + $0xd8] sm:$0xff]
    %v258 = vld [vmem:[#allocation5 + $0xe0] sm:$0xff]
    %v259 = vld [vmem:[#allocation5 + $0xe8] sm:$0xff]
    %v260 = vld [vmem:[#allocation5 + $0xf0] sm:$0xff]
    %v261 = vld [vmem:[#allocation5 + $0xf8] sm:$0xff]
    %v262 = vld [vmem:[#allocation5 + $0x100] sm:$0xff]
    %v263 = vld [vmem:[#allocation5 + $0x108] sm:$0xff]
    %v264 = vld [vmem:[#allocation5 + $0x110] sm:$0xff]
    %v265 = vld [vmem:[#allocation5 + $0x118] sm:$0xff]
    %v266 = vld [vmem:[#allocation5 + $0x120] sm:$0xff]
    %v267 = vld [vmem:[#allocation5 + $0x128] sm:$0xff]
    %v268 = vld [vmem:[#allocation5 + $0x130] sm:$0xff]
    %v269 = vld [vmem:[#allocation5 + $0x138] sm:$0xff]
    %v270 = vld [vmem:[#allocation5 + $0x140] sm:$0xff]
    %v271 = vld [vmem:[#allocation5 + $0x148] sm:$0xff]
    %v272 = vld [vmem:[#allocation5 + $0x150] sm:$0xff]
    %v273 = vld [vmem:[#allocation5 + $0x158] sm:$0xff]
    %v274 = vld [vmem:[#allocation5 + $0x160] sm:$0xff]
    %v275 = vld [vmem:[#allocation5 + $0x168] sm:$0xff]
    %v276 = vld [vmem:[#allocation5 + $0x170] sm:$0xff]
    %v277 = vld [vmem:[#allocation5 + $0x178] sm:$0xff]
    %v278 = vld [vmem:[#allocation5 + $0x180] sm:$0xff]
    %v279 = vld [vmem:[#allocation5 + $0x188] sm:$0xff]
    %v280 = vld [vmem:[#allocation5 + $0x190] sm:$0xff]
    %v281 = vld [vmem:[#allocation5 + $0x198] sm:$0xff]
    %v282 = vld [vmem:[#allocation5 + $0x1a0] sm:$0xff]
    %v283 = vld [vmem:[#allocation5 + $0x1a8] sm:$0xff]
    %v284 = vld [vmem:[#allocation5 + $0x1b0] sm:$0xff]
    %v285 = vld [vmem:[#allocation5 + $0x1b8] sm:$0xff]
    %v286 = vld [vmem:[#allocation5 + $0x1c0] sm:$0xff]
    %v287 = vld [vmem:[#allocation5 + $0x1c8] sm:$0xff]
    %v288 = vld [vmem:[#allocation5 + $0x1d0] sm:$0xff]
    %v289 = vld [vmem:[#allocation5 + $0x1d8] sm:$0xff]
    %v290 = vld [vmem:[#allocation5 + $0x1e0] sm:$0xff]
    %v291 = vld [vmem:[#allocation5 + $0x1e8] sm:$0xff]
    %v292 = vld [vmem:[#allocation5 + $0x1f0] sm:$0xff]
    %v293 = vld [vmem:[#allocation5 + $0x1f8] sm:$0xff]
    %v294 = vld [vmem:[#allocation5 + $0x200] sm:$0xff]
    %v295 = vld [vmem:[#allocation5 + $0x208] sm:$0xff]
    %v296 = vld [vmem:[#allocation5 + $0x210] sm:$0xff]
    %v297 = vld [vmem:[#allocation5 + $0x218] sm:$0xff]
    %v298 = vld [vmem:[#allocation5 + $0x220] sm:$0xff]
    %v299 = vld [vmem:[#allocation5 + $0x228] sm:$0xff]
    %v300 = vld [vmem:[#allocation5 + $0x230] sm:$0xff]
    %v301 = vld [vmem:[#allocation5 + $0x238] sm:$0xff]
    %v302 = vld [vmem:[#allocation5 + $0x240] sm:$0xff]
    %v303 = vld [vmem:[#allocation5 + $0x248] sm:$0xff]
    %v304 = vld [vmem:[#allocation5 + $0x250] sm:$0xff]
    %v305 = vld [vmem:[#allocation5 + $0x258] sm:$0xff]
    %v306 = vld [vmem:[#allocation5 + $0x260] sm:$0xff]
    %v307 = vld [vmem:[#allocation5 + $0x268] sm:$0xff]
    %v308 = vld [vmem:[#allocation5 + $0x270] sm:$0xff]
    %v309 = vld [vmem:[#allocation5 + $0x278] sm:$0xff]
    %v310 = vld [vmem:[#allocation5 + $0x280] sm:$0xff]
    %v311 = vld [vmem:[#allocation5 + $0x288] sm:$0xff]
    %v312 = vld [vmem:[#allocation5 + $0x290] sm:$0xff]
    %v313 = vld [vmem:[#allocation5 + $0x298] sm:$0xff]
    %v314 = vld [vmem:[#allocation5 + $0x2a0] sm:$0xff]
    %v315 = vld [vmem:[#allocation5 + $0x2a8] sm:$0xff]
    %v316 = vld [vmem:[#allocation5 + $0x2b0] sm:$0xff]
    %v317 = vld [vmem:[#allocation5 + $0x2b8] sm:$0xff]
    %v318 = vld [vmem:[#allocation5 + $0x2c0] sm:$0xff]
    %v319 = vld [vmem:[#allocation5 + $0x2c8] sm:$0xff]
    %v320 = vld [vmem:[#allocation5 + $0x2d0] sm:$0xff]
    %v321 = vld [vmem:[#allocation5 + $0x2d8] sm:$0xff]
    %v322 = vld [vmem:[#allocation5 + $0x2e0] sm:$0xff]
    %v323 = vld [vmem:[#allocation5 + $0x2e8] sm:$0xff]
    %v324 = vld [vmem:[#allocation5 + $0x2f0] sm:$0xff]
    %v325 = vld [vmem:[#allocation5 + $0x2f8] sm:$0xff]
    %v326 = vld [vmem:[#allocation5 + $0x300] sm:$0xff]
    %v327 = vld [vmem:[#allocation5 + $0x308] sm:$0xff]
    %v328 = vld [vmem:[#allocation5 + $0x310] sm:$0xff]
    %v329 = vld [vmem:[#allocation5 + $0x318] sm:$0xff]
    %v330 = vld [vmem:[#allocation5 + $0x320] sm:$0xff]
    %v331 = vld [vmem:[#allocation5 + $0x328] sm:$0xff]
    %v332 = vld [vmem:[#allocation5 + $0x330] sm:$0xff]
    %v333 = vld [vmem:[#allocation5 + $0x338] sm:$0xff]
    %v334 = vld [vmem:[#allocation5 + $0x340] sm:$0xff]
    %v335 = vld [vmem:[#allocation5 + $0x348] sm:$0xff]
    %v336 = vld [vmem:[#allocation5 + $0x350] sm:$0xff]
    %v337 = vld [vmem:[#allocation5 + $0x358] sm:$0xff]
    %v338 = vld [vmem:[#allocation5 + $0x360] sm:$0xff]
    %v339 = vld [vmem:[#allocation5 + $0x368] sm:$0xff]
    %v340 = vld [vmem:[#allocation5 + $0x370] sm:$0xff]
    %v341 = vld [vmem:[#allocation5 + $0x378] sm:$0xff]
    %v342 = vld [vmem:[#allocation5 + $0x380] sm:$0xff]
    %v343 = vld [vmem:[#allocation5 + $0x388] sm:$0xff]
    %v344 = vld [vmem:[#allocation5 + $0x390] sm:$0xff]
    %v345 = vld [vmem:[#allocation5 + $0x398] sm:$0xff]
    %v346 = vld [vmem:[#allocation5 + $0x3a0] sm:$0xff]
    %v347 = vld [vmem:[#allocation5 + $0x3a8] sm:$0xff]
    %v348 = vld [vmem:[#allocation5 + $0x3b0] sm:$0xff]
    %v349 = vld [vmem:[#allocation5 + $0x3b8] sm:$0xff]
    %v350 = vld [vmem:[#allocation5 + $0x3c0] sm:$0xff]
    %v351 = vld [vmem:[#allocation5 + $0x3c8] sm:$0xff]
    %v352 = vld [vmem:[#allocation5 + $0x3d0] sm:$0xff]
    %v353 = vld [vmem:[#allocation5 + $0x3d8] sm:$0xff]
    %v354 = vld [vmem:[#allocation5 + $0x3e0] sm:$0xff]
    %v355 = vld [vmem:[#allocation5 + $0x3e8] sm:$0xff]
    %v356 = vld [vmem:[#allocation5 + $0x3f0] sm:$0xff]
    %v357 = vld [vmem:[#allocation5 + $0x3f8] sm:$0xff]
    %v358 = vld [vmem:[#allocation5 + $0x400] sm:$0xff]
    %v359 = vld [vmem:[#allocation5 + $0x408] sm:$0xff]
    %v360 = vld [vmem:[#allocation5 + $0x410] sm:$0xff]
    %v361 = vld [vmem:[#allocation5 + $0x418] sm:$0xff]
    %v362 = vld [vmem:[#allocation5 + $0x420] sm:$0xff]
    %v363 = vld [vmem:[#allocation5 + $0x428] sm:$0xff]
    %v364 = vld [vmem:[#allocation5 + $0x430] sm:$0xff]
    %v365 = vld [vmem:[#allocation5 + $0x438] sm:$0xff]
    %v366 = vld [vmem:[#allocation5 + $0x440] sm:$0xff]
    %v367 = vld [vmem:[#allocation5 + $0x448] sm:$0xff]
    %v368 = vld [vmem:[#allocation5 + $0x450] sm:$0xff]
    %v369 = vld [vmem:[#allocation5 + $0x458] sm:$0xff]
    %v370 = vld [vmem:[#allocation5 + $0x460] sm:$0xff]
    %v371 = vld [vmem:[#allocation5 + $0x468] sm:$0xff]
    %v372 = vld [vmem:[#allocation5 + $0x470] sm:$0xff]
    %v373 = vld [vmem:[#allocation5 + $0x478] sm:$0xff]
    %v374 = vld [vmem:[#allocation5 + $0x480] sm:$0xff]
    %v375 = vld [vmem:[#allocation5 + $0x488] sm:$0xff]
    %v376 = vld [vmem:[#allocation5 + $0x490] sm:$0xff]
    %v377 = vld [vmem:[#allocation5 + $0x498] sm:$0xff]
    %v378 = vld [vmem:[#allocation5 + $0x4a0] sm:$0xff]
    %v379 = vld [vmem:[#allocation5 + $0x4a8] sm:$0xff]
    %v380 = vld [vmem:[#allocation5 + $0x4b0] sm:$0xff]
    %v381 = vld [vmem:[#allocation5 + $0x4b8] sm:$0xff]
    %v382 = vld [vmem:[#allocation5 + $0x4c0] sm:$0xff]
    %v383 = vld [vmem:[#allocation5 + $0x4c8] sm:$0xff]
    %v384 = vld [vmem:[#allocation5 + $0x4d0] sm:$0xff]
    %v385 = vld [vmem:[#allocation5 + $0x4d8] sm:$0xff]
    %v386 = vld [vmem:[#allocation5 + $0x4e0] sm:$0xff]
    %v387 = vld [vmem:[#allocation5 + $0x4e8] sm:$0xff]
    %v388 = vld [vmem:[#allocation5 + $0x4f0] sm:$0xff]
    %v389 = vld [vmem:[#allocation5 + $0x4f8] sm:$0xff]
    %v390 = vld [vmem:[#allocation5 + $0x500] sm:$0xff]
    %v391 = vld [vmem:[#allocation5 + $0x508] sm:$0xff]
    %v392 = vld [vmem:[#allocation5 + $0x510] sm:$0xff]
    %v393 = vld [vmem:[#allocation5 + $0x518] sm:$0xff]
    %v394 = vld [vmem:[#allocation5 + $0x520] sm:$0xff]
    %v395 = vld [vmem:[#allocation5 + $0x528] sm:$0xff]
    %v396 = vld [vmem:[#allocation5 + $0x530] sm:$0xff]
    %v397 = vld [vmem:[#allocation5 + $0x538] sm:$0xff]
    %v398 = vld [vmem:[#allocation5 + $0x540] sm:$0xff]
    %v399 = vld [vmem:[#allocation5 + $0x548] sm:$0xff]
    %v400 = vld [vmem:[#allocation5 + $0x550] sm:$0xff]
    %v401 = vld [vmem:[#allocation5 + $0x558] sm:$0xff]
    %v402 = vld [vmem:[#allocation5 + $0x560] sm:$0xff]
    %v403 = vld [vmem:[#allocation5 + $0x568] sm:$0xff]
    %v404 = vld [vmem:[#allocation5 + $0x570] sm:$0xff]
    %v405 = vld [vmem:[#allocation5 + $0x578] sm:$0xff]
    %v406 = vld [vmem:[#allocation5 + $0x580] sm:$0xff]
    %v407 = vld [vmem:[#allocation5 + $0x588] sm:$0xff]
    %v408 = vld [vmem:[#allocation5 + $0x590] sm:$0xff]
    %v409 = vld [vmem:[#allocation5 + $0x598] sm:$0xff]
    %v410 = vld [vmem:[#allocation5 + $0x5a0] sm:$0xff]
    %v411 = vld [vmem:[#allocation5 + $0x5a8] sm:$0xff]
    %v412 = vld [vmem:[#allocation5 + $0x5b0] sm:$0xff]
    %v413 = vld [vmem:[#allocation5 + $0x5b8] sm:$0xff]
    %v414 = vld [vmem:[#allocation5 + $0x5c0] sm:$0xff]
    %v415 = vld [vmem:[#allocation5 + $0x5c8] sm:$0xff]
    %v416 = vld [vmem:[#allocation5 + $0x5d0] sm:$0xff]
    %v417 = vld [vmem:[#allocation5 + $0x5d8] sm:$0xff]
    %v418 = vld [vmem:[#allocation5 + $0x5e0] sm:$0xff]
    %v419 = vld [vmem:[#allocation5 + $0x5e8] sm:$0xff]
    %v420 = vld [vmem:[#allocation5 + $0x5f0] sm:$0xff]
    %v421 = vld [vmem:[#allocation5 + $0x5f8] sm:$0xff]
    %v422 = vld [vmem:[#allocation5 + $0x600] sm:$0xff]
    %v423 = vld [vmem:[#allocation5 + $0x608] sm:$0xff]
    %v424 = vld [vmem:[#allocation5 + $0x610] sm:$0xff]
    %v425 = vld [vmem:[#allocation5 + $0x618] sm:$0xff]
    %v426 = vld [vmem:[#allocation5 + $0x620] sm:$0xff]
    %v427 = vld [vmem:[#allocation5 + $0x628] sm:$0xff]
    %v428 = vld [vmem:[#allocation5 + $0x630] sm:$0xff]
    %v429 = vld [vmem:[#allocation5 + $0x638] sm:$0xff]
    %v430 = vld [vmem:[#allocation5 + $0x640] sm:$0xff]
    %v431 = vld [vmem:[#allocation5 + $0x648] sm:$0xff]
    %v432 = vld [vmem:[#allocation5 + $0x650] sm:$0xff]
    %v433 = vld [vmem:[#allocation5 + $0x658] sm:$0xff]
    %v434 = vld [vmem:[#allocation5 + $0x660] sm:$0xff]
    %v435 = vld [vmem:[#allocation5 + $0x668] sm:$0xff]
    %v436 = vld [vmem:[#allocation5 + $0x670] sm:$0xff]
    %v437 = vld [vmem:[#allocation5 + $0x678] sm:$0xff]
    %v438 = vld [vmem:[#allocation5 + $0x680] sm:$0xff]
    %v439 = vld [vmem:[#allocation5 + $0x688] sm:$0xff]
    %v440 = vld [vmem:[#allocation5 + $0x690] sm:$0xff]
    %v441 = vld [vmem:[#allocation5 + $0x698] sm:$0xff]
    %v442 = vld [vmem:[#allocation5 + $0x6a0] sm:$0xff]
    %v443 = vld [vmem:[#allocation5 + $0x6a8] sm:$0xff]
    %v444 = vld [vmem:[#allocation5 + $0x6b0] sm:$0xff]
    %v445 = vld [vmem:[#allocation5 + $0x6b8] sm:$0xff]
    %v446 = vld [vmem:[#allocation5 + $0x6c0] sm:$0xff]
    %v447 = vld [vmem:[#allocation5 + $0x6c8] sm:$0xff]
    %v448 = vld [vmem:[#allocation5 + $0x6d0] sm:$0xff]
    %v449 = vld [vmem:[#allocation5 + $0x6d8] sm:$0xff]
    %v450 = vld [vmem:[#allocation5 + $0x6e0] sm:$0xff]
    %v451 = vld [vmem:[#allocation5 + $0x6e8] sm:$0xff]
    %v452 = vld [vmem:[#allocation5 + $0x6f0] sm:$0xff]
    %v453 = vld [vmem:[#allocation5 + $0x6f8] sm:$0xff]
    %v454 = vld [vmem:[#allocation5 + $0x700] sm:$0xff]
    %v455 = vld [vmem:[#allocation5 + $0x708] sm:$0xff]
    %v456 = vld [vmem:[#allocation5 + $0x710] sm:$0xff]
    %v457 = vld [vmem:[#allocation5 + $0x718] sm:$0xff]
    %v458 = vld [vmem:[#allocation5 + $0x720] sm:$0xff]
    %v459 = vld [vmem:[#allocation5 + $0x728] sm:$0xff]
    %v460 = vld [vmem:[#allocation5 + $0x730] sm:$0xff]
    %v461 = vld [vmem:[#allocation5 + $0x738] sm:$0xff]
    %v462 = vld [vmem:[#allocation5 + $0x740] sm:$0xff]
    %v463 = vld [vmem:[#allocation5 + $0x748] sm:$0xff]
    %v464 = vld [vmem:[#allocation5 + $0x750] sm:$0xff]
    %v465 = vld [vmem:[#allocation5 + $0x758] sm:$0xff]
    %v466 = vld [vmem:[#allocation5 + $0x760] sm:$0xff]
    %v467 = vld [vmem:[#allocation5 + $0x768] sm:$0xff]
    %v468 = vld [vmem:[#allocation5 + $0x770] sm:$0xff]
    %v469 = vld [vmem:[#allocation5 + $0x778] sm:$0xff]
    %v470 = vld [vmem:[#allocation5 + $0x780] sm:$0xff]
    %v471 = vld [vmem:[#allocation5 + $0x788] sm:$0xff]
    %v472 = vld [vmem:[#allocation5 + $0x790] sm:$0xff]
    %v473 = vld [vmem:[#allocation5 + $0x798] sm:$0xff]
    %v474 = vld [vmem:[#allocation5 + $0x7a0] sm:$0xff]
    %v475 = vld [vmem:[#allocation5 + $0x7a8] sm:$0xff]
    %v476 = vld [vmem:[#allocation5 + $0x7b0] sm:$0xff]
    %v477 = vld [vmem:[#allocation5 + $0x7b8] sm:$0xff]
    %v478 = vld [vmem:[#allocation5 + $0x7c0] sm:$0xff]
    %v479 = vld [vmem:[#allocation5 + $0x7c8] sm:$0xff]
    %v480 = vld [vmem:[#allocation5 + $0x7d0] sm:$0xff]
    %v481 = vld [vmem:[#allocation5 + $0x7d8] sm:$0xff]
    %v482 = vld [vmem:[#allocation5 + $0x7e0] sm:$0xff]
    %v483 = vld [vmem:[#allocation5 + $0x7e8] sm:$0xff]
    %v484 = vld [vmem:[#allocation5 + $0x7f0] sm:$0xff]
    %v485 = vld [vmem:[#allocation5 + $0x7f8] sm:$0xff]
    %v486 = vld [vmem:[#allocation5 + $0x800] sm:$0xff]
    %v487 = vld [vmem:[#allocation5 + $0x808] sm:$0xff]
    %v488 = vld [vmem:[#allocation5 + $0x810] sm:$0xff]
    %v489 = vld [vmem:[#allocation5 + $0x818] sm:$0xff]
    %v490 = vld [vmem:[#allocation5 + $0x820] sm:$0xff]
    %v491 = vld [vmem:[#allocation5 + $0x828] sm:$0xff]
    %v492 = vld [vmem:[#allocation5 + $0x830] sm:$0xff]
    %v493 = vld [vmem:[#allocation5 + $0x838] sm:$0xff]
    %v494 = vld [vmem:[#allocation5 + $0x840] sm:$0xff]
    %v495 = vld [vmem:[#allocation5 + $0x848] sm:$0xff]
    %v496 = vld [vmem:[#allocation5 + $0x850] sm:$0xff]
    %v497 = vld [vmem:[#allocation5 + $0x858] sm:$0xff]
    %v498 = vld [vmem:[#allocation5 + $0x860] sm:$0xff]
    %v499 = vld [vmem:[#allocation5 + $0x868] sm:$0xff]
    %v500 = vld [vmem:[#allocation5 + $0x870] sm:$0xff]
    %v501 = vld [vmem:[#allocation5 + $0x878] sm:$0xff]
    %v502 = vld [vmem:[#allocation5 + $0x880] sm:$0xff]
    %v503 = vld [vmem:[#allocation5 + $0x888] sm:$0xff]
    %v504 = vld [vmem:[#allocation5 + $0x890] sm:$0xff]
    %v505 = vld [vmem:[#allocation5 + $0x898] sm:$0xff]
    %v506 = vld [vmem:[#allocation5 + $0x8a0] sm:$0xff]
    %v507 = vld [vmem:[#allocation5 + $0x8a8] sm:$0xff]
    %v508 = vld [vmem:[#allocation5 + $0x8b0] sm:$0xff]
    %v509 = vld [vmem:[#allocation5 + $0x8b8] sm:$0xff]
    %v510 = vld [vmem:[#allocation5 + $0x8c0] sm:$0xff]
    %v511 = vld [vmem:[#allocation5 + $0x8c8] sm:$0xff]
    %v512 = vld [vmem:[#allocation5 + $0x8d0] sm:$0xff]
    %v513 = vld [vmem:[#allocation5 + $0x8d8] sm:$0xff]
    %v514 = vld [vmem:[#allocation5 + $0x8e0] sm:$0xff]
    %v515 = vld [vmem:[#allocation5 + $0x8e8] sm:$0xff]
    %v516 = vld [vmem:[#allocation5 + $0x8f0] sm:$0xff]
    %v517 = vld [vmem:[#allocation5 + $0x8f8] sm:$0xff]
    %v518 = vld [vmem:[#allocation5 + $0x900] sm:$0xff]
    %v519 = vld [vmem:[#allocation5 + $0x908] sm:$0xff]
    %v520 = vld [vmem:[#allocation5 + $0x910] sm:$0xff]
    %v521 = vld [vmem:[#allocation5 + $0x918] sm:$0xff]
    %v522 = vld [vmem:[#allocation5 + $0x920] sm:$0xff]
    %v523 = vld [vmem:[#allocation5 + $0x928] sm:$0xff]
    %v524 = vld [vmem:[#allocation5 + $0x930] sm:$0xff]
    %v525 = vld [vmem:[#allocation5 + $0x938] sm:$0xff]
    %v526 = vld [vmem:[#allocation5 + $0x940] sm:$0xff]
    %v527 = vld [vmem:[#allocation5 + $0x948] sm:$0xff]
    %v528 = vld [vmem:[#allocation5 + $0x950] sm:$0xff]
    %v529 = vld [vmem:[#allocation5 + $0x958] sm:$0xff]
    %v530 = vld [vmem:[#allocation5 + $0x960] sm:$0xff]
    %v531 = vld [vmem:[#allocation5 + $0x968] sm:$0xff]
    %v532 = vld [vmem:[#allocation5 + $0x970] sm:$0xff]
    %v533 = vld [vmem:[#allocation5 + $0x978] sm:$0xff]
    %v534 = vld [vmem:[#allocation5 + $0x980] sm:$0xff]
    %v535 = vld [vmem:[#allocation5 + $0x988] sm:$0xff]
    %v536 = vld [vmem:[#allocation5 + $0x990] sm:$0xff]
    %v537 = vld [vmem:[#allocation5 + $0x998] sm:$0xff]
    %v538 = vld [vmem:[#allocation5 + $0x9a0] sm:$0xff]
    %v539 = vld [vmem:[#allocation5 + $0x9a8] sm:$0xff]
    %v540 = vld [vmem:[#allocation5 + $0x9b0] sm:$0xff]
    %v541 = vld [vmem:[#allocation5 + $0x9b8] sm:$0xff]
    %v542 = vld [vmem:[#allocation5 + $0x9c0] sm:$0xff]
    %v543 = vld [vmem:[#allocation5 + $0x9c8] sm:$0xff]
    %v544 = vld [vmem:[#allocation5 + $0x9d0] sm:$0xff]
    %v545 = vld [vmem:[#allocation5 + $0x9d8] sm:$0xff]
    %v546 = vld [vmem:[#allocation5 + $0x9e0] sm:$0xff]
    %v547 = vld [vmem:[#allocation5 + $0x9e8] sm:$0xff]
    %v548 = vld [vmem:[#allocation5 + $0x9f0] sm:$0xff]
    %v549 = vld [vmem:[#allocation5 + $0x9f8] sm:$0xff]
    %v550 = vld [vmem:[#allocation5 + $0xa00] sm:$0xff]
    %v551 = vld [vmem:[#allocation5 + $0xa08] sm:$0xff]
    %v552 = vld [vmem:[#allocation5 + $0xa10] sm:$0xff]
    %v553 = vld [vmem:[#allocation5 + $0xa18] sm:$0xff]
    %v554 = vld [vmem:[#allocation5 + $0xa20] sm:$0xff]
    %v555 = vld [vmem:[#allocation5 + $0xa28] sm:$0xff]
    %v556 = vld [vmem:[#allocation5 + $0xa30] sm:$0xff]
    %v557 = vld [vmem:[#allocation5 + $0xa38] sm:$0xff]
    %v558 = vld [vmem:[#allocation5 + $0xa40] sm:$0xff]
    %v559 = vld [vmem:[#allocation5 + $0xa48] sm:$0xff]
    %v560 = vld [vmem:[#allocation5 + $0xa50] sm:$0xff]
    %v561 = vld [vmem:[#allocation5 + $0xa58] sm:$0xff]
    %v562 = vld [vmem:[#allocation5 + $0xa60] sm:$0xff]
    %v563 = vld [vmem:[#allocation5 + $0xa68] sm:$0xff]
    %v564 = vld [vmem:[#allocation5 + $0xa70] sm:$0xff]
    %v565 = vld [vmem:[#allocation5 + $0xa78] sm:$0xff]
    %v566 = vld [vmem:[#allocation5 + $0xa80] sm:$0xff]
    %v567 = vld [vmem:[#allocation5 + $0xa88] sm:$0xff]
    %v568 = vld [vmem:[#allocation5 + $0xa90] sm:$0xff]
    %v569 = vld [vmem:[#allocation5 + $0xa98] sm:$0xff]
    %v570 = vld [vmem:[#allocation5 + $0xaa0] sm:$0xff]
    %v571 = vld [vmem:[#allocation5 + $0xaa8] sm:$0xff]
    %v572 = vld [vmem:[#allocation5 + $0xab0] sm:$0xff]
    %v573 = vld [vmem:[#allocation5 + $0xab8] sm:$0xff]
    %v574 = vld [vmem:[#allocation5 + $0xac0] sm:$0xff]
    %v575 = vld [vmem:[#allocation5 + $0xac8] sm:$0xff]
    %v576 = vld [vmem:[#allocation5 + $0xad0] sm:$0xff]
    %v577 = vld [vmem:[#allocation5 + $0xad8] sm:$0xff]
    %v578 = vld [vmem:[#allocation5 + $0xae0] sm:$0xff]
    %v579 = vld [vmem:[#allocation5 + $0xae8] sm:$0xff]
    %v580 = vld [vmem:[#allocation5 + $0xaf0] sm:$0xff]
    %v581 = vld [vmem:[#allocation5 + $0xaf8] sm:$0xff]
    %v582 = vld [vmem:[#allocation5 + $0xb00] sm:$0xff]
    %v583 = vld [vmem:[#allocation5 + $0xb08] sm:$0xff]
    %v584 = vld [vmem:[#allocation5 + $0xb10] sm:$0xff]
    %v585 = vld [vmem:[#allocation5 + $0xb18] sm:$0xff]
    %v586 = vld [vmem:[#allocation5 + $0xb20] sm:$0xff]
    %v587 = vld [vmem:[#allocation5 + $0xb28] sm:$0xff]
    %v588 = vld [vmem:[#allocation5 + $0xb30] sm:$0xff]
    %v589 = vld [vmem:[#allocation5 + $0xb38] sm:$0xff]
    %v590 = vld [vmem:[#allocation5 + $0xb40] sm:$0xff]
    %v591 = vld [vmem:[#allocation5 + $0xb48] sm:$0xff]
    %v592 = vld [vmem:[#allocation5 + $0xb50] sm:$0xff]
    %v593 = vld [vmem:[#allocation5 + $0xb58] sm:$0xff]
    %v594 = vld [vmem:[#allocation5 + $0xb60] sm:$0xff]
    %v595 = vld [vmem:[#allocation5 + $0xb68] sm:$0xff]
    %v596 = vld [vmem:[#allocation5 + $0xb70] sm:$0xff]
    %v597 = vld [vmem:[#allocation5 + $0xb78] sm:$0xff]
    %v598 = vld [vmem:[#allocation5 + $0xb80] sm:$0xff]
    %v599 = vld [vmem:[#allocation5 + $0xb88] sm:$0xff]
    %v600 = vld [vmem:[#allocation5 + $0xb90] sm:$0xff]
    %v601 = vld [vmem:[#allocation5 + $0xb98] sm:$0xff]
    %v602 = vld [vmem:[#allocation5 + $0xba0] sm:$0xff]
    %v603 = vld [vmem:[#allocation5 + $0xba8] sm:$0xff]
    %v604 = vld [vmem:[#allocation5 + $0xbb0] sm:$0xff]
    %v605 = vld [vmem:[#allocation5 + $0xbb8] sm:$0xff]
    %v606 = vld [vmem:[#allocation5 + $0xbc0] sm:$0xff]
    %v607 = vld [vmem:[#allocation5 + $0xbc8] sm:$0xff]
    %v608 = vld [vmem:[#allocation5 + $0xbd0] sm:$0xff]
    %v609 = vld [vmem:[#allocation5 + $0xbd8] sm:$0xff]
    %v610 = vld [vmem:[#allocation5 + $0xbe0] sm:$0xff]
    %v611 = vld [vmem:[#allocation5 + $0xbe8] sm:$0xff]
    %v612 = vld [vmem:[#allocation5 + $0xbf0] sm:$0xff]
    %v613 = vld [vmem:[#allocation5 + $0xbf8] sm:$0xff]
    %v614 = vld [vmem:[#allocation7] sm:$0xff]
    %v616 = vlaneseq
    %v617 = vshrl.u32 %v616, 7
    %v618 = vsub.s32 0, %v617
    %v619 = vrot.slane %v614, %v618
    %v620 = vlaneseq
    %v621 = vshrl.u32 %v620, 7
    %v622 = vsub.s32 1, %v621
    %v623 = vrot.slane %v614, %v622
    %v624 = vlaneseq
    %v625 = vshrl.u32 %v624, 7
    %v626 = vsub.s32 2, %v625
    %v627 = vrot.slane %v614, %v626
    %v628 = vlaneseq
    %v629 = vshrl.u32 %v628, 7
    %v630 = vsub.s32 3, %v629
    %v631 = vrot.slane %v614, %v630
    %v632 = vlaneseq
    %v633 = vshrl.u32 %v632, 7
    %v634 = vsub.s32 4, %v633
    %v635 = vrot.slane %v614, %v634
    %v636 = vlaneseq
    %v637 = vshrl.u32 %v636, 7
    %v638 = vsub.s32 5, %v637
    %v639 = vrot.slane %v614, %v638
    %v640 = vlaneseq
    %v641 = vshrl.u32 %v640, 7
    %v642 = vsub.s32 6, %v641
    %v643 = vrot.slane %v614, %v642
    %v644 = vlaneseq
    %v645 = vshrl.u32 %v644, 7
    %v646 = vsub.s32 7, %v645
    %v647 = vrot.slane %v614, %v646
    %v1040 = vunpack.c.l.b16 %v230
    %v1041 = vunpack.c.h.b16 %v230
    %v1042 = vunpack.c.l.b16 %v231
    %v1043 = vunpack.c.h.b16 %v231
    %v1044 = vunpack.c.l.b16 %v232
    %v1045 = vunpack.c.h.b16 %v232
    %v1046 = vunpack.c.l.b16 %v233
    %v1047 = vunpack.c.h.b16 %v233
    %v1048 = vunpack.c.l.b16 %v234
    %v1049 = vunpack.c.h.b16 %v234
    %v1050 = vunpack.c.l.b16 %v235
    %v1051 = vunpack.c.h.b16 %v235
    %v1052 = vunpack.c.l.b16 %v236
    %v1053 = vunpack.c.h.b16 %v236
    %v1054 = vunpack.c.l.b16 %v237
    %v1055 = vunpack.c.h.b16 %v237
    %v1056 = vunpack.c.l.b16 %v238
    %v1057 = vunpack.c.h.b16 %v238
    %v1058 = vunpack.c.l.b16 %v239
    %v1059 = vunpack.c.h.b16 %v239
    %v1060 = vunpack.c.l.b16 %v240
    %v1061 = vunpack.c.h.b16 %v240
    %v1062 = vunpack.c.l.b16 %v241
    %v1063 = vunpack.c.h.b16 %v241
    %v1064 = vunpack.c.l.b16 %v242
    %v1065 = vunpack.c.h.b16 %v242
    %v1066 = vunpack.c.l.b16 %v243
    %v1067 = vunpack.c.h.b16 %v243
    %v1068 = vunpack.c.l.b16 %v244
    %v1069 = vunpack.c.h.b16 %v244
    %v1070 = vunpack.c.l.b16 %v245
    %v1071 = vunpack.c.h.b16 %v245
    %v1072 = vunpack.c.l.b16 %v246
    %v1073 = vunpack.c.h.b16 %v246
    %v1074 = vunpack.c.l.b16 %v247
    %v1075 = vunpack.c.h.b16 %v247
    %v1076 = vunpack.c.l.b16 %v248
    %v1077 = vunpack.c.h.b16 %v248
    %v1078 = vunpack.c.l.b16 %v249
    %v1079 = vunpack.c.h.b16 %v249
    %v1080 = vunpack.c.l.b16 %v250
    %v1081 = vunpack.c.h.b16 %v250
    %v1082 = vunpack.c.l.b16 %v251
    %v1083 = vunpack.c.h.b16 %v251
    %v1084 = vunpack.c.l.b16 %v252
    %v1085 = vunpack.c.h.b16 %v252
    %v1086 = vunpack.c.l.b16 %v253
    %v1087 = vunpack.c.h.b16 %v253
    %v1088 = vunpack.c.l.b16 %v254
    %v1089 = vunpack.c.h.b16 %v254
    %v1090 = vunpack.c.l.b16 %v255
    %v1091 = vunpack.c.h.b16 %v255
    %v1092 = vunpack.c.l.b16 %v256
    %v1093 = vunpack.c.h.b16 %v256
    %v1094 = vunpack.c.l.b16 %v257
    %v1095 = vunpack.c.h.b16 %v257
    %v1096 = vunpack.c.l.b16 %v258
    %v1097 = vunpack.c.h.b16 %v258
    %v1098 = vunpack.c.l.b16 %v259
    %v1099 = vunpack.c.h.b16 %v259
    %v1100 = vunpack.c.l.b16 %v260
    %v1101 = vunpack.c.h.b16 %v260
    %v1102 = vunpack.c.l.b16 %v261
    %v1103 = vunpack.c.h.b16 %v261
    %v1104 = vunpack.c.l.b16 %v262
    %v1105 = vunpack.c.h.b16 %v262
    %v1106 = vunpack.c.l.b16 %v263
    %v1107 = vunpack.c.h.b16 %v263
    %v1108 = vunpack.c.l.b16 %v264
    %v1109 = vunpack.c.h.b16 %v264
    %v1110 = vunpack.c.l.b16 %v265
    %v1111 = vunpack.c.h.b16 %v265
    %v1112 = vunpack.c.l.b16 %v266
    %v1113 = vunpack.c.h.b16 %v266
    %v1114 = vunpack.c.l.b16 %v267
    %v1115 = vunpack.c.h.b16 %v267
    %v1116 = vunpack.c.l.b16 %v268
    %v1117 = vunpack.c.h.b16 %v268
    %v1118 = vunpack.c.l.b16 %v269
    %v1119 = vunpack.c.h.b16 %v269
    %v1120 = vunpack.c.l.b16 %v270
    %v1121 = vunpack.c.h.b16 %v270
    %v1122 = vunpack.c.l.b16 %v271
    %v1123 = vunpack.c.h.b16 %v271
    %v1124 = vunpack.c.l.b16 %v272
    %v1125 = vunpack.c.h.b16 %v272
    %v1126 = vunpack.c.l.b16 %v273
    %v1127 = vunpack.c.h.b16 %v273
    %v1128 = vunpack.c.l.b16 %v274
    %v1129 = vunpack.c.h.b16 %v274
    %v1130 = vunpack.c.l.b16 %v275
    %v1131 = vunpack.c.h.b16 %v275
    %v1132 = vunpack.c.l.b16 %v276
    %v1133 = vunpack.c.h.b16 %v276
    %v1134 = vunpack.c.l.b16 %v277
    %v1135 = vunpack.c.h.b16 %v277
    %v1136 = vunpack.c.l.b16 %v278
    %v1137 = vunpack.c.h.b16 %v278
    %v1138 = vunpack.c.l.b16 %v279
    %v1139 = vunpack.c.h.b16 %v279
    %v1140 = vunpack.c.l.b16 %v280
    %v1141 = vunpack.c.h.b16 %v280
    %v1142 = vunpack.c.l.b16 %v281
    %v1143 = vunpack.c.h.b16 %v281
    %v1144 = vunpack.c.l.b16 %v282
    %v1145 = vunpack.c.h.b16 %v282
    %v1146 = vunpack.c.l.b16 %v283
    %v1147 = vunpack.c.h.b16 %v283
    %v1148 = vunpack.c.l.b16 %v284
    %v1149 = vunpack.c.h.b16 %v284
    %v1150 = vunpack.c.l.b16 %v285
    %v1151 = vunpack.c.h.b16 %v285
    %v1152 = vunpack.c.l.b16 %v286
    %v1153 = vunpack.c.h.b16 %v286
    %v1154 = vunpack.c.l.b16 %v287
    %v1155 = vunpack.c.h.b16 %v287
    %v1156 = vunpack.c.l.b16 %v288
    %v1157 = vunpack.c.h.b16 %v288
    %v1158 = vunpack.c.l.b16 %v289
    %v1159 = vunpack.c.h.b16 %v289
    %v1160 = vunpack.c.l.b16 %v290
    %v1161 = vunpack.c.h.b16 %v290
    %v1162 = vunpack.c.l.b16 %v291
    %v1163 = vunpack.c.h.b16 %v291
    %v1164 = vunpack.c.l.b16 %v292
    %v1165 = vunpack.c.h.b16 %v292
    %v1166 = vunpack.c.l.b16 %v293
    %v1167 = vunpack.c.h.b16 %v293
    %v1168 = vunpack.c.l.b16 %v294
    %v1169 = vunpack.c.h.b16 %v294
    %v1170 = vunpack.c.l.b16 %v295
    %v1171 = vunpack.c.h.b16 %v295
    %v1172 = vunpack.c.l.b16 %v296
    %v1173 = vunpack.c.h.b16 %v296
    %v1174 = vunpack.c.l.b16 %v297
    %v1175 = vunpack.c.h.b16 %v297
    %v1176 = vunpack.c.l.b16 %v298
    %v1177 = vunpack.c.h.b16 %v298
    %v1178 = vunpack.c.l.b16 %v299
    %v1179 = vunpack.c.h.b16 %v299
    %v1180 = vunpack.c.l.b16 %v300
    %v1181 = vunpack.c.h.b16 %v300
    %v1182 = vunpack.c.l.b16 %v301
    %v1183 = vunpack.c.h.b16 %v301
    %v1184 = vunpack.c.l.b16 %v302
    %v1185 = vunpack.c.h.b16 %v302
    %v1186 = vunpack.c.l.b16 %v303
    %v1187 = vunpack.c.h.b16 %v303
    %v1188 = vunpack.c.l.b16 %v304
    %v1189 = vunpack.c.h.b16 %v304
    %v1190 = vunpack.c.l.b16 %v305
    %v1191 = vunpack.c.h.b16 %v305
    %v1192 = vunpack.c.l.b16 %v306
    %v1193 = vunpack.c.h.b16 %v306
    %v1194 = vunpack.c.l.b16 %v307
    %v1195 = vunpack.c.h.b16 %v307
    %v1196 = vunpack.c.l.b16 %v308
    %v1197 = vunpack.c.h.b16 %v308
    %v1198 = vunpack.c.l.b16 %v309
    %v1199 = vunpack.c.h.b16 %v309
    %v1200 = vunpack.c.l.b16 %v310
    %v1201 = vunpack.c.h.b16 %v310
    %v1202 = vunpack.c.l.b16 %v311
    %v1203 = vunpack.c.h.b16 %v311
    %v1204 = vunpack.c.l.b16 %v312
    %v1205 = vunpack.c.h.b16 %v312
    %v1206 = vunpack.c.l.b16 %v313
    %v1207 = vunpack.c.h.b16 %v313
    %v1208 = vunpack.c.l.b16 %v314
    %v1209 = vunpack.c.h.b16 %v314
    %v1210 = vunpack.c.l.b16 %v315
    %v1211 = vunpack.c.h.b16 %v315
    %v1212 = vunpack.c.l.b16 %v316
    %v1213 = vunpack.c.h.b16 %v316
    %v1214 = vunpack.c.l.b16 %v317
    %v1215 = vunpack.c.h.b16 %v317
    %v1216 = vunpack.c.l.b16 %v318
    %v1217 = vunpack.c.h.b16 %v318
    %v1218 = vunpack.c.l.b16 %v319
    %v1219 = vunpack.c.h.b16 %v319
    %v1220 = vunpack.c.l.b16 %v320
    %v1221 = vunpack.c.h.b16 %v320
    %v1222 = vunpack.c.l.b16 %v321
    %v1223 = vunpack.c.h.b16 %v321
    %v1224 = vunpack.c.l.b16 %v322
    %v1225 = vunpack.c.h.b16 %v322
    %v1226 = vunpack.c.l.b16 %v323
    %v1227 = vunpack.c.h.b16 %v323
    %v1228 = vunpack.c.l.b16 %v324
    %v1229 = vunpack.c.h.b16 %v324
    %v1230 = vunpack.c.l.b16 %v325
    %v1231 = vunpack.c.h.b16 %v325
    %v1232 = vunpack.c.l.b16 %v326
    %v1233 = vunpack.c.h.b16 %v326
    %v1234 = vunpack.c.l.b16 %v327
    %v1235 = vunpack.c.h.b16 %v327
    %v1236 = vunpack.c.l.b16 %v328
    %v1237 = vunpack.c.h.b16 %v328
    %v1238 = vunpack.c.l.b16 %v329
    %v1239 = vunpack.c.h.b16 %v329
    %v1240 = vunpack.c.l.b16 %v330
    %v1241 = vunpack.c.h.b16 %v330
    %v1242 = vunpack.c.l.b16 %v331
    %v1243 = vunpack.c.h.b16 %v331
    %v1244 = vunpack.c.l.b16 %v332
    %v1245 = vunpack.c.h.b16 %v332
    %v1246 = vunpack.c.l.b16 %v333
    %v1247 = vunpack.c.h.b16 %v333
    %v1248 = vunpack.c.l.b16 %v334
    %v1249 = vunpack.c.h.b16 %v334
    %v1250 = vunpack.c.l.b16 %v335
    %v1251 = vunpack.c.h.b16 %v335
    %v1252 = vunpack.c.l.b16 %v336
    %v1253 = vunpack.c.h.b16 %v336
    %v1254 = vunpack.c.l.b16 %v337
    %v1255 = vunpack.c.h.b16 %v337
    %v1256 = vunpack.c.l.b16 %v338
    %v1257 = vunpack.c.h.b16 %v338
    %v1258 = vunpack.c.l.b16 %v339
    %v1259 = vunpack.c.h.b16 %v339
    %v1260 = vunpack.c.l.b16 %v340
    %v1261 = vunpack.c.h.b16 %v340
    %v1262 = vunpack.c.l.b16 %v341
    %v1263 = vunpack.c.h.b16 %v341
    %v1264 = vunpack.c.l.b16 %v342
    %v1265 = vunpack.c.h.b16 %v342
    %v1266 = vunpack.c.l.b16 %v343
    %v1267 = vunpack.c.h.b16 %v343
    %v1268 = vunpack.c.l.b16 %v344
    %v1269 = vunpack.c.h.b16 %v344
    %v1270 = vunpack.c.l.b16 %v345
    %v1271 = vunpack.c.h.b16 %v345
    %v1272 = vunpack.c.l.b16 %v346
    %v1273 = vunpack.c.h.b16 %v346
    %v1274 = vunpack.c.l.b16 %v347
    %v1275 = vunpack.c.h.b16 %v347
    %v1276 = vunpack.c.l.b16 %v348
    %v1277 = vunpack.c.h.b16 %v348
    %v1278 = vunpack.c.l.b16 %v349
    %v1279 = vunpack.c.h.b16 %v349
    %v1280 = vunpack.c.l.b16 %v350
    %v1281 = vunpack.c.h.b16 %v350
    %v1282 = vunpack.c.l.b16 %v351
    %v1283 = vunpack.c.h.b16 %v351
    %v1284 = vunpack.c.l.b16 %v352
    %v1285 = vunpack.c.h.b16 %v352
    %v1286 = vunpack.c.l.b16 %v353
    %v1287 = vunpack.c.h.b16 %v353
    %v1288 = vunpack.c.l.b16 %v354
    %v1289 = vunpack.c.h.b16 %v354
    %v1290 = vunpack.c.l.b16 %v355
    %v1291 = vunpack.c.h.b16 %v355
    %v1292 = vunpack.c.l.b16 %v356
    %v1293 = vunpack.c.h.b16 %v356
    %v1294 = vunpack.c.l.b16 %v357
    %v1295 = vunpack.c.h.b16 %v357
    %v1296 = vunpack.c.l.b16 %v358
    %v1297 = vunpack.c.h.b16 %v358
    %v1298 = vunpack.c.l.b16 %v359
    %v1299 = vunpack.c.h.b16 %v359
    %v1300 = vunpack.c.l.b16 %v360
    %v1301 = vunpack.c.h.b16 %v360
    %v1302 = vunpack.c.l.b16 %v361
    %v1303 = vunpack.c.h.b16 %v361
    %v1304 = vunpack.c.l.b16 %v362
    %v1305 = vunpack.c.h.b16 %v362
    %v1306 = vunpack.c.l.b16 %v363
    %v1307 = vunpack.c.h.b16 %v363
    %v1308 = vunpack.c.l.b16 %v364
    %v1309 = vunpack.c.h.b16 %v364
    %v1310 = vunpack.c.l.b16 %v365
    %v1311 = vunpack.c.h.b16 %v365
    %v1312 = vunpack.c.l.b16 %v366
    %v1313 = vunpack.c.h.b16 %v366
    %v1314 = vunpack.c.l.b16 %v367
    %v1315 = vunpack.c.h.b16 %v367
    %v1316 = vunpack.c.l.b16 %v368
    %v1317 = vunpack.c.h.b16 %v368
    %v1318 = vunpack.c.l.b16 %v369
    %v1319 = vunpack.c.h.b16 %v369
    %v1320 = vunpack.c.l.b16 %v370
    %v1321 = vunpack.c.h.b16 %v370
    %v1322 = vunpack.c.l.b16 %v371
    %v1323 = vunpack.c.h.b16 %v371
    %v1324 = vunpack.c.l.b16 %v372
    %v1325 = vunpack.c.h.b16 %v372
    %v1326 = vunpack.c.l.b16 %v373
    %v1327 = vunpack.c.h.b16 %v373
    %v1328 = vunpack.c.l.b16 %v374
    %v1329 = vunpack.c.h.b16 %v374
    %v1330 = vunpack.c.l.b16 %v375
    %v1331 = vunpack.c.h.b16 %v375
    %v1332 = vunpack.c.l.b16 %v376
    %v1333 = vunpack.c.h.b16 %v376
    %v1334 = vunpack.c.l.b16 %v377
    %v1335 = vunpack.c.h.b16 %v377
    %v1336 = vunpack.c.l.b16 %v378
    %v1337 = vunpack.c.h.b16 %v378
    %v1338 = vunpack.c.l.b16 %v379
    %v1339 = vunpack.c.h.b16 %v379
    %v1340 = vunpack.c.l.b16 %v380
    %v1341 = vunpack.c.h.b16 %v380
    %v1342 = vunpack.c.l.b16 %v381
    %v1343 = vunpack.c.h.b16 %v381
    %v1344 = vunpack.c.l.b16 %v382
    %v1345 = vunpack.c.h.b16 %v382
    %v1346 = vunpack.c.l.b16 %v383
    %v1347 = vunpack.c.h.b16 %v383
    %v1348 = vunpack.c.l.b16 %v384
    %v1349 = vunpack.c.h.b16 %v384
    %v1350 = vunpack.c.l.b16 %v385
    %v1351 = vunpack.c.h.b16 %v385
    %v1352 = vunpack.c.l.b16 %v386
    %v1353 = vunpack.c.h.b16 %v386
    %v1354 = vunpack.c.l.b16 %v387
    %v1355 = vunpack.c.h.b16 %v387
    %v1356 = vunpack.c.l.b16 %v388
    %v1357 = vunpack.c.h.b16 %v388
    %v1358 = vunpack.c.l.b16 %v389
    %v1359 = vunpack.c.h.b16 %v389
    %v1360 = vunpack.c.l.b16 %v390
    %v1361 = vunpack.c.h.b16 %v390
    %v1362 = vunpack.c.l.b16 %v391
    %v1363 = vunpack.c.h.b16 %v391
    %v1364 = vunpack.c.l.b16 %v392
    %v1365 = vunpack.c.h.b16 %v392
    %v1366 = vunpack.c.l.b16 %v393
    %v1367 = vunpack.c.h.b16 %v393
    %v1368 = vunpack.c.l.b16 %v394
    %v1369 = vunpack.c.h.b16 %v394
    %v1370 = vunpack.c.l.b16 %v395
    %v1371 = vunpack.c.h.b16 %v395
    %v1372 = vunpack.c.l.b16 %v396
    %v1373 = vunpack.c.h.b16 %v396
    %v1374 = vunpack.c.l.b16 %v397
    %v1375 = vunpack.c.h.b16 %v397
    %v1376 = vunpack.c.l.b16 %v398
    %v1377 = vunpack.c.h.b16 %v398
    %v1378 = vunpack.c.l.b16 %v399
    %v1379 = vunpack.c.h.b16 %v399
    %v1380 = vunpack.c.l.b16 %v400
    %v1381 = vunpack.c.h.b16 %v400
    %v1382 = vunpack.c.l.b16 %v401
    %v1383 = vunpack.c.h.b16 %v401
    %v1384 = vunpack.c.l.b16 %v402
    %v1385 = vunpack.c.h.b16 %v402
    %v1386 = vunpack.c.l.b16 %v403
    %v1387 = vunpack.c.h.b16 %v403
    %v1388 = vunpack.c.l.b16 %v404
    %v1389 = vunpack.c.h.b16 %v404
    %v1390 = vunpack.c.l.b16 %v405
    %v1391 = vunpack.c.h.b16 %v405
    %v1392 = vunpack.c.l.b16 %v406
    %v1393 = vunpack.c.h.b16 %v406
    %v1394 = vunpack.c.l.b16 %v407
    %v1395 = vunpack.c.h.b16 %v407
    %v1396 = vunpack.c.l.b16 %v408
    %v1397 = vunpack.c.h.b16 %v408
    %v1398 = vunpack.c.l.b16 %v409
    %v1399 = vunpack.c.h.b16 %v409
    %v1400 = vunpack.c.l.b16 %v410
    %v1401 = vunpack.c.h.b16 %v410
    %v1402 = vunpack.c.l.b16 %v411
    %v1403 = vunpack.c.h.b16 %v411
    %v1404 = vunpack.c.l.b16 %v412
    %v1405 = vunpack.c.h.b16 %v412
    %v1406 = vunpack.c.l.b16 %v413
    %v1407 = vunpack.c.h.b16 %v413
    %v1408 = vunpack.c.l.b16 %v414
    %v1409 = vunpack.c.h.b16 %v414
    %v1410 = vunpack.c.l.b16 %v415
    %v1411 = vunpack.c.h.b16 %v415
    %v1412 = vunpack.c.l.b16 %v416
    %v1413 = vunpack.c.h.b16 %v416
    %v1414 = vunpack.c.l.b16 %v417
    %v1415 = vunpack.c.h.b16 %v417
    %v1416 = vunpack.c.l.b16 %v418
    %v1417 = vunpack.c.h.b16 %v418
    %v1418 = vunpack.c.l.b16 %v419
    %v1419 = vunpack.c.h.b16 %v419
    %v1420 = vunpack.c.l.b16 %v420
    %v1421 = vunpack.c.h.b16 %v420
    %v1422 = vunpack.c.l.b16 %v421
    %v1423 = vunpack.c.h.b16 %v421
    %v1424 = vunpack.c.l.b16 %v422
    %v1425 = vunpack.c.h.b16 %v422
    %v1426 = vunpack.c.l.b16 %v423
    %v1427 = vunpack.c.h.b16 %v423
    %v1428 = vunpack.c.l.b16 %v424
    %v1429 = vunpack.c.h.b16 %v424
    %v1430 = vunpack.c.l.b16 %v425
    %v1431 = vunpack.c.h.b16 %v425
    %v1432 = vunpack.c.l.b16 %v426
    %v1433 = vunpack.c.h.b16 %v426
    %v1434 = vunpack.c.l.b16 %v427
    %v1435 = vunpack.c.h.b16 %v427
    %v1436 = vunpack.c.l.b16 %v428
    %v1437 = vunpack.c.h.b16 %v428
    %v1438 = vunpack.c.l.b16 %v429
    %v1439 = vunpack.c.h.b16 %v429
    %v1440 = vunpack.c.l.b16 %v430
    %v1441 = vunpack.c.h.b16 %v430
    %v1442 = vunpack.c.l.b16 %v431
    %v1443 = vunpack.c.h.b16 %v431
    %v1444 = vunpack.c.l.b16 %v432
    %v1445 = vunpack.c.h.b16 %v432
    %v1446 = vunpack.c.l.b16 %v433
    %v1447 = vunpack.c.h.b16 %v433
    %v1448 = vunpack.c.l.b16 %v434
    %v1449 = vunpack.c.h.b16 %v434
    %v1450 = vunpack.c.l.b16 %v435
    %v1451 = vunpack.c.h.b16 %v435
    %v1452 = vunpack.c.l.b16 %v436
    %v1453 = vunpack.c.h.b16 %v436
    %v1454 = vunpack.c.l.b16 %v437
    %v1455 = vunpack.c.h.b16 %v437
    %v1456 = vunpack.c.l.b16 %v438
    %v1457 = vunpack.c.h.b16 %v438
    %v1458 = vunpack.c.l.b16 %v439
    %v1459 = vunpack.c.h.b16 %v439
    %v1460 = vunpack.c.l.b16 %v440
    %v1461 = vunpack.c.h.b16 %v440
    %v1462 = vunpack.c.l.b16 %v441
    %v1463 = vunpack.c.h.b16 %v441
    %v1464 = vunpack.c.l.b16 %v442
    %v1465 = vunpack.c.h.b16 %v442
    %v1466 = vunpack.c.l.b16 %v443
    %v1467 = vunpack.c.h.b16 %v443
    %v1468 = vunpack.c.l.b16 %v444
    %v1469 = vunpack.c.h.b16 %v444
    %v1470 = vunpack.c.l.b16 %v445
    %v1471 = vunpack.c.h.b16 %v445
    %v1472 = vunpack.c.l.b16 %v446
    %v1473 = vunpack.c.h.b16 %v446
    %v1474 = vunpack.c.l.b16 %v447
    %v1475 = vunpack.c.h.b16 %v447
    %v1476 = vunpack.c.l.b16 %v448
    %v1477 = vunpack.c.h.b16 %v448
    %v1478 = vunpack.c.l.b16 %v449
    %v1479 = vunpack.c.h.b16 %v449
    %v1480 = vunpack.c.l.b16 %v450
    %v1481 = vunpack.c.h.b16 %v450
    %v1482 = vunpack.c.l.b16 %v451
    %v1483 = vunpack.c.h.b16 %v451
    %v1484 = vunpack.c.l.b16 %v452
    %v1485 = vunpack.c.h.b16 %v452
    %v1486 = vunpack.c.l.b16 %v453
    %v1487 = vunpack.c.h.b16 %v453
    %v1488 = vunpack.c.l.b16 %v454
    %v1489 = vunpack.c.h.b16 %v454
    %v1490 = vunpack.c.l.b16 %v455
    %v1491 = vunpack.c.h.b16 %v455
    %v1492 = vunpack.c.l.b16 %v456
    %v1493 = vunpack.c.h.b16 %v456
    %v1494 = vunpack.c.l.b16 %v457
    %v1495 = vunpack.c.h.b16 %v457
    %v1496 = vunpack.c.l.b16 %v458
    %v1497 = vunpack.c.h.b16 %v458
    %v1498 = vunpack.c.l.b16 %v459
    %v1499 = vunpack.c.h.b16 %v459
    %v1500 = vunpack.c.l.b16 %v460
    %v1501 = vunpack.c.h.b16 %v460
    %v1502 = vunpack.c.l.b16 %v461
    %v1503 = vunpack.c.h.b16 %v461
    %v1504 = vunpack.c.l.b16 %v462
    %v1505 = vunpack.c.h.b16 %v462
    %v1506 = vunpack.c.l.b16 %v463
    %v1507 = vunpack.c.h.b16 %v463
    %v1508 = vunpack.c.l.b16 %v464
    %v1509 = vunpack.c.h.b16 %v464
    %v1510 = vunpack.c.l.b16 %v465
    %v1511 = vunpack.c.h.b16 %v465
    %v1512 = vunpack.c.l.b16 %v466
    %v1513 = vunpack.c.h.b16 %v466
    %v1514 = vunpack.c.l.b16 %v467
    %v1515 = vunpack.c.h.b16 %v467
    %v1516 = vunpack.c.l.b16 %v468
    %v1517 = vunpack.c.h.b16 %v468
    %v1518 = vunpack.c.l.b16 %v469
    %v1519 = vunpack.c.h.b16 %v469
    %v1520 = vunpack.c.l.b16 %v470
    %v1521 = vunpack.c.h.b16 %v470
    %v1522 = vunpack.c.l.b16 %v471
    %v1523 = vunpack.c.h.b16 %v471
    %v1524 = vunpack.c.l.b16 %v472
    %v1525 = vunpack.c.h.b16 %v472
    %v1526 = vunpack.c.l.b16 %v473
    %v1527 = vunpack.c.h.b16 %v473
    %v1528 = vunpack.c.l.b16 %v474
    %v1529 = vunpack.c.h.b16 %v474
    %v1530 = vunpack.c.l.b16 %v475
    %v1531 = vunpack.c.h.b16 %v475
    %v1532 = vunpack.c.l.b16 %v476
    %v1533 = vunpack.c.h.b16 %v476
    %v1534 = vunpack.c.l.b16 %v477
    %v1535 = vunpack.c.h.b16 %v477
    %v1536 = vunpack.c.l.b16 %v478
    %v1537 = vunpack.c.h.b16 %v478
    %v1538 = vunpack.c.l.b16 %v479
    %v1539 = vunpack.c.h.b16 %v479
    %v1540 = vunpack.c.l.b16 %v480
    %v1541 = vunpack.c.h.b16 %v480
    %v1542 = vunpack.c.l.b16 %v481
    %v1543 = vunpack.c.h.b16 %v481
    %v1544 = vunpack.c.l.b16 %v482
    %v1545 = vunpack.c.h.b16 %v482
    %v1546 = vunpack.c.l.b16 %v483
    %v1547 = vunpack.c.h.b16 %v483
    %v1548 = vunpack.c.l.b16 %v484
    %v1549 = vunpack.c.h.b16 %v484
    %v1550 = vunpack.c.l.b16 %v485
    %v1551 = vunpack.c.h.b16 %v485
    %v1552 = vunpack.c.l.b16 %v486
    %v1553 = vunpack.c.h.b16 %v486
    %v1554 = vunpack.c.l.b16 %v487
    %v1555 = vunpack.c.h.b16 %v487
    %v1556 = vunpack.c.l.b16 %v488
    %v1557 = vunpack.c.h.b16 %v488
    %v1558 = vunpack.c.l.b16 %v489
    %v1559 = vunpack.c.h.b16 %v489
    %v1560 = vunpack.c.l.b16 %v490
    %v1561 = vunpack.c.h.b16 %v490
    %v1562 = vunpack.c.l.b16 %v491
    %v1563 = vunpack.c.h.b16 %v491
    %v1564 = vunpack.c.l.b16 %v492
    %v1565 = vunpack.c.h.b16 %v492
    %v1566 = vunpack.c.l.b16 %v493
    %v1567 = vunpack.c.h.b16 %v493
    %v1568 = vunpack.c.l.b16 %v494
    %v1569 = vunpack.c.h.b16 %v494
    %v1570 = vunpack.c.l.b16 %v495
    %v1571 = vunpack.c.h.b16 %v495
    %v1572 = vunpack.c.l.b16 %v496
    %v1573 = vunpack.c.h.b16 %v496
    %v1574 = vunpack.c.l.b16 %v497
    %v1575 = vunpack.c.h.b16 %v497
    %v1576 = vunpack.c.l.b16 %v498
    %v1577 = vunpack.c.h.b16 %v498
    %v1578 = vunpack.c.l.b16 %v499
    %v1579 = vunpack.c.h.b16 %v499
    %v1580 = vunpack.c.l.b16 %v500
    %v1581 = vunpack.c.h.b16 %v500
    %v1582 = vunpack.c.l.b16 %v501
    %v1583 = vunpack.c.h.b16 %v501
    %v1584 = vunpack.c.l.b16 %v502
    %v1585 = vunpack.c.h.b16 %v502
    %v1586 = vunpack.c.l.b16 %v503
    %v1587 = vunpack.c.h.b16 %v503
    %v1588 = vunpack.c.l.b16 %v504
    %v1589 = vunpack.c.h.b16 %v504
    %v1590 = vunpack.c.l.b16 %v505
    %v1591 = vunpack.c.h.b16 %v505
    %v1592 = vunpack.c.l.b16 %v506
    %v1593 = vunpack.c.h.b16 %v506
    %v1594 = vunpack.c.l.b16 %v507
    %v1595 = vunpack.c.h.b16 %v507
    %v1596 = vunpack.c.l.b16 %v508
    %v1597 = vunpack.c.h.b16 %v508
    %v1598 = vunpack.c.l.b16 %v509
    %v1599 = vunpack.c.h.b16 %v509
    %v1600 = vunpack.c.l.b16 %v510
    %v1601 = vunpack.c.h.b16 %v510
    %v1602 = vunpack.c.l.b16 %v511
    %v1603 = vunpack.c.h.b16 %v511
    %v1604 = vunpack.c.l.b16 %v512
    %v1605 = vunpack.c.h.b16 %v512
    %v1606 = vunpack.c.l.b16 %v513
    %v1607 = vunpack.c.h.b16 %v513
    %v1608 = vunpack.c.l.b16 %v514
    %v1609 = vunpack.c.h.b16 %v514
    %v1610 = vunpack.c.l.b16 %v515
    %v1611 = vunpack.c.h.b16 %v515
    %v1612 = vunpack.c.l.b16 %v516
    %v1613 = vunpack.c.h.b16 %v516
    %v1614 = vunpack.c.l.b16 %v517
    %v1615 = vunpack.c.h.b16 %v517
    %v1616 = vunpack.c.l.b16 %v518
    %v1617 = vunpack.c.h.b16 %v518
    %v1618 = vunpack.c.l.b16 %v519
    %v1619 = vunpack.c.h.b16 %v519
    %v1620 = vunpack.c.l.b16 %v520
    %v1621 = vunpack.c.h.b16 %v520
    %v1622 = vunpack.c.l.b16 %v521
    %v1623 = vunpack.c.h.b16 %v521
    %v1624 = vunpack.c.l.b16 %v522
    %v1625 = vunpack.c.h.b16 %v522
    %v1626 = vunpack.c.l.b16 %v523
    %v1627 = vunpack.c.h.b16 %v523
    %v1628 = vunpack.c.l.b16 %v524
    %v1629 = vunpack.c.h.b16 %v524
    %v1630 = vunpack.c.l.b16 %v525
    %v1631 = vunpack.c.h.b16 %v525
    %v1632 = vunpack.c.l.b16 %v526
    %v1633 = vunpack.c.h.b16 %v526
    %v1634 = vunpack.c.l.b16 %v527
    %v1635 = vunpack.c.h.b16 %v527
    %v1636 = vunpack.c.l.b16 %v528
    %v1637 = vunpack.c.h.b16 %v528
    %v1638 = vunpack.c.l.b16 %v529
    %v1639 = vunpack.c.h.b16 %v529
    %v1640 = vunpack.c.l.b16 %v530
    %v1641 = vunpack.c.h.b16 %v530
    %v1642 = vunpack.c.l.b16 %v531
    %v1643 = vunpack.c.h.b16 %v531
    %v1644 = vunpack.c.l.b16 %v532
    %v1645 = vunpack.c.h.b16 %v532
    %v1646 = vunpack.c.l.b16 %v533
    %v1647 = vunpack.c.h.b16 %v533
    %v1648 = vunpack.c.l.b16 %v534
    %v1649 = vunpack.c.h.b16 %v534
    %v1650 = vunpack.c.l.b16 %v535
    %v1651 = vunpack.c.h.b16 %v535
    %v1652 = vunpack.c.l.b16 %v536
    %v1653 = vunpack.c.h.b16 %v536
    %v1654 = vunpack.c.l.b16 %v537
    %v1655 = vunpack.c.h.b16 %v537
    %v1656 = vunpack.c.l.b16 %v538
    %v1657 = vunpack.c.h.b16 %v538
    %v1658 = vunpack.c.l.b16 %v539
    %v1659 = vunpack.c.h.b16 %v539
    %v1660 = vunpack.c.l.b16 %v540
    %v1661 = vunpack.c.h.b16 %v540
    %v1662 = vunpack.c.l.b16 %v541
    %v1663 = vunpack.c.h.b16 %v541
    %v1664 = vunpack.c.l.b16 %v542
    %v1665 = vunpack.c.h.b16 %v542
    %v1666 = vunpack.c.l.b16 %v543
    %v1667 = vunpack.c.h.b16 %v543
    %v1668 = vunpack.c.l.b16 %v544
    %v1669 = vunpack.c.h.b16 %v544
    %v1670 = vunpack.c.l.b16 %v545
    %v1671 = vunpack.c.h.b16 %v545
    %v1672 = vunpack.c.l.b16 %v546
    %v1673 = vunpack.c.h.b16 %v546
    %v1674 = vunpack.c.l.b16 %v547
    %v1675 = vunpack.c.h.b16 %v547
    %v1676 = vunpack.c.l.b16 %v548
    %v1677 = vunpack.c.h.b16 %v548
    %v1678 = vunpack.c.l.b16 %v549
    %v1679 = vunpack.c.h.b16 %v549
    %v1680 = vunpack.c.l.b16 %v550
    %v1681 = vunpack.c.h.b16 %v550
    %v1682 = vunpack.c.l.b16 %v551
    %v1683 = vunpack.c.h.b16 %v551
    %v1684 = vunpack.c.l.b16 %v552
    %v1685 = vunpack.c.h.b16 %v552
    %v1686 = vunpack.c.l.b16 %v553
    %v1687 = vunpack.c.h.b16 %v553
    %v1688 = vunpack.c.l.b16 %v554
    %v1689 = vunpack.c.h.b16 %v554
    %v1690 = vunpack.c.l.b16 %v555
    %v1691 = vunpack.c.h.b16 %v555
    %v1692 = vunpack.c.l.b16 %v556
    %v1693 = vunpack.c.h.b16 %v556
    %v1694 = vunpack.c.l.b16 %v557
    %v1695 = vunpack.c.h.b16 %v557
    %v1696 = vunpack.c.l.b16 %v558
    %v1697 = vunpack.c.h.b16 %v558
    %v1698 = vunpack.c.l.b16 %v559
    %v1699 = vunpack.c.h.b16 %v559
    %v1700 = vunpack.c.l.b16 %v560
    %v1701 = vunpack.c.h.b16 %v560
    %v1702 = vunpack.c.l.b16 %v561
    %v1703 = vunpack.c.h.b16 %v561
    %v1704 = vunpack.c.l.b16 %v562
    %v1705 = vunpack.c.h.b16 %v562
    %v1706 = vunpack.c.l.b16 %v563
    %v1707 = vunpack.c.h.b16 %v563
    %v1708 = vunpack.c.l.b16 %v564
    %v1709 = vunpack.c.h.b16 %v564
    %v1710 = vunpack.c.l.b16 %v565
    %v1711 = vunpack.c.h.b16 %v565
    %v1712 = vunpack.c.l.b16 %v566
    %v1713 = vunpack.c.h.b16 %v566
    %v1714 = vunpack.c.l.b16 %v567
    %v1715 = vunpack.c.h.b16 %v567
    %v1716 = vunpack.c.l.b16 %v568
    %v1717 = vunpack.c.h.b16 %v568
    %v1718 = vunpack.c.l.b16 %v569
    %v1719 = vunpack.c.h.b16 %v569
    %v1720 = vunpack.c.l.b16 %v570
    %v1721 = vunpack.c.h.b16 %v570
    %v1722 = vunpack.c.l.b16 %v571
    %v1723 = vunpack.c.h.b16 %v571
    %v1724 = vunpack.c.l.b16 %v572
    %v1725 = vunpack.c.h.b16 %v572
    %v1726 = vunpack.c.l.b16 %v573
    %v1727 = vunpack.c.h.b16 %v573
    %v1728 = vunpack.c.l.b16 %v574
    %v1729 = vunpack.c.h.b16 %v574
    %v1730 = vunpack.c.l.b16 %v575
    %v1731 = vunpack.c.h.b16 %v575
    %v1732 = vunpack.c.l.b16 %v576
    %v1733 = vunpack.c.h.b16 %v576
    %v1734 = vunpack.c.l.b16 %v577
    %v1735 = vunpack.c.h.b16 %v577
    %v1736 = vunpack.c.l.b16 %v578
    %v1737 = vunpack.c.h.b16 %v578
    %v1738 = vunpack.c.l.b16 %v579
    %v1739 = vunpack.c.h.b16 %v579
    %v1740 = vunpack.c.l.b16 %v580
    %v1741 = vunpack.c.h.b16 %v580
    %v1742 = vunpack.c.l.b16 %v581
    %v1743 = vunpack.c.h.b16 %v581
    %v1744 = vunpack.c.l.b16 %v582
    %v1745 = vunpack.c.h.b16 %v582
    %v1746 = vunpack.c.l.b16 %v583
    %v1747 = vunpack.c.h.b16 %v583
    %v1748 = vunpack.c.l.b16 %v584
    %v1749 = vunpack.c.h.b16 %v584
    %v1750 = vunpack.c.l.b16 %v585
    %v1751 = vunpack.c.h.b16 %v585
    %v1752 = vunpack.c.l.b16 %v586
    %v1753 = vunpack.c.h.b16 %v586
    %v1754 = vunpack.c.l.b16 %v587
    %v1755 = vunpack.c.h.b16 %v587
    %v1756 = vunpack.c.l.b16 %v588
    %v1757 = vunpack.c.h.b16 %v588
    %v1758 = vunpack.c.l.b16 %v589
    %v1759 = vunpack.c.h.b16 %v589
    %v1760 = vunpack.c.l.b16 %v590
    %v1761 = vunpack.c.h.b16 %v590
    %v1762 = vunpack.c.l.b16 %v591
    %v1763 = vunpack.c.h.b16 %v591
    %v1764 = vunpack.c.l.b16 %v592
    %v1765 = vunpack.c.h.b16 %v592
    %v1766 = vunpack.c.l.b16 %v593
    %v1767 = vunpack.c.h.b16 %v593
    %v1768 = vunpack.c.l.b16 %v594
    %v1769 = vunpack.c.h.b16 %v594
    %v1770 = vunpack.c.l.b16 %v595
    %v1771 = vunpack.c.h.b16 %v595
    %v1772 = vunpack.c.l.b16 %v596
    %v1773 = vunpack.c.h.b16 %v596
    %v1774 = vunpack.c.l.b16 %v597
    %v1775 = vunpack.c.h.b16 %v597
    %v1776 = vunpack.c.l.b16 %v598
    %v1777 = vunpack.c.h.b16 %v598
    %v1778 = vunpack.c.l.b16 %v599
    %v1779 = vunpack.c.h.b16 %v599
    %v1780 = vunpack.c.l.b16 %v600
    %v1781 = vunpack.c.h.b16 %v600
    %v1782 = vunpack.c.l.b16 %v601
    %v1783 = vunpack.c.h.b16 %v601
    %v1784 = vunpack.c.l.b16 %v602
    %v1785 = vunpack.c.h.b16 %v602
    %v1786 = vunpack.c.l.b16 %v603
    %v1787 = vunpack.c.h.b16 %v603
    %v1788 = vunpack.c.l.b16 %v604
    %v1789 = vunpack.c.h.b16 %v604
    %v1790 = vunpack.c.l.b16 %v605
    %v1791 = vunpack.c.h.b16 %v605
    %v1792 = vunpack.c.l.b16 %v606
    %v1793 = vunpack.c.h.b16 %v606
    %v1794 = vunpack.c.l.b16 %v607
    %v1795 = vunpack.c.h.b16 %v607
    %v1796 = vunpack.c.l.b16 %v608
    %v1797 = vunpack.c.h.b16 %v608
    %v1798 = vunpack.c.l.b16 %v609
    %v1799 = vunpack.c.h.b16 %v609
    %v1800 = vunpack.c.l.b16 %v610
    %v1801 = vunpack.c.h.b16 %v610
    %v1802 = vunpack.c.l.b16 %v611
    %v1803 = vunpack.c.h.b16 %v611
    %v1804 = vunpack.c.l.b16 %v612
    %v1805 = vunpack.c.h.b16 %v612
    %v1806 = vunpack.c.l.b16 %v613
    %v1807 = vunpack.c.h.b16 %v613
    %v1808 = vpack.c.b16 %v1048, %v1040
    %v1809 = vpack.c.b16 %v1049, %v1041
    %v1810 = vpack.c.b16 %v1050, %v1042
    %v1811 = vpack.c.b16 %v1051, %v1043
    %v1812 = vpack.c.b16 %v1052, %v1044
    %v1813 = vpack.c.b16 %v1053, %v1045
    %v1814 = vpack.c.b16 %v1054, %v1046
    %v1815 = vpack.c.b16 %v1055, %v1047
    %v1816 = vpack.c.b16 %v1064, %v1056
    %v1817 = vpack.c.b16 %v1065, %v1057
    %v1818 = vpack.c.b16 %v1066, %v1058
    %v1819 = vpack.c.b16 %v1067, %v1059
    %v1820 = vpack.c.b16 %v1068, %v1060
    %v1821 = vpack.c.b16 %v1069, %v1061
    %v1822 = vpack.c.b16 %v1070, %v1062
    %v1823 = vpack.c.b16 %v1071, %v1063
    %v1824 = vpack.c.b16 %v1080, %v1072
    %v1825 = vpack.c.b16 %v1081, %v1073
    %v1826 = vpack.c.b16 %v1082, %v1074
    %v1827 = vpack.c.b16 %v1083, %v1075
    %v1828 = vpack.c.b16 %v1084, %v1076
    %v1829 = vpack.c.b16 %v1085, %v1077
    %v1830 = vpack.c.b16 %v1086, %v1078
    %v1831 = vpack.c.b16 %v1087, %v1079
    %v1832 = vpack.c.b16 %v1096, %v1088
    %v1833 = vpack.c.b16 %v1097, %v1089
    %v1834 = vpack.c.b16 %v1098, %v1090
    %v1835 = vpack.c.b16 %v1099, %v1091
    %v1836 = vpack.c.b16 %v1100, %v1092
    %v1837 = vpack.c.b16 %v1101, %v1093
    %v1838 = vpack.c.b16 %v1102, %v1094
    %v1839 = vpack.c.b16 %v1103, %v1095
    %v1840 = vpack.c.b16 %v1112, %v1104
    %v1841 = vpack.c.b16 %v1113, %v1105
    %v1842 = vpack.c.b16 %v1114, %v1106
    %v1843 = vpack.c.b16 %v1115, %v1107
    %v1844 = vpack.c.b16 %v1116, %v1108
    %v1845 = vpack.c.b16 %v1117, %v1109
    %v1846 = vpack.c.b16 %v1118, %v1110
    %v1847 = vpack.c.b16 %v1119, %v1111
    %v1848 = vpack.c.b16 %v1128, %v1120
    %v1849 = vpack.c.b16 %v1129, %v1121
    %v1850 = vpack.c.b16 %v1130, %v1122
    %v1851 = vpack.c.b16 %v1131, %v1123
    %v1852 = vpack.c.b16 %v1132, %v1124
    %v1853 = vpack.c.b16 %v1133, %v1125
    %v1854 = vpack.c.b16 %v1134, %v1126
    %v1855 = vpack.c.b16 %v1135, %v1127
    %v1856 = vpack.c.b16 %v1144, %v1136
    %v1857 = vpack.c.b16 %v1145, %v1137
    %v1858 = vpack.c.b16 %v1146, %v1138
    %v1859 = vpack.c.b16 %v1147, %v1139
    %v1860 = vpack.c.b16 %v1148, %v1140
    %v1861 = vpack.c.b16 %v1149, %v1141
    %v1862 = vpack.c.b16 %v1150, %v1142
    %v1863 = vpack.c.b16 %v1151, %v1143
    %v1864 = vpack.c.b16 %v1160, %v1152
    %v1865 = vpack.c.b16 %v1161, %v1153
    %v1866 = vpack.c.b16 %v1162, %v1154
    %v1867 = vpack.c.b16 %v1163, %v1155
    %v1868 = vpack.c.b16 %v1164, %v1156
    %v1869 = vpack.c.b16 %v1165, %v1157
    %v1870 = vpack.c.b16 %v1166, %v1158
    %v1871 = vpack.c.b16 %v1167, %v1159
    %v1872 = vpack.c.b16 %v1176, %v1168
    %v1873 = vpack.c.b16 %v1177, %v1169
    %v1874 = vpack.c.b16 %v1178, %v1170
    %v1875 = vpack.c.b16 %v1179, %v1171
    %v1876 = vpack.c.b16 %v1180, %v1172
    %v1877 = vpack.c.b16 %v1181, %v1173
    %v1878 = vpack.c.b16 %v1182, %v1174
    %v1879 = vpack.c.b16 %v1183, %v1175
    %v1880 = vpack.c.b16 %v1192, %v1184
    %v1881 = vpack.c.b16 %v1193, %v1185
    %v1882 = vpack.c.b16 %v1194, %v1186
    %v1883 = vpack.c.b16 %v1195, %v1187
    %v1884 = vpack.c.b16 %v1196, %v1188
    %v1885 = vpack.c.b16 %v1197, %v1189
    %v1886 = vpack.c.b16 %v1198, %v1190
    %v1887 = vpack.c.b16 %v1199, %v1191
    %v1888 = vpack.c.b16 %v1208, %v1200
    %v1889 = vpack.c.b16 %v1209, %v1201
    %v1890 = vpack.c.b16 %v1210, %v1202
    %v1891 = vpack.c.b16 %v1211, %v1203
    %v1892 = vpack.c.b16 %v1212, %v1204
    %v1893 = vpack.c.b16 %v1213, %v1205
    %v1894 = vpack.c.b16 %v1214, %v1206
    %v1895 = vpack.c.b16 %v1215, %v1207
    %v1896 = vpack.c.b16 %v1224, %v1216
    %v1897 = vpack.c.b16 %v1225, %v1217
    %v1898 = vpack.c.b16 %v1226, %v1218
    %v1899 = vpack.c.b16 %v1227, %v1219
    %v1900 = vpack.c.b16 %v1228, %v1220
    %v1901 = vpack.c.b16 %v1229, %v1221
    %v1902 = vpack.c.b16 %v1230, %v1222
    %v1903 = vpack.c.b16 %v1231, %v1223
    %v1904 = vpack.c.b16 %v1240, %v1232
    %v1905 = vpack.c.b16 %v1241, %v1233
    %v1906 = vpack.c.b16 %v1242, %v1234
    %v1907 = vpack.c.b16 %v1243, %v1235
    %v1908 = vpack.c.b16 %v1244, %v1236
    %v1909 = vpack.c.b16 %v1245, %v1237
    %v1910 = vpack.c.b16 %v1246, %v1238
    %v1911 = vpack.c.b16 %v1247, %v1239
    %v1912 = vpack.c.b16 %v1256, %v1248
    %v1913 = vpack.c.b16 %v1257, %v1249
    %v1914 = vpack.c.b16 %v1258, %v1250
    %v1915 = vpack.c.b16 %v1259, %v1251
    %v1916 = vpack.c.b16 %v1260, %v1252
    %v1917 = vpack.c.b16 %v1261, %v1253
    %v1918 = vpack.c.b16 %v1262, %v1254
    %v1919 = vpack.c.b16 %v1263, %v1255
    %v1920 = vpack.c.b16 %v1272, %v1264
    %v1921 = vpack.c.b16 %v1273, %v1265
    %v1922 = vpack.c.b16 %v1274, %v1266
    %v1923 = vpack.c.b16 %v1275, %v1267
    %v1924 = vpack.c.b16 %v1276, %v1268
    %v1925 = vpack.c.b16 %v1277, %v1269
    %v1926 = vpack.c.b16 %v1278, %v1270
    %v1927 = vpack.c.b16 %v1279, %v1271
    %v1928 = vpack.c.b16 %v1288, %v1280
    %v1929 = vpack.c.b16 %v1289, %v1281
    %v1930 = vpack.c.b16 %v1290, %v1282
    %v1931 = vpack.c.b16 %v1291, %v1283
    %v1932 = vpack.c.b16 %v1292, %v1284
    %v1933 = vpack.c.b16 %v1293, %v1285
    %v1934 = vpack.c.b16 %v1294, %v1286
    %v1935 = vpack.c.b16 %v1295, %v1287
    %v1936 = vpack.c.b16 %v1304, %v1296
    %v1937 = vpack.c.b16 %v1305, %v1297
    %v1938 = vpack.c.b16 %v1306, %v1298
    %v1939 = vpack.c.b16 %v1307, %v1299
    %v1940 = vpack.c.b16 %v1308, %v1300
    %v1941 = vpack.c.b16 %v1309, %v1301
    %v1942 = vpack.c.b16 %v1310, %v1302
    %v1943 = vpack.c.b16 %v1311, %v1303
    %v1944 = vpack.c.b16 %v1320, %v1312
    %v1945 = vpack.c.b16 %v1321, %v1313
    %v1946 = vpack.c.b16 %v1322, %v1314
    %v1947 = vpack.c.b16 %v1323, %v1315
    %v1948 = vpack.c.b16 %v1324, %v1316
    %v1949 = vpack.c.b16 %v1325, %v1317
    %v1950 = vpack.c.b16 %v1326, %v1318
    %v1951 = vpack.c.b16 %v1327, %v1319
    %v1952 = vpack.c.b16 %v1336, %v1328
    %v1953 = vpack.c.b16 %v1337, %v1329
    %v1954 = vpack.c.b16 %v1338, %v1330
    %v1955 = vpack.c.b16 %v1339, %v1331
    %v1956 = vpack.c.b16 %v1340, %v1332
    %v1957 = vpack.c.b16 %v1341, %v1333
    %v1958 = vpack.c.b16 %v1342, %v1334
    %v1959 = vpack.c.b16 %v1343, %v1335
    %v1960 = vpack.c.b16 %v1352, %v1344
    %v1961 = vpack.c.b16 %v1353, %v1345
    %v1962 = vpack.c.b16 %v1354, %v1346
    %v1963 = vpack.c.b16 %v1355, %v1347
    %v1964 = vpack.c.b16 %v1356, %v1348
    %v1965 = vpack.c.b16 %v1357, %v1349
    %v1966 = vpack.c.b16 %v1358, %v1350
    %v1967 = vpack.c.b16 %v1359, %v1351
    %v1968 = vpack.c.b16 %v1368, %v1360
    %v1969 = vpack.c.b16 %v1369, %v1361
    %v1970 = vpack.c.b16 %v1370, %v1362
    %v1971 = vpack.c.b16 %v1371, %v1363
    %v1972 = vpack.c.b16 %v1372, %v1364
    %v1973 = vpack.c.b16 %v1373, %v1365
    %v1974 = vpack.c.b16 %v1374, %v1366
    %v1975 = vpack.c.b16 %v1375, %v1367
    %v1976 = vpack.c.b16 %v1384, %v1376
    %v1977 = vpack.c.b16 %v1385, %v1377
    %v1978 = vpack.c.b16 %v1386, %v1378
    %v1979 = vpack.c.b16 %v1387, %v1379
    %v1980 = vpack.c.b16 %v1388, %v1380
    %v1981 = vpack.c.b16 %v1389, %v1381
    %v1982 = vpack.c.b16 %v1390, %v1382
    %v1983 = vpack.c.b16 %v1391, %v1383
    %v1984 = vpack.c.b16 %v1400, %v1392
    %v1985 = vpack.c.b16 %v1401, %v1393
    %v1986 = vpack.c.b16 %v1402, %v1394
    %v1987 = vpack.c.b16 %v1403, %v1395
    %v1988 = vpack.c.b16 %v1404, %v1396
    %v1989 = vpack.c.b16 %v1405, %v1397
    %v1990 = vpack.c.b16 %v1406, %v1398
    %v1991 = vpack.c.b16 %v1407, %v1399
    %v1992 = vpack.c.b16 %v1416, %v1408
    %v1993 = vpack.c.b16 %v1417, %v1409
    %v1994 = vpack.c.b16 %v1418, %v1410
    %v1995 = vpack.c.b16 %v1419, %v1411
    %v1996 = vpack.c.b16 %v1420, %v1412
    %v1997 = vpack.c.b16 %v1421, %v1413
    %v1998 = vpack.c.b16 %v1422, %v1414
    %v1999 = vpack.c.b16 %v1423, %v1415
    %v2000 = vpack.c.b16 %v1432, %v1424
    %v2001 = vpack.c.b16 %v1433, %v1425
    %v2002 = vpack.c.b16 %v1434, %v1426
    %v2003 = vpack.c.b16 %v1435, %v1427
    %v2004 = vpack.c.b16 %v1436, %v1428
    %v2005 = vpack.c.b16 %v1437, %v1429
    %v2006 = vpack.c.b16 %v1438, %v1430
    %v2007 = vpack.c.b16 %v1439, %v1431
    %v2008 = vpack.c.b16 %v1448, %v1440
    %v2009 = vpack.c.b16 %v1449, %v1441
    %v2010 = vpack.c.b16 %v1450, %v1442
    %v2011 = vpack.c.b16 %v1451, %v1443
    %v2012 = vpack.c.b16 %v1452, %v1444
    %v2013 = vpack.c.b16 %v1453, %v1445
    %v2014 = vpack.c.b16 %v1454, %v1446
    %v2015 = vpack.c.b16 %v1455, %v1447
    %v2016 = vpack.c.b16 %v1464, %v1456
    %v2017 = vpack.c.b16 %v1465, %v1457
    %v2018 = vpack.c.b16 %v1466, %v1458
    %v2019 = vpack.c.b16 %v1467, %v1459
    %v2020 = vpack.c.b16 %v1468, %v1460
    %v2021 = vpack.c.b16 %v1469, %v1461
    %v2022 = vpack.c.b16 %v1470, %v1462
    %v2023 = vpack.c.b16 %v1471, %v1463
    %v2024 = vpack.c.b16 %v1480, %v1472
    %v2025 = vpack.c.b16 %v1481, %v1473
    %v2026 = vpack.c.b16 %v1482, %v1474
    %v2027 = vpack.c.b16 %v1483, %v1475
    %v2028 = vpack.c.b16 %v1484, %v1476
    %v2029 = vpack.c.b16 %v1485, %v1477
    %v2030 = vpack.c.b16 %v1486, %v1478
    %v2031 = vpack.c.b16 %v1487, %v1479
    %v2032 = vpack.c.b16 %v1496, %v1488
    %v2033 = vpack.c.b16 %v1497, %v1489
    %v2034 = vpack.c.b16 %v1498, %v1490
    %v2035 = vpack.c.b16 %v1499, %v1491
    %v2036 = vpack.c.b16 %v1500, %v1492
    %v2037 = vpack.c.b16 %v1501, %v1493
    %v2038 = vpack.c.b16 %v1502, %v1494
    %v2039 = vpack.c.b16 %v1503, %v1495
    %v2040 = vpack.c.b16 %v1512, %v1504
    %v2041 = vpack.c.b16 %v1513, %v1505
    %v2042 = vpack.c.b16 %v1514, %v1506
    %v2043 = vpack.c.b16 %v1515, %v1507
    %v2044 = vpack.c.b16 %v1516, %v1508
    %v2045 = vpack.c.b16 %v1517, %v1509
    %v2046 = vpack.c.b16 %v1518, %v1510
    %v2047 = vpack.c.b16 %v1519, %v1511
    %v2048 = vpack.c.b16 %v1528, %v1520
    %v2049 = vpack.c.b16 %v1529, %v1521
    %v2050 = vpack.c.b16 %v1530, %v1522
    %v2051 = vpack.c.b16 %v1531, %v1523
    %v2052 = vpack.c.b16 %v1532, %v1524
    %v2053 = vpack.c.b16 %v1533, %v1525
    %v2054 = vpack.c.b16 %v1534, %v1526
    %v2055 = vpack.c.b16 %v1535, %v1527
    %v2056 = vpack.c.b16 %v1544, %v1536
    %v2057 = vpack.c.b16 %v1545, %v1537
    %v2058 = vpack.c.b16 %v1546, %v1538
    %v2059 = vpack.c.b16 %v1547, %v1539
    %v2060 = vpack.c.b16 %v1548, %v1540
    %v2061 = vpack.c.b16 %v1549, %v1541
    %v2062 = vpack.c.b16 %v1550, %v1542
    %v2063 = vpack.c.b16 %v1551, %v1543
    %v2064 = vpack.c.b16 %v1560, %v1552
    %v2065 = vpack.c.b16 %v1561, %v1553
    %v2066 = vpack.c.b16 %v1562, %v1554
    %v2067 = vpack.c.b16 %v1563, %v1555
    %v2068 = vpack.c.b16 %v1564, %v1556
    %v2069 = vpack.c.b16 %v1565, %v1557
    %v2070 = vpack.c.b16 %v1566, %v1558
    %v2071 = vpack.c.b16 %v1567, %v1559
    %v2072 = vpack.c.b16 %v1576, %v1568
    %v2073 = vpack.c.b16 %v1577, %v1569
    %v2074 = vpack.c.b16 %v1578, %v1570
    %v2075 = vpack.c.b16 %v1579, %v1571
    %v2076 = vpack.c.b16 %v1580, %v1572
    %v2077 = vpack.c.b16 %v1581, %v1573
    %v2078 = vpack.c.b16 %v1582, %v1574
    %v2079 = vpack.c.b16 %v1583, %v1575
    %v2080 = vpack.c.b16 %v1592, %v1584
    %v2081 = vpack.c.b16 %v1593, %v1585
    %v2082 = vpack.c.b16 %v1594, %v1586
    %v2083 = vpack.c.b16 %v1595, %v1587
    %v2084 = vpack.c.b16 %v1596, %v1588
    %v2085 = vpack.c.b16 %v1597, %v1589
    %v2086 = vpack.c.b16 %v1598, %v1590
    %v2087 = vpack.c.b16 %v1599, %v1591
    %v2088 = vpack.c.b16 %v1608, %v1600
    %v2089 = vpack.c.b16 %v1609, %v1601
    %v2090 = vpack.c.b16 %v1610, %v1602
    %v2091 = vpack.c.b16 %v1611, %v1603
    %v2092 = vpack.c.b16 %v1612, %v1604
    %v2093 = vpack.c.b16 %v1613, %v1605
    %v2094 = vpack.c.b16 %v1614, %v1606
    %v2095 = vpack.c.b16 %v1615, %v1607
    %v2096 = vpack.c.b16 %v1624, %v1616
    %v2097 = vpack.c.b16 %v1625, %v1617
    %v2098 = vpack.c.b16 %v1626, %v1618
    %v2099 = vpack.c.b16 %v1627, %v1619
    %v2100 = vpack.c.b16 %v1628, %v1620
    %v2101 = vpack.c.b16 %v1629, %v1621
    %v2102 = vpack.c.b16 %v1630, %v1622
    %v2103 = vpack.c.b16 %v1631, %v1623
    %v2104 = vpack.c.b16 %v1640, %v1632
    %v2105 = vpack.c.b16 %v1641, %v1633
    %v2106 = vpack.c.b16 %v1642, %v1634
    %v2107 = vpack.c.b16 %v1643, %v1635
    %v2108 = vpack.c.b16 %v1644, %v1636
    %v2109 = vpack.c.b16 %v1645, %v1637
    %v2110 = vpack.c.b16 %v1646, %v1638
    %v2111 = vpack.c.b16 %v1647, %v1639
    %v2112 = vpack.c.b16 %v1656, %v1648
    %v2113 = vpack.c.b16 %v1657, %v1649
    %v2114 = vpack.c.b16 %v1658, %v1650
    %v2115 = vpack.c.b16 %v1659, %v1651
    %v2116 = vpack.c.b16 %v1660, %v1652
    %v2117 = vpack.c.b16 %v1661, %v1653
    %v2118 = vpack.c.b16 %v1662, %v1654
    %v2119 = vpack.c.b16 %v1663, %v1655
    %v2120 = vpack.c.b16 %v1672, %v1664
    %v2121 = vpack.c.b16 %v1673, %v1665
    %v2122 = vpack.c.b16 %v1674, %v1666
    %v2123 = vpack.c.b16 %v1675, %v1667
    %v2124 = vpack.c.b16 %v1676, %v1668
    %v2125 = vpack.c.b16 %v1677, %v1669
    %v2126 = vpack.c.b16 %v1678, %v1670
    %v2127 = vpack.c.b16 %v1679, %v1671
    %v2128 = vpack.c.b16 %v1688, %v1680
    %v2129 = vpack.c.b16 %v1689, %v1681
    %v2130 = vpack.c.b16 %v1690, %v1682
    %v2131 = vpack.c.b16 %v1691, %v1683
    %v2132 = vpack.c.b16 %v1692, %v1684
    %v2133 = vpack.c.b16 %v1693, %v1685
    %v2134 = vpack.c.b16 %v1694, %v1686
    %v2135 = vpack.c.b16 %v1695, %v1687
    %v2136 = vpack.c.b16 %v1704, %v1696
    %v2137 = vpack.c.b16 %v1705, %v1697
    %v2138 = vpack.c.b16 %v1706, %v1698
    %v2139 = vpack.c.b16 %v1707, %v1699
    %v2140 = vpack.c.b16 %v1708, %v1700
    %v2141 = vpack.c.b16 %v1709, %v1701
    %v2142 = vpack.c.b16 %v1710, %v1702
    %v2143 = vpack.c.b16 %v1711, %v1703
    %v2144 = vpack.c.b16 %v1720, %v1712
    %v2145 = vpack.c.b16 %v1721, %v1713
    %v2146 = vpack.c.b16 %v1722, %v1714
    %v2147 = vpack.c.b16 %v1723, %v1715
    %v2148 = vpack.c.b16 %v1724, %v1716
    %v2149 = vpack.c.b16 %v1725, %v1717
    %v2150 = vpack.c.b16 %v1726, %v1718
    %v2151 = vpack.c.b16 %v1727, %v1719
    %v2152 = vpack.c.b16 %v1736, %v1728
    %v2153 = vpack.c.b16 %v1737, %v1729
    %v2154 = vpack.c.b16 %v1738, %v1730
    %v2155 = vpack.c.b16 %v1739, %v1731
    %v2156 = vpack.c.b16 %v1740, %v1732
    %v2157 = vpack.c.b16 %v1741, %v1733
    %v2158 = vpack.c.b16 %v1742, %v1734
    %v2159 = vpack.c.b16 %v1743, %v1735
    %v2160 = vpack.c.b16 %v1752, %v1744
    %v2161 = vpack.c.b16 %v1753, %v1745
    %v2162 = vpack.c.b16 %v1754, %v1746
    %v2163 = vpack.c.b16 %v1755, %v1747
    %v2164 = vpack.c.b16 %v1756, %v1748
    %v2165 = vpack.c.b16 %v1757, %v1749
    %v2166 = vpack.c.b16 %v1758, %v1750
    %v2167 = vpack.c.b16 %v1759, %v1751
    %v2168 = vpack.c.b16 %v1768, %v1760
    %v2169 = vpack.c.b16 %v1769, %v1761
    %v2170 = vpack.c.b16 %v1770, %v1762
    %v2171 = vpack.c.b16 %v1771, %v1763
    %v2172 = vpack.c.b16 %v1772, %v1764
    %v2173 = vpack.c.b16 %v1773, %v1765
    %v2174 = vpack.c.b16 %v1774, %v1766
    %v2175 = vpack.c.b16 %v1775, %v1767
    %v2176 = vpack.c.b16 %v1784, %v1776
    %v2177 = vpack.c.b16 %v1785, %v1777
    %v2178 = vpack.c.b16 %v1786, %v1778
    %v2179 = vpack.c.b16 %v1787, %v1779
    %v2180 = vpack.c.b16 %v1788, %v1780
    %v2181 = vpack.c.b16 %v1789, %v1781
    %v2182 = vpack.c.b16 %v1790, %v1782
    %v2183 = vpack.c.b16 %v1791, %v1783
    %v2184 = vpack.c.b16 %v1800, %v1792
    %v2185 = vpack.c.b16 %v1801, %v1793
    %v2186 = vpack.c.b16 %v1802, %v1794
    %v2187 = vpack.c.b16 %v1803, %v1795
    %v2188 = vpack.c.b16 %v1804, %v1796
    %v2189 = vpack.c.b16 %v1805, %v1797
    %v2190 = vpack.c.b16 %v1806, %v1798
    %v2191 = vpack.c.b16 %v1807, %v1799
    %2576 = vmatprep.subr.bf16.mxu0 %v1865
    %2577 = vmatpush1.bf16.msra.mxu0 %v1864
    %2578 = vmatprep.subr.bf16.mxu0 %v1857
    %2579 = vmatpush1.bf16.msra.mxu0 %v1856
    %2580 = vmatprep.subr.bf16.mxu0 %v1849
    %2581 = vmatpush1.bf16.msra.mxu0 %v1848
    %2582 = vmatprep.subr.bf16.mxu0 %v1841
    %2583 = vmatpush1.bf16.msra.mxu0 %v1840
    %2584 = vmatprep.subr.bf16.mxu0 %v1833
    %2585 = vmatpush1.bf16.msra.mxu0 %v1832
    %2586 = vmatprep.subr.bf16.mxu0 %v1825
    %2587 = vmatpush1.bf16.msra.mxu0 %v1824
    %2588 = vmatprep.subr.bf16.mxu0 %v1817
    %2589 = vmatpush1.bf16.msra.mxu0 %v1816
    %2590 = vmatprep.subr.bf16.mxu0 %v1809
    %2591 = vmatpush1.bf16.msra.mxu0 %v1808
    %2592 = vmatprep.subr.bf16.mxu0 %v1929
    %2593 = vmatpush2.bf16.msra.mxu0 %v1928
    %2594 = vmatprep.subr.bf16.mxu0 %v1921
    %2595 = vmatpush2.bf16.msra.mxu0 %v1920
    %2596 = vmatprep.subr.bf16.mxu0 %v1913
    %2597 = vmatpush2.bf16.msra.mxu0 %v1912
    %2598 = vmatprep.subr.bf16.mxu0 %v1905
    %2599 = vmatpush2.bf16.msra.mxu0 %v1904
    %2600 = vmatprep.subr.bf16.mxu0 %v1897
    %2601 = vmatpush2.bf16.msra.mxu0 %v1896
    %2602 = vmatprep.subr.bf16.mxu0 %v1889
    %2603 = vmatpush2.bf16.msra.mxu0 %v1888
    %2604 = vmatprep.subr.bf16.mxu0 %v1881
    %2605 = vmatpush2.bf16.msra.mxu0 %v1880
    %2606 = vmatprep.subr.bf16.mxu0 %v1873
    %2607 = vmatpush2.bf16.msra.mxu0 %v1872
    %2608 = vmatprep.mubr.bf16.mxu0 %v225
    %2609 = vmatmul.mubr.bf16.gmra.mxu0 %v224
    %v2610 = vpop.f32.mrf.mxu0
    %v2611 = vadd.f32 %v619, %v2610
    %v2612 = vpop.f32.mrf.mxu0
    %v2613 = vadd.f32 %v623, %v2612
    %v2614 = vpop.f32.mrf.mxu0
    %v2615 = vpop.f32.mrf.mxu0
    %2616 = vdwg.mxu0
    %2617 = vmatprep.subr.bf16.mxu0 %v1993
    %2618 = vmatpush1.bf16.msra.mxu0 %v1992
    %2619 = vmatprep.subr.bf16.mxu0 %v1985
    %2620 = vmatpush1.bf16.msra.mxu0 %v1984
    %2621 = vmatprep.subr.bf16.mxu0 %v1977
    %2622 = vmatpush1.bf16.msra.mxu0 %v1976
    %2623 = vmatprep.subr.bf16.mxu0 %v1969
    %2624 = vmatpush1.bf16.msra.mxu0 %v1968
    %2625 = vmatprep.subr.bf16.mxu0 %v1961
    %2626 = vmatpush1.bf16.msra.mxu0 %v1960
    %2627 = vmatprep.subr.bf16.mxu0 %v1953
    %2628 = vmatpush1.bf16.msra.mxu0 %v1952
    %2629 = vmatprep.subr.bf16.mxu0 %v1945
    %2630 = vmatpush1.bf16.msra.mxu0 %v1944
    %2631 = vmatprep.subr.bf16.mxu0 %v1937
    %2632 = vmatpush1.bf16.msra.mxu0 %v1936
    %2633 = vmatprep.subr.bf16.mxu0 %v2057
    %2634 = vmatpush2.bf16.msra.mxu0 %v2056
    %2635 = vmatprep.subr.bf16.mxu0 %v2049
    %2636 = vmatpush2.bf16.msra.mxu0 %v2048
    %2637 = vmatprep.subr.bf16.mxu0 %v2041
    %2638 = vmatpush2.bf16.msra.mxu0 %v2040
    %2639 = vmatprep.subr.bf16.mxu0 %v2033
    %2640 = vmatpush2.bf16.msra.mxu0 %v2032
    %2641 = vmatprep.subr.bf16.mxu0 %v2025
    %2642 = vmatpush2.bf16.msra.mxu0 %v2024
    %2643 = vmatprep.subr.bf16.mxu0 %v2017
    %2644 = vmatpush2.bf16.msra.mxu0 %v2016
    %2645 = vmatprep.subr.bf16.mxu0 %v2009
    %2646 = vmatpush2.bf16.msra.mxu0 %v2008
    %2647 = vmatprep.subr.bf16.mxu0 %v2001
    %2648 = vmatpush2.bf16.msra.mxu0 %v2000
    %2649 = vmatprep.mubr.bf16.mxu0 %v227
    %2650 = vmatmul.mubr.bf16.gmra.mxu0 %v226
    %v2651 = vpop.f32.mrf.mxu0
    %v2652 = vadd.f32 %v2611, %v2651
    %v2653 = vpop.f32.mrf.mxu0
    %v2654 = vadd.f32 %v2613, %v2653
    %v2655 = vpop.f32.mrf.mxu0
    %v2656 = vpop.f32.mrf.mxu0
    %2657 = vdwg.mxu0
    %2658 = vmatprep.subr.bf16.mxu0 %v2121
    %2659 = vmatpush1.bf16.msra.mxu0 %v2120
    %2660 = vmatprep.subr.bf16.mxu0 %v2113
    %2661 = vmatpush1.bf16.msra.mxu0 %v2112
    %2662 = vmatprep.subr.bf16.mxu0 %v2105
    %2663 = vmatpush1.bf16.msra.mxu0 %v2104
    %2664 = vmatprep.subr.bf16.mxu0 %v2097
    %2665 = vmatpush1.bf16.msra.mxu0 %v2096
    %2666 = vmatprep.subr.bf16.mxu0 %v2089
    %2667 = vmatpush1.bf16.msra.mxu0 %v2088
    %2668 = vmatprep.subr.bf16.mxu0 %v2081
    %2669 = vmatpush1.bf16.msra.mxu0 %v2080
    %2670 = vmatprep.subr.bf16.mxu0 %v2073
    %2671 = vmatpush1.bf16.msra.mxu0 %v2072
    %2672 = vmatprep.subr.bf16.mxu0 %v2065
    %2673 = vmatpush1.bf16.msra.mxu0 %v2064
    %2674 = vmatprep.subr.bf16.mxu0 %v2185
    %2675 = vmatpush2.bf16.msra.mxu0 %v2184
    %2676 = vmatprep.subr.bf16.mxu0 %v2177
    %2677 = vmatpush2.bf16.msra.mxu0 %v2176
    %2678 = vmatprep.subr.bf16.mxu0 %v2169
    %2679 = vmatpush2.bf16.msra.mxu0 %v2168
    %2680 = vmatprep.subr.bf16.mxu0 %v2161
    %2681 = vmatpush2.bf16.msra.mxu0 %v2160
    %2682 = vmatprep.subr.bf16.mxu0 %v2153
    %2683 = vmatpush2.bf16.msra.mxu0 %v2152
    %2684 = vmatprep.subr.bf16.mxu0 %v2145
    %2685 = vmatpush2.bf16.msra.mxu0 %v2144
    %2686 = vmatprep.subr.bf16.mxu0 %v2137
    %2687 = vmatpush2.bf16.msra.mxu0 %v2136
    %2688 = vmatprep.subr.bf16.mxu0 %v2129
    %2689 = vmatpush2.bf16.msra.mxu0 %v2128
    %2690 = vmatprep.mubr.bf16.mxu0 %v229
    %2691 = vmatmul.mubr.bf16.gmra.mxu0 %v228
    %v2692 = vpop.f32.mrf.mxu0
    %v2693 = vadd.f32 %v2652, %v2692
    %v2694 = vpop.f32.mrf.mxu0
    %v2695 = vadd.f32 %v2654, %v2694
    %v2696 = vpop.f32.mrf.mxu0
    %v2697 = vpop.f32.mrf.mxu0
    %2698 = vdwg.mxu0
    %2699 = vmatprep.subr.bf16.mxu0 %v1867
    %2700 = vmatpush1.bf16.msra.mxu0 %v1866
    %2701 = vmatprep.subr.bf16.mxu0 %v1859
    %2702 = vmatpush1.bf16.msra.mxu0 %v1858
    %2703 = vmatprep.subr.bf16.mxu0 %v1851
    %2704 = vmatpush1.bf16.msra.mxu0 %v1850
    %2705 = vmatprep.subr.bf16.mxu0 %v1843
    %2706 = vmatpush1.bf16.msra.mxu0 %v1842
    %2707 = vmatprep.subr.bf16.mxu0 %v1835
    %2708 = vmatpush1.bf16.msra.mxu0 %v1834
    %2709 = vmatprep.subr.bf16.mxu0 %v1827
    %2710 = vmatpush1.bf16.msra.mxu0 %v1826
    %2711 = vmatprep.subr.bf16.mxu0 %v1819
    %2712 = vmatpush1.bf16.msra.mxu0 %v1818
    %2713 = vmatprep.subr.bf16.mxu0 %v1811
    %2714 = vmatpush1.bf16.msra.mxu0 %v1810
    %2715 = vmatprep.subr.bf16.mxu0 %v1931
    %2716 = vmatpush2.bf16.msra.mxu0 %v1930
    %2717 = vmatprep.subr.bf16.mxu0 %v1923
    %2718 = vmatpush2.bf16.msra.mxu0 %v1922
    %2719 = vmatprep.subr.bf16.mxu0 %v1915
    %2720 = vmatpush2.bf16.msra.mxu0 %v1914
    %2721 = vmatprep.subr.bf16.mxu0 %v1907
    %2722 = vmatpush2.bf16.msra.mxu0 %v1906
    %2723 = vmatprep.subr.bf16.mxu0 %v1899
    %2724 = vmatpush2.bf16.msra.mxu0 %v1898
    %2725 = vmatprep.subr.bf16.mxu0 %v1891
    %2726 = vmatpush2.bf16.msra.mxu0 %v1890
    %2727 = vmatprep.subr.bf16.mxu0 %v1883
    %2728 = vmatpush2.bf16.msra.mxu0 %v1882
    %2729 = vmatprep.subr.bf16.mxu0 %v1875
    %2730 = vmatpush2.bf16.msra.mxu0 %v1874
    %2731 = vmatprep.mubr.bf16.mxu0 %v225
    %2732 = vmatmul.mubr.bf16.gmra.mxu0 %v224
    %v2733 = vpop.f32.mrf.mxu0
    %v2734 = vadd.f32 %v627, %v2733
    %v2735 = vpop.f32.mrf.mxu0
    %v2736 = vadd.f32 %v631, %v2735
    %v2737 = vpop.f32.mrf.mxu0
    %v2738 = vpop.f32.mrf.mxu0
    %2739 = vdwg.mxu0
    %2740 = vmatprep.subr.bf16.mxu0 %v1995
    %2741 = vmatpush1.bf16.msra.mxu0 %v1994
    %2742 = vmatprep.subr.bf16.mxu0 %v1987
    %2743 = vmatpush1.bf16.msra.mxu0 %v1986
    %2744 = vmatprep.subr.bf16.mxu0 %v1979
    %2745 = vmatpush1.bf16.msra.mxu0 %v1978
    %2746 = vmatprep.subr.bf16.mxu0 %v1971
    %2747 = vmatpush1.bf16.msra.mxu0 %v1970
    %2748 = vmatprep.subr.bf16.mxu0 %v1963
    %2749 = vmatpush1.bf16.msra.mxu0 %v1962
    %2750 = vmatprep.subr.bf16.mxu0 %v1955
    %2751 = vmatpush1.bf16.msra.mxu0 %v1954
    %2752 = vmatprep.subr.bf16.mxu0 %v1947
    %2753 = vmatpush1.bf16.msra.mxu0 %v1946
    %2754 = vmatprep.subr.bf16.mxu0 %v1939
    %2755 = vmatpush1.bf16.msra.mxu0 %v1938
    %2756 = vmatprep.subr.bf16.mxu0 %v2059
    %2757 = vmatpush2.bf16.msra.mxu0 %v2058
    %2758 = vmatprep.subr.bf16.mxu0 %v2051
    %2759 = vmatpush2.bf16.msra.mxu0 %v2050
    %2760 = vmatprep.subr.bf16.mxu0 %v2043
    %2761 = vmatpush2.bf16.msra.mxu0 %v2042
    %2762 = vmatprep.subr.bf16.mxu0 %v2035
    %2763 = vmatpush2.bf16.msra.mxu0 %v2034
    %2764 = vmatprep.subr.bf16.mxu0 %v2027
    %2765 = vmatpush2.bf16.msra.mxu0 %v2026
    %2766 = vmatprep.subr.bf16.mxu0 %v2019
    %2767 = vmatpush2.bf16.msra.mxu0 %v2018
    %2768 = vmatprep.subr.bf16.mxu0 %v2011
    %2769 = vmatpush2.bf16.msra.mxu0 %v2010
    %2770 = vmatprep.subr.bf16.mxu0 %v2003
    %2771 = vmatpush2.bf16.msra.mxu0 %v2002
    %2772 = vmatprep.mubr.bf16.mxu0 %v227
    %2773 = vmatmul.mubr.bf16.gmra.mxu0 %v226
    %v2774 = vpop.f32.mrf.mxu0
    %v2775 = vadd.f32 %v2734, %v2774
    %v2776 = vpop.f32.mrf.mxu0
    %v2777 = vadd.f32 %v2736, %v2776
    %v2778 = vpop.f32.mrf.mxu0
    %v2779 = vpop.f32.mrf.mxu0
    %2780 = vdwg.mxu0
    %2781 = vmatprep.subr.bf16.mxu0 %v2123
    %2782 = vmatpush1.bf16.msra.mxu0 %v2122
    %2783 = vmatprep.subr.bf16.mxu0 %v2115
    %2784 = vmatpush1.bf16.msra.mxu0 %v2114
    %2785 = vmatprep.subr.bf16.mxu0 %v2107
    %2786 = vmatpush1.bf16.msra.mxu0 %v2106
    %2787 = vmatprep.subr.bf16.mxu0 %v2099
    %2788 = vmatpush1.bf16.msra.mxu0 %v2098
    %2789 = vmatprep.subr.bf16.mxu0 %v2091
    %2790 = vmatpush1.bf16.msra.mxu0 %v2090
    %2791 = vmatprep.subr.bf16.mxu0 %v2083
    %2792 = vmatpush1.bf16.msra.mxu0 %v2082
    %2793 = vmatprep.subr.bf16.mxu0 %v2075
    %2794 = vmatpush1.bf16.msra.mxu0 %v2074
    %2795 = vmatprep.subr.bf16.mxu0 %v2067
    %2796 = vmatpush1.bf16.msra.mxu0 %v2066
    %2797 = vmatprep.subr.bf16.mxu0 %v2187
    %2798 = vmatpush2.bf16.msra.mxu0 %v2186
    %2799 = vmatprep.subr.bf16.mxu0 %v2179
    %2800 = vmatpush2.bf16.msra.mxu0 %v2178
    %2801 = vmatprep.subr.bf16.mxu0 %v2171
    %2802 = vmatpush2.bf16.msra.mxu0 %v2170
    %2803 = vmatprep.subr.bf16.mxu0 %v2163
    %2804 = vmatpush2.bf16.msra.mxu0 %v2162
    %2805 = vmatprep.subr.bf16.mxu0 %v2155
    %2806 = vmatpush2.bf16.msra.mxu0 %v2154
    %2807 = vmatprep.subr.bf16.mxu0 %v2147
    %2808 = vmatpush2.bf16.msra.mxu0 %v2146
    %2809 = vmatprep.subr.bf16.mxu0 %v2139
    %2810 = vmatpush2.bf16.msra.mxu0 %v2138
    %2811 = vmatprep.subr.bf16.mxu0 %v2131
    %2812 = vmatpush2.bf16.msra.mxu0 %v2130
    %2813 = vmatprep.mubr.bf16.mxu0 %v229
    %2814 = vmatmul.mubr.bf16.gmra.mxu0 %v228
    %v2815 = vpop.f32.mrf.mxu0
    %v2816 = vadd.f32 %v2775, %v2815
    %v2817 = vpop.f32.mrf.mxu0
    %v2818 = vadd.f32 %v2777, %v2817
    %v2819 = vpop.f32.mrf.mxu0
    %v2820 = vpop.f32.mrf.mxu0
    %2821 = vdwg.mxu0
    %2822 = vmatprep.subr.bf16.mxu0 %v1869
    %2823 = vmatpush1.bf16.msra.mxu0 %v1868
    %2824 = vmatprep.subr.bf16.mxu0 %v1861
    %2825 = vmatpush1.bf16.msra.mxu0 %v1860
    %2826 = vmatprep.subr.bf16.mxu0 %v1853
    %2827 = vmatpush1.bf16.msra.mxu0 %v1852
    %2828 = vmatprep.subr.bf16.mxu0 %v1845
    %2829 = vmatpush1.bf16.msra.mxu0 %v1844
    %2830 = vmatprep.subr.bf16.mxu0 %v1837
    %2831 = vmatpush1.bf16.msra.mxu0 %v1836
    %2832 = vmatprep.subr.bf16.mxu0 %v1829
    %2833 = vmatpush1.bf16.msra.mxu0 %v1828
    %2834 = vmatprep.subr.bf16.mxu0 %v1821
    %2835 = vmatpush1.bf16.msra.mxu0 %v1820
    %2836 = vmatprep.subr.bf16.mxu0 %v1813
    %2837 = vmatpush1.bf16.msra.mxu0 %v1812
    %2838 = vmatprep.subr.bf16.mxu0 %v1933
    %2839 = vmatpush2.bf16.msra.mxu0 %v1932
    %2840 = vmatprep.subr.bf16.mxu0 %v1925
    %2841 = vmatpush2.bf16.msra.mxu0 %v1924
    %2842 = vmatprep.subr.bf16.mxu0 %v1917
    %2843 = vmatpush2.bf16.msra.mxu0 %v1916
    %2844 = vmatprep.subr.bf16.mxu0 %v1909
    %2845 = vmatpush2.bf16.msra.mxu0 %v1908
    %2846 = vmatprep.subr.bf16.mxu0 %v1901
    %2847 = vmatpush2.bf16.msra.mxu0 %v1900
    %2848 = vmatprep.subr.bf16.mxu0 %v1893
    %2849 = vmatpush2.bf16.msra.mxu0 %v1892
    %2850 = vmatprep.subr.bf16.mxu0 %v1885
    %2851 = vmatpush2.bf16.msra.mxu0 %v1884
    %2852 = vmatprep.subr.bf16.mxu0 %v1877
    %2853 = vmatpush2.bf16.msra.mxu0 %v1876
    %2854 = vmatprep.mubr.bf16.mxu0 %v225
    %2855 = vmatmul.mubr.bf16.gmra.mxu0 %v224
    %v2856 = vpop.f32.mrf.mxu0
    %v2857 = vadd.f32 %v635, %v2856
    %v2858 = vpop.f32.mrf.mxu0
    %v2859 = vadd.f32 %v639, %v2858
    %v2860 = vpop.f32.mrf.mxu0
    %v2861 = vpop.f32.mrf.mxu0
    %2862 = vdwg.mxu0
    %2863 = vmatprep.subr.bf16.mxu0 %v1997
    %2864 = vmatpush1.bf16.msra.mxu0 %v1996
    %2865 = vmatprep.subr.bf16.mxu0 %v1989
    %2866 = vmatpush1.bf16.msra.mxu0 %v1988
    %2867 = vmatprep.subr.bf16.mxu0 %v1981
    %2868 = vmatpush1.bf16.msra.mxu0 %v1980
    %2869 = vmatprep.subr.bf16.mxu0 %v1973
    %2870 = vmatpush1.bf16.msra.mxu0 %v1972
    %2871 = vmatprep.subr.bf16.mxu0 %v1965
    %2872 = vmatpush1.bf16.msra.mxu0 %v1964
    %2873 = vmatprep.subr.bf16.mxu0 %v1957
    %2874 = vmatpush1.bf16.msra.mxu0 %v1956
    %2875 = vmatprep.subr.bf16.mxu0 %v1949
    %2876 = vmatpush1.bf16.msra.mxu0 %v1948
    %2877 = vmatprep.subr.bf16.mxu0 %v1941
    %2878 = vmatpush1.bf16.msra.mxu0 %v1940
    %2879 = vmatprep.subr.bf16.mxu0 %v2061
    %2880 = vmatpush2.bf16.msra.mxu0 %v2060
    %2881 = vmatprep.subr.bf16.mxu0 %v2053
    %2882 = vmatpush2.bf16.msra.mxu0 %v2052
    %2883 = vmatprep.subr.bf16.mxu0 %v2045
    %2884 = vmatpush2.bf16.msra.mxu0 %v2044
    %2885 = vmatprep.subr.bf16.mxu0 %v2037
    %2886 = vmatpush2.bf16.msra.mxu0 %v2036
    %2887 = vmatprep.subr.bf16.mxu0 %v2029
    %2888 = vmatpush2.bf16.msra.mxu0 %v2028
    %2889 = vmatprep.subr.bf16.mxu0 %v2021
    %2890 = vmatpush2.bf16.msra.mxu0 %v2020
    %2891 = vmatprep.subr.bf16.mxu0 %v2013
    %2892 = vmatpush2.bf16.msra.mxu0 %v2012
    %2893 = vmatprep.subr.bf16.mxu0 %v2005
    %2894 = vmatpush2.bf16.msra.mxu0 %v2004
    %2895 = vmatprep.mubr.bf16.mxu0 %v227
    %2896 = vmatmul.mubr.bf16.gmra.mxu0 %v226
    %v2897 = vpop.f32.mrf.mxu0
    %v2898 = vadd.f32 %v2857, %v2897
    %v2899 = vpop.f32.mrf.mxu0
    %v2900 = vadd.f32 %v2859, %v2899
    %v2901 = vpop.f32.mrf.mxu0
    %v2902 = vpop.f32.mrf.mxu0
    %2903 = vdwg.mxu0
    %2904 = vmatprep.subr.bf16.mxu0 %v2125
    %2905 = vmatpush1.bf16.msra.mxu0 %v2124
    %2906 = vmatprep.subr.bf16.mxu0 %v2117
    %2907 = vmatpush1.bf16.msra.mxu0 %v2116
    %2908 = vmatprep.subr.bf16.mxu0 %v2109
    %2909 = vmatpush1.bf16.msra.mxu0 %v2108
    %2910 = vmatprep.subr.bf16.mxu0 %v2101
    %2911 = vmatpush1.bf16.msra.mxu0 %v2100
    %2912 = vmatprep.subr.bf16.mxu0 %v2093
    %2913 = vmatpush1.bf16.msra.mxu0 %v2092
    %2914 = vmatprep.subr.bf16.mxu0 %v2085
    %2915 = vmatpush1.bf16.msra.mxu0 %v2084
    %2916 = vmatprep.subr.bf16.mxu0 %v2077
    %2917 = vmatpush1.bf16.msra.mxu0 %v2076
    %2918 = vmatprep.subr.bf16.mxu0 %v2069
    %2919 = vmatpush1.bf16.msra.mxu0 %v2068
    %2920 = vmatprep.subr.bf16.mxu0 %v2189
    %2921 = vmatpush2.bf16.msra.mxu0 %v2188
    %2922 = vmatprep.subr.bf16.mxu0 %v2181
    %2923 = vmatpush2.bf16.msra.mxu0 %v2180
    %2924 = vmatprep.subr.bf16.mxu0 %v2173
    %2925 = vmatpush2.bf16.msra.mxu0 %v2172
    %2926 = vmatprep.subr.bf16.mxu0 %v2165
    %2927 = vmatpush2.bf16.msra.mxu0 %v2164
    %2928 = vmatprep.subr.bf16.mxu0 %v2157
    %2929 = vmatpush2.bf16.msra.mxu0 %v2156
    %2930 = vmatprep.subr.bf16.mxu0 %v2149
    %2931 = vmatpush2.bf16.msra.mxu0 %v2148
    %2932 = vmatprep.subr.bf16.mxu0 %v2141
    %2933 = vmatpush2.bf16.msra.mxu0 %v2140
    %2934 = vmatprep.subr.bf16.mxu0 %v2133
    %2935 = vmatpush2.bf16.msra.mxu0 %v2132
    %2936 = vmatprep.mubr.bf16.mxu0 %v229
    %2937 = vmatmul.mubr.bf16.gmra.mxu0 %v228
    %v2938 = vpop.f32.mrf.mxu0
    %v2939 = vadd.f32 %v2898, %v2938
    %v2940 = vpop.f32.mrf.mxu0
    %v2941 = vadd.f32 %v2900, %v2940
    %v2942 = vpop.f32.mrf.mxu0
    %v2943 = vpop.f32.mrf.mxu0
    %2944 = vdwg.mxu0
    %2945 = vmatprep.subr.bf16.mxu0 %v1871
    %2946 = vmatpush1.bf16.msra.mxu0 %v1870
    %2947 = vmatprep.subr.bf16.mxu0 %v1863
    %2948 = vmatpush1.bf16.msra.mxu0 %v1862
    %2949 = vmatprep.subr.bf16.mxu0 %v1855
    %2950 = vmatpush1.bf16.msra.mxu0 %v1854
    %2951 = vmatprep.subr.bf16.mxu0 %v1847
    %2952 = vmatpush1.bf16.msra.mxu0 %v1846
    %2953 = vmatprep.subr.bf16.mxu0 %v1839
    %2954 = vmatpush1.bf16.msra.mxu0 %v1838
    %2955 = vmatprep.subr.bf16.mxu0 %v1831
    %2956 = vmatpush1.bf16.msra.mxu0 %v1830
    %2957 = vmatprep.subr.bf16.mxu0 %v1823
    %2958 = vmatpush1.bf16.msra.mxu0 %v1822
    %2959 = vmatprep.subr.bf16.mxu0 %v1815
    %2960 = vmatpush1.bf16.msra.mxu0 %v1814
    %2961 = vmatprep.subr.bf16.mxu0 %v1935
    %2962 = vmatpush2.bf16.msra.mxu0 %v1934
    %2963 = vmatprep.subr.bf16.mxu0 %v1927
    %2964 = vmatpush2.bf16.msra.mxu0 %v1926
    %2965 = vmatprep.subr.bf16.mxu0 %v1919
    %2966 = vmatpush2.bf16.msra.mxu0 %v1918
    %2967 = vmatprep.subr.bf16.mxu0 %v1911
    %2968 = vmatpush2.bf16.msra.mxu0 %v1910
    %2969 = vmatprep.subr.bf16.mxu0 %v1903
    %2970 = vmatpush2.bf16.msra.mxu0 %v1902
    %2971 = vmatprep.subr.bf16.mxu0 %v1895
    %2972 = vmatpush2.bf16.msra.mxu0 %v1894
    %2973 = vmatprep.subr.bf16.mxu0 %v1887
    %2974 = vmatpush2.bf16.msra.mxu0 %v1886
    %2975 = vmatprep.subr.bf16.mxu0 %v1879
    %2976 = vmatpush2.bf16.msra.mxu0 %v1878
    %2977 = vmatprep.mubr.bf16.mxu0 %v225
    %2978 = vmatmul.mubr.bf16.gmra.mxu0 %v224
    %v2979 = vpop.f32.mrf.mxu0
    %v2980 = vadd.f32 %v643, %v2979
    %v2981 = vpop.f32.mrf.mxu0
    %v2982 = vadd.f32 %v647, %v2981
    %v2983 = vpop.f32.mrf.mxu0
    %v2984 = vpop.f32.mrf.mxu0
    %2985 = vdwg.mxu0
    %2986 = vmatprep.subr.bf16.mxu0 %v1999
    %2987 = vmatpush1.bf16.msra.mxu0 %v1998
    %2988 = vmatprep.subr.bf16.mxu0 %v1991
    %2989 = vmatpush1.bf16.msra.mxu0 %v1990
    %2990 = vmatprep.subr.bf16.mxu0 %v1983
    %2991 = vmatpush1.bf16.msra.mxu0 %v1982
    %2992 = vmatprep.subr.bf16.mxu0 %v1975
    %2993 = vmatpush1.bf16.msra.mxu0 %v1974
    %2994 = vmatprep.subr.bf16.mxu0 %v1967
    %2995 = vmatpush1.bf16.msra.mxu0 %v1966
    %2996 = vmatprep.subr.bf16.mxu0 %v1959
    %2997 = vmatpush1.bf16.msra.mxu0 %v1958
    %2998 = vmatprep.subr.bf16.mxu0 %v1951
    %2999 = vmatpush1.bf16.msra.mxu0 %v1950
    %3000 = vmatprep.subr.bf16.mxu0 %v1943
    %3001 = vmatpush1.bf16.msra.mxu0 %v1942
    %3002 = vmatprep.subr.bf16.mxu0 %v2063
    %3003 = vmatpush2.bf16.msra.mxu0 %v2062
    %3004 = vmatprep.subr.bf16.mxu0 %v2055
    %3005 = vmatpush2.bf16.msra.mxu0 %v2054
    %3006 = vmatprep.subr.bf16.mxu0 %v2047
    %3007 = vmatpush2.bf16.msra.mxu0 %v2046
    %3008 = vmatprep.subr.bf16.mxu0 %v2039
    %3009 = vmatpush2.bf16.msra.mxu0 %v2038
    %3010 = vmatprep.subr.bf16.mxu0 %v2031
    %3011 = vmatpush2.bf16.msra.mxu0 %v2030
    %3012 = vmatprep.subr.bf16.mxu0 %v2023
    %3013 = vmatpush2.bf16.msra.mxu0 %v2022
    %3014 = vmatprep.subr.bf16.mxu0 %v2015
    %3015 = vmatpush2.bf16.msra.mxu0 %v2014
    %3016 = vmatprep.subr.bf16.mxu0 %v2007
    %3017 = vmatpush2.bf16.msra.mxu0 %v2006
    %3018 = vmatprep.mubr.bf16.mxu0 %v227
    %3019 = vmatmul.mubr.bf16.gmra.mxu0 %v226
    %v3020 = vpop.f32.mrf.mxu0
    %v3021 = vadd.f32 %v2980, %v3020
    %v3022 = vpop.f32.mrf.mxu0
    %v3023 = vadd.f32 %v2982, %v3022
    %v3024 = vpop.f32.mrf.mxu0
    %v3025 = vpop.f32.mrf.mxu0
    %3026 = vdwg.mxu0
    %3027 = vmatprep.subr.bf16.mxu0 %v2127
    %3028 = vmatpush1.bf16.msra.mxu0 %v2126
    %3029 = vmatprep.subr.bf16.mxu0 %v2119
    %3030 = vmatpush1.bf16.msra.mxu0 %v2118
    %3031 = vmatprep.subr.bf16.mxu0 %v2111
    %3032 = vmatpush1.bf16.msra.mxu0 %v2110
    %3033 = vmatprep.subr.bf16.mxu0 %v2103
    %3034 = vmatpush1.bf16.msra.mxu0 %v2102
    %3035 = vmatprep.subr.bf16.mxu0 %v2095
    %3036 = vmatpush1.bf16.msra.mxu0 %v2094
    %3037 = vmatprep.subr.bf16.mxu0 %v2087
    %3038 = vmatpush1.bf16.msra.mxu0 %v2086
    %3039 = vmatprep.subr.bf16.mxu0 %v2079
    %3040 = vmatpush1.bf16.msra.mxu0 %v2078
    %3041 = vmatprep.subr.bf16.mxu0 %v2071
    %3042 = vmatpush1.bf16.msra.mxu0 %v2070
    %3043 = vmatprep.subr.bf16.mxu0 %v2191
    %3044 = vmatpush2.bf16.msra.mxu0 %v2190
    %3045 = vmatprep.subr.bf16.mxu0 %v2183
    %3046 = vmatpush2.bf16.msra.mxu0 %v2182
    %3047 = vmatprep.subr.bf16.mxu0 %v2175
    %3048 = vmatpush2.bf16.msra.mxu0 %v2174
    %3049 = vmatprep.subr.bf16.mxu0 %v2167
    %3050 = vmatpush2.bf16.msra.mxu0 %v2166
    %3051 = vmatprep.subr.bf16.mxu0 %v2159
    %3052 = vmatpush2.bf16.msra.mxu0 %v2158
    %3053 = vmatprep.subr.bf16.mxu0 %v2151
    %3054 = vmatpush2.bf16.msra.mxu0 %v2150
    %3055 = vmatprep.subr.bf16.mxu0 %v2143
    %3056 = vmatpush2.bf16.msra.mxu0 %v2142
    %3057 = vmatprep.subr.bf16.mxu0 %v2135
    %3058 = vmatpush2.bf16.msra.mxu0 %v2134
    %3059 = vmatprep.mubr.bf16.mxu0 %v229
    %3060 = vmatmul.mubr.bf16.gmra.mxu0 %v228
    %v3061 = vpop.f32.mrf.mxu0
    %v3062 = vadd.f32 %v3021, %v3061
    %v3063 = vpop.f32.mrf.mxu0
    %v3064 = vadd.f32 %v3023, %v3063
    %v3065 = vpop.f32.mrf.mxu0
    %v3066 = vpop.f32.mrf.mxu0
    %3067 = vdwg.mxu0
    %v3068 = vmax.f32 %v2693, 0.0
    %v3069 = vmax.f32 %v2695, 0.0
    %v3070 = vmax.f32 %v2816, 0.0
    %v3071 = vmax.f32 %v2818, 0.0
    %v3072 = vmax.f32 %v2939, 0.0
    %v3073 = vmax.f32 %v2941, 0.0
    %v3074 = vmax.f32 %v3062, 0.0
    %v3075 = vmax.f32 %v3064, 0.0
    %v3076 = vpack.c.bf16 %v3068, %v3068
    %v3077 = vpack.c.bf16 %v3069, %v3069
    %v3078 = vpack.c.bf16 %v3070, %v3070
    %v3079 = vpack.c.bf16 %v3071, %v3071
    %v3080 = vpack.c.bf16 %v3072, %v3072
    %v3081 = vpack.c.bf16 %v3073, %v3073
    %v3082 = vpack.c.bf16 %v3074, %v3074
    %v3083 = vpack.c.bf16 %v3075, %v3075
    %v3084 = vld [vmem:[#allocation8] sm:$0xff]
    %v3085 = vld [vmem:[#allocation8 + $0x8] sm:$0xf]
    %v3086 = vld [vmem:[#allocation8 + $0xc] sm:$0xff]
    %v3087 = vld [vmem:[#allocation8 + $0x14] sm:$0xf]
    %v3088 = vld [vmem:[#allocation8 + $0x18] sm:$0xff]
    %v3089 = vld [vmem:[#allocation8 + $0x20] sm:$0xf]
    %v3090 = vld [vmem:[#allocation8 + $0x24] sm:$0xff]
    %v3091 = vld [vmem:[#allocation8 + $0x2c] sm:$0xf]
    %v3092 = vld [vmem:[#allocation8 + $0x30] sm:$0xff]
    %v3093 = vld [vmem:[#allocation8 + $0x38] sm:$0xf]
    %v3094 = vld [vmem:[#allocation8 + $0x3c] sm:$0xff]
    %v3095 = vld [vmem:[#allocation8 + $0x44] sm:$0xf]
    %v3096 = vld [vmem:[#allocation8 + $0x48] sm:$0xff]
    %v3097 = vld [vmem:[#allocation8 + $0x50] sm:$0xf]
    %v3098 = vld [vmem:[#allocation8 + $0x54] sm:$0xff]
    %v3099 = vld [vmem:[#allocation8 + $0x5c] sm:$0xf]
    %v3100 = vld [vmem:[#allocation8 + $0x60] sm:$0xff]
    %v3101 = vld [vmem:[#allocation8 + $0x68] sm:$0xf]
    %v3102 = vld [vmem:[#allocation8 + $0x6c] sm:$0xff]
    %v3103 = vld [vmem:[#allocation8 + $0x74] sm:$0xf]
    %v3104 = vld [vmem:[#allocation8 + $0x78] sm:$0xff]
    %v3105 = vld [vmem:[#allocation8 + $0x80] sm:$0xf]
    %v3106 = vld [vmem:[#allocation8 + $0x84] sm:$0xff]
    %v3107 = vld [vmem:[#allocation8 + $0x8c] sm:$0xf]
    %v3108 = vld [vmem:[#allocation8 + $0x90] sm:$0xff]
    %v3109 = vld [vmem:[#allocation8 + $0x98] sm:$0xf]
    %v3110 = vld [vmem:[#allocation8 + $0x9c] sm:$0xff]
    %v3111 = vld [vmem:[#allocation8 + $0xa4] sm:$0xf]
    %v3112 = vld [vmem:[#allocation8 + $0xa8] sm:$0xff]
    %v3113 = vld [vmem:[#allocation8 + $0xb0] sm:$0xf]
    %v3114 = vld [vmem:[#allocation8 + $0xb4] sm:$0xff]
    %v3115 = vld [vmem:[#allocation8 + $0xbc] sm:$0xf]
    %v3116 = vld [vmem:[#allocation8 + $0xc0] sm:$0xff]
    %v3117 = vld [vmem:[#allocation8 + $0xc8] sm:$0xf]
    %v3118 = vld [vmem:[#allocation8 + $0xcc] sm:$0xff]
    %v3119 = vld [vmem:[#allocation8 + $0xd4] sm:$0xf]
    %v3120 = vld [vmem:[#allocation8 + $0xd8] sm:$0xff]
    %v3121 = vld [vmem:[#allocation8 + $0xe0] sm:$0xf]
    %v3122 = vld [vmem:[#allocation8 + $0xe4] sm:$0xff]
    %v3123 = vld [vmem:[#allocation8 + $0xec] sm:$0xf]
    %v3124 = vld [vmem:[#allocation8 + $0xf0] sm:$0xff]
    %v3125 = vld [vmem:[#allocation8 + $0xf8] sm:$0xf]
    %v3126 = vld [vmem:[#allocation8 + $0xfc] sm:$0xff]
    %v3127 = vld [vmem:[#allocation8 + $0x104] sm:$0xf]
    %v3128 = vld [vmem:[#allocation8 + $0x108] sm:$0xff]
    %v3129 = vld [vmem:[#allocation8 + $0x110] sm:$0xf]
    %v3130 = vld [vmem:[#allocation8 + $0x114] sm:$0xff]
    %v3131 = vld [vmem:[#allocation8 + $0x11c] sm:$0xf]
    %v3132 = vld [vmem:[#allocation8 + $0x120] sm:$0xff]
    %v3133 = vld [vmem:[#allocation8 + $0x128] sm:$0xf]
    %v3134 = vld [vmem:[#allocation8 + $0x12c] sm:$0xff]
    %v3135 = vld [vmem:[#allocation8 + $0x134] sm:$0xf]
    %v3136 = vld [vmem:[#allocation8 + $0x138] sm:$0xff]
    %v3137 = vld [vmem:[#allocation8 + $0x140] sm:$0xf]
    %v3138 = vld [vmem:[#allocation8 + $0x144] sm:$0xff]
    %v3139 = vld [vmem:[#allocation8 + $0x14c] sm:$0xf]
    %v3140 = vld [vmem:[#allocation8 + $0x150] sm:$0xff]
    %v3141 = vld [vmem:[#allocation8 + $0x158] sm:$0xf]
    %v3142 = vld [vmem:[#allocation8 + $0x15c] sm:$0xff]
    %v3143 = vld [vmem:[#allocation8 + $0x164] sm:$0xf]
    %v3144 = vld [vmem:[#allocation8 + $0x168] sm:$0xff]
    %v3145 = vld [vmem:[#allocation8 + $0x170] sm:$0xf]
    %v3146 = vld [vmem:[#allocation8 + $0x174] sm:$0xff]
    %v3147 = vld [vmem:[#allocation8 + $0x17c] sm:$0xf]
    %v3148 = vld [vmem:[#allocation8 + $0x180] sm:$0xff]
    %v3149 = vld [vmem:[#allocation8 + $0x188] sm:$0xf]
    %v3150 = vld [vmem:[#allocation8 + $0x18c] sm:$0xff]
    %v3151 = vld [vmem:[#allocation8 + $0x194] sm:$0xf]
    %v3152 = vld [vmem:[#allocation8 + $0x198] sm:$0xff]
    %v3153 = vld [vmem:[#allocation8 + $0x1a0] sm:$0xf]
    %v3154 = vld [vmem:[#allocation8 + $0x1a4] sm:$0xff]
    %v3155 = vld [vmem:[#allocation8 + $0x1ac] sm:$0xf]
    %v3156 = vld [vmem:[#allocation8 + $0x1b0] sm:$0xff]
    %v3157 = vld [vmem:[#allocation8 + $0x1b8] sm:$0xf]
    %v3158 = vld [vmem:[#allocation8 + $0x1bc] sm:$0xff]
    %v3159 = vld [vmem:[#allocation8 + $0x1c4] sm:$0xf]
    %v3160 = vld [vmem:[#allocation8 + $0x1c8] sm:$0xff]
    %v3161 = vld [vmem:[#allocation8 + $0x1d0] sm:$0xf]
    %v3162 = vld [vmem:[#allocation8 + $0x1d4] sm:$0xff]
    %v3163 = vld [vmem:[#allocation8 + $0x1dc] sm:$0xf]
    %v3164 = vld [vmem:[#allocation8 + $0x1e0] sm:$0xff]
    %v3165 = vld [vmem:[#allocation8 + $0x1e8] sm:$0xf]
    %v3166 = vld [vmem:[#allocation8 + $0x1ec] sm:$0xff]
    %v3167 = vld [vmem:[#allocation8 + $0x1f4] sm:$0xf]
    %v3168 = vld [vmem:[#allocation8 + $0x1f8] sm:$0xff]
    %v3169 = vld [vmem:[#allocation8 + $0x200] sm:$0xf]
    %v3170 = vld [vmem:[#allocation8 + $0x204] sm:$0xff]
    %v3171 = vld [vmem:[#allocation8 + $0x20c] sm:$0xf]
    %v3172 = vld [vmem:[#allocation8 + $0x210] sm:$0xff]
    %v3173 = vld [vmem:[#allocation8 + $0x218] sm:$0xf]
    %v3174 = vld [vmem:[#allocation8 + $0x21c] sm:$0xff]
    %v3175 = vld [vmem:[#allocation8 + $0x224] sm:$0xf]
    %v3176 = vld [vmem:[#allocation8 + $0x228] sm:$0xff]
    %v3177 = vld [vmem:[#allocation8 + $0x230] sm:$0xf]
    %v3178 = vld [vmem:[#allocation8 + $0x234] sm:$0xff]
    %v3179 = vld [vmem:[#allocation8 + $0x23c] sm:$0xf]
    %v3180 = vld [vmem:[#allocation8 + $0x240] sm:$0xff]
    %v3181 = vld [vmem:[#allocation8 + $0x248] sm:$0xf]
    %v3182 = vld [vmem:[#allocation8 + $0x24c] sm:$0xff]
    %v3183 = vld [vmem:[#allocation8 + $0x254] sm:$0xf]
    %v3184 = vld [vmem:[#allocation8 + $0x258] sm:$0xff]
    %v3185 = vld [vmem:[#allocation8 + $0x260] sm:$0xf]
    %v3186 = vld [vmem:[#allocation8 + $0x264] sm:$0xff]
    %v3187 = vld [vmem:[#allocation8 + $0x26c] sm:$0xf]
    %v3188 = vld [vmem:[#allocation8 + $0x270] sm:$0xff]
    %v3189 = vld [vmem:[#allocation8 + $0x278] sm:$0xf]
    %v3190 = vld [vmem:[#allocation8 + $0x27c] sm:$0xff]
    %v3191 = vld [vmem:[#allocation8 + $0x284] sm:$0xf]
    %v3192 = vld [vmem:[#allocation8 + $0x288] sm:$0xff]
    %v3193 = vld [vmem:[#allocation8 + $0x290] sm:$0xf]
    %v3194 = vld [vmem:[#allocation8 + $0x294] sm:$0xff]
    %v3195 = vld [vmem:[#allocation8 + $0x29c] sm:$0xf]
    %v3196 = vld [vmem:[#allocation8 + $0x2a0] sm:$0xff]
    %v3197 = vld [vmem:[#allocation8 + $0x2a8] sm:$0xf]
    %v3198 = vld [vmem:[#allocation8 + $0x2ac] sm:$0xff]
    %v3199 = vld [vmem:[#allocation8 + $0x2b4] sm:$0xf]
    %v3200 = vld [vmem:[#allocation8 + $0x2b8] sm:$0xff]
    %v3201 = vld [vmem:[#allocation8 + $0x2c0] sm:$0xf]
    %v3202 = vld [vmem:[#allocation8 + $0x2c4] sm:$0xff]
    %v3203 = vld [vmem:[#allocation8 + $0x2cc] sm:$0xf]
    %v3204 = vld [vmem:[#allocation8 + $0x2d0] sm:$0xff]
    %v3205 = vld [vmem:[#allocation8 + $0x2d8] sm:$0xf]
    %v3206 = vld [vmem:[#allocation8 + $0x2dc] sm:$0xff]
    %v3207 = vld [vmem:[#allocation8 + $0x2e4] sm:$0xf]
    %v3208 = vld [vmem:[#allocation8 + $0x2e8] sm:$0xff]
    %v3209 = vld [vmem:[#allocation8 + $0x2f0] sm:$0xf]
    %v3210 = vld [vmem:[#allocation8 + $0x2f4] sm:$0xff]
    %v3211 = vld [vmem:[#allocation8 + $0x2fc] sm:$0xf]
    %v3212 = vld [vmem:[#allocation8 + $0x300] sm:$0xff]
    %v3213 = vld [vmem:[#allocation8 + $0x308] sm:$0xf]
    %v3214 = vld [vmem:[#allocation8 + $0x30c] sm:$0xff]
    %v3215 = vld [vmem:[#allocation8 + $0x314] sm:$0xf]
    %v3216 = vld [vmem:[#allocation8 + $0x318] sm:$0xff]
    %v3217 = vld [vmem:[#allocation8 + $0x320] sm:$0xf]
    %v3218 = vld [vmem:[#allocation8 + $0x324] sm:$0xff]
    %v3219 = vld [vmem:[#allocation8 + $0x32c] sm:$0xf]
    %v3220 = vld [vmem:[#allocation8 + $0x330] sm:$0xff]
    %v3221 = vld [vmem:[#allocation8 + $0x338] sm:$0xf]
    %v3222 = vld [vmem:[#allocation8 + $0x33c] sm:$0xff]
    %v3223 = vld [vmem:[#allocation8 + $0x344] sm:$0xf]
    %v3224 = vld [vmem:[#allocation8 + $0x348] sm:$0xff]
    %v3225 = vld [vmem:[#allocation8 + $0x350] sm:$0xf]
    %v3226 = vld [vmem:[#allocation8 + $0x354] sm:$0xff]
    %v3227 = vld [vmem:[#allocation8 + $0x35c] sm:$0xf]
    %v3228 = vld [vmem:[#allocation8 + $0x360] sm:$0xff]
    %v3229 = vld [vmem:[#allocation8 + $0x368] sm:$0xf]
    %v3230 = vld [vmem:[#allocation8 + $0x36c] sm:$0xff]
    %v3231 = vld [vmem:[#allocation8 + $0x374] sm:$0xf]
    %v3232 = vld [vmem:[#allocation8 + $0x378] sm:$0xff]
    %v3233 = vld [vmem:[#allocation8 + $0x380] sm:$0xf]
    %v3234 = vld [vmem:[#allocation8 + $0x384] sm:$0xff]
    %v3235 = vld [vmem:[#allocation8 + $0x38c] sm:$0xf]
    %v3236 = vld [vmem:[#allocation8 + $0x390] sm:$0xff]
    %v3237 = vld [vmem:[#allocation8 + $0x398] sm:$0xf]
    %v3238 = vld [vmem:[#allocation8 + $0x39c] sm:$0xff]
    %v3239 = vld [vmem:[#allocation8 + $0x3a4] sm:$0xf]
    %v3240 = vld [vmem:[#allocation8 + $0x3a8] sm:$0xff]
    %v3241 = vld [vmem:[#allocation8 + $0x3b0] sm:$0xf]
    %v3242 = vld [vmem:[#allocation8 + $0x3b4] sm:$0xff]
    %v3243 = vld [vmem:[#allocation8 + $0x3bc] sm:$0xf]
    %v3244 = vld [vmem:[#allocation8 + $0x3c0] sm:$0xff]
    %v3245 = vld [vmem:[#allocation8 + $0x3c8] sm:$0xf]
    %v3246 = vld [vmem:[#allocation8 + $0x3cc] sm:$0xff]
    %v3247 = vld [vmem:[#allocation8 + $0x3d4] sm:$0xf]
    %v3248 = vld [vmem:[#allocation8 + $0x3d8] sm:$0xff]
    %v3249 = vld [vmem:[#allocation8 + $0x3e0] sm:$0xf]
    %v3250 = vld [vmem:[#allocation8 + $0x3e4] sm:$0xff]
    %v3251 = vld [vmem:[#allocation8 + $0x3ec] sm:$0xf]
    %v3252 = vld [vmem:[#allocation8 + $0x3f0] sm:$0xff]
    %v3253 = vld [vmem:[#allocation8 + $0x3f8] sm:$0xf]
    %v3254 = vld [vmem:[#allocation8 + $0x3fc] sm:$0xff]
    %v3255 = vld [vmem:[#allocation8 + $0x404] sm:$0xf]
    %v3256 = vld [vmem:[#allocation8 + $0x408] sm:$0xff]
    %v3257 = vld [vmem:[#allocation8 + $0x410] sm:$0xf]
    %v3258 = vld [vmem:[#allocation8 + $0x414] sm:$0xff]
    %v3259 = vld [vmem:[#allocation8 + $0x41c] sm:$0xf]
    %v3260 = vld [vmem:[#allocation8 + $0x420] sm:$0xff]
    %v3261 = vld [vmem:[#allocation8 + $0x428] sm:$0xf]
    %v3262 = vld [vmem:[#allocation8 + $0x42c] sm:$0xff]
    %v3263 = vld [vmem:[#allocation8 + $0x434] sm:$0xf]
    %v3264 = vld [vmem:[#allocation8 + $0x438] sm:$0xff]
    %v3265 = vld [vmem:[#allocation8 + $0x440] sm:$0xf]
    %v3266 = vld [vmem:[#allocation8 + $0x444] sm:$0xff]
    %v3267 = vld [vmem:[#allocation8 + $0x44c] sm:$0xf]
    %v3268 = vld [vmem:[#allocation8 + $0x450] sm:$0xff]
    %v3269 = vld [vmem:[#allocation8 + $0x458] sm:$0xf]
    %v3270 = vld [vmem:[#allocation8 + $0x45c] sm:$0xff]
    %v3271 = vld [vmem:[#allocation8 + $0x464] sm:$0xf]
    %v3272 = vld [vmem:[#allocation8 + $0x468] sm:$0xff]
    %v3273 = vld [vmem:[#allocation8 + $0x470] sm:$0xf]
    %v3274 = vld [vmem:[#allocation8 + $0x474] sm:$0xff]
    %v3275 = vld [vmem:[#allocation8 + $0x47c] sm:$0xf]
    %v3276 = vld [vmem:[#allocation8 + $0x480] sm:$0xff]
    %v3277 = vld [vmem:[#allocation8 + $0x488] sm:$0xf]
    %v3278 = vld [vmem:[#allocation8 + $0x48c] sm:$0xff]
    %v3279 = vld [vmem:[#allocation8 + $0x494] sm:$0xf]
    %v3280 = vld [vmem:[#allocation8 + $0x498] sm:$0xff]
    %v3281 = vld [vmem:[#allocation8 + $0x4a0] sm:$0xf]
    %v3282 = vld [vmem:[#allocation8 + $0x4a4] sm:$0xff]
    %v3283 = vld [vmem:[#allocation8 + $0x4ac] sm:$0xf]
    %v3284 = vld [vmem:[#allocation8 + $0x4b0] sm:$0xff]
    %v3285 = vld [vmem:[#allocation8 + $0x4b8] sm:$0xf]
    %v3286 = vld [vmem:[#allocation8 + $0x4bc] sm:$0xff]
    %v3287 = vld [vmem:[#allocation8 + $0x4c4] sm:$0xf]
    %v3288 = vld [vmem:[#allocation8 + $0x4c8] sm:$0xff]
    %v3289 = vld [vmem:[#allocation8 + $0x4d0] sm:$0xf]
    %v3290 = vld [vmem:[#allocation8 + $0x4d4] sm:$0xff]
    %v3291 = vld [vmem:[#allocation8 + $0x4dc] sm:$0xf]
    %v3292 = vld [vmem:[#allocation8 + $0x4e0] sm:$0xff]
    %v3293 = vld [vmem:[#allocation8 + $0x4e8] sm:$0xf]
    %v3294 = vld [vmem:[#allocation8 + $0x4ec] sm:$0xff]
    %v3295 = vld [vmem:[#allocation8 + $0x4f4] sm:$0xf]
    %v3296 = vld [vmem:[#allocation8 + $0x4f8] sm:$0xff]
    %v3297 = vld [vmem:[#allocation8 + $0x500] sm:$0xf]
    %v3298 = vld [vmem:[#allocation8 + $0x504] sm:$0xff]
    %v3299 = vld [vmem:[#allocation8 + $0x50c] sm:$0xf]
    %v3300 = vld [vmem:[#allocation8 + $0x510] sm:$0xff]
    %v3301 = vld [vmem:[#allocation8 + $0x518] sm:$0xf]
    %v3302 = vld [vmem:[#allocation8 + $0x51c] sm:$0xff]
    %v3303 = vld [vmem:[#allocation8 + $0x524] sm:$0xf]
    %v3304 = vld [vmem:[#allocation8 + $0x528] sm:$0xff]
    %v3305 = vld [vmem:[#allocation8 + $0x530] sm:$0xf]
    %v3306 = vld [vmem:[#allocation8 + $0x534] sm:$0xff]
    %v3307 = vld [vmem:[#allocation8 + $0x53c] sm:$0xf]
    %v3308 = vld [vmem:[#allocation8 + $0x540] sm:$0xff]
    %v3309 = vld [vmem:[#allocation8 + $0x548] sm:$0xf]
    %v3310 = vld [vmem:[#allocation8 + $0x54c] sm:$0xff]
    %v3311 = vld [vmem:[#allocation8 + $0x554] sm:$0xf]
    %v3312 = vld [vmem:[#allocation8 + $0x558] sm:$0xff]
    %v3313 = vld [vmem:[#allocation8 + $0x560] sm:$0xf]
    %v3314 = vld [vmem:[#allocation8 + $0x564] sm:$0xff]
    %v3315 = vld [vmem:[#allocation8 + $0x56c] sm:$0xf]
    %v3316 = vld [vmem:[#allocation8 + $0x570] sm:$0xff]
    %v3317 = vld [vmem:[#allocation8 + $0x578] sm:$0xf]
    %v3318 = vld [vmem:[#allocation8 + $0x57c] sm:$0xff]
    %v3319 = vld [vmem:[#allocation8 + $0x584] sm:$0xf]
    %v3320 = vld [vmem:[#allocation8 + $0x588] sm:$0xff]
    %v3321 = vld [vmem:[#allocation8 + $0x590] sm:$0xf]
    %v3322 = vld [vmem:[#allocation8 + $0x594] sm:$0xff]
    %v3323 = vld [vmem:[#allocation8 + $0x59c] sm:$0xf]
    %v3324 = vld [vmem:[#allocation8 + $0x5a0] sm:$0xff]
    %v3325 = vld [vmem:[#allocation8 + $0x5a8] sm:$0xf]
    %v3326 = vld [vmem:[#allocation8 + $0x5ac] sm:$0xff]
    %v3327 = vld [vmem:[#allocation8 + $0x5b4] sm:$0xf]
    %v3328 = vld [vmem:[#allocation8 + $0x5b8] sm:$0xff]
    %v3329 = vld [vmem:[#allocation8 + $0x5c0] sm:$0xf]
    %v3330 = vld [vmem:[#allocation8 + $0x5c4] sm:$0xff]
    %v3331 = vld [vmem:[#allocation8 + $0x5cc] sm:$0xf]
    %v3332 = vld [vmem:[#allocation8 + $0x5d0] sm:$0xff]
    %v3333 = vld [vmem:[#allocation8 + $0x5d8] sm:$0xf]
    %v3334 = vld [vmem:[#allocation8 + $0x5dc] sm:$0xff]
    %v3335 = vld [vmem:[#allocation8 + $0x5e4] sm:$0xf]
    %v3336 = vld [vmem:[#allocation8 + $0x5e8] sm:$0xff]
    %v3337 = vld [vmem:[#allocation8 + $0x5f0] sm:$0xf]
    %v3338 = vld [vmem:[#allocation8 + $0x5f4] sm:$0xff]
    %v3339 = vld [vmem:[#allocation8 + $0x5fc] sm:$0xf]
    %v3340 = vld [vmem:[#allocation10] sm:$0x7]
    %v3342 = vlaneseq
    %v3343 = vshrl.u32 %v3342, 7
    %v3344 = vsub.s32 0, %v3343
    %v3345 = vrot.slane %v3340, %v3344
    %v3346 = vlaneseq
    %v3347 = vshrl.u32 %v3346, 7
    %v3348 = vsub.s32 1, %v3347
    %v3349 = vrot.slane %v3340, %v3348
    %v3350 = vlaneseq
    %v3351 = vshrl.u32 %v3350, 7
    %v3352 = vsub.s32 2, %v3351
    %v3353 = vrot.slane %v3340, %v3352
    %v3613 = vunpack.c.l.b16 %v3084
    %v3614 = vunpack.c.h.b16 %v3084
    %v3615 = vunpack.c.l.b16 %v3085
    %v3616 = vunpack.c.l.b16 %v3086
    %v3617 = vunpack.c.h.b16 %v3086
    %v3618 = vunpack.c.l.b16 %v3087
    %v3619 = vunpack.c.l.b16 %v3088
    %v3620 = vunpack.c.h.b16 %v3088
    %v3621 = vunpack.c.l.b16 %v3089
    %v3622 = vunpack.c.l.b16 %v3090
    %v3623 = vunpack.c.h.b16 %v3090
    %v3624 = vunpack.c.l.b16 %v3091
    %v3625 = vunpack.c.l.b16 %v3092
    %v3626 = vunpack.c.h.b16 %v3092
    %v3627 = vunpack.c.l.b16 %v3093
    %v3628 = vunpack.c.l.b16 %v3094
    %v3629 = vunpack.c.h.b16 %v3094
    %v3630 = vunpack.c.l.b16 %v3095
    %v3631 = vunpack.c.l.b16 %v3096
    %v3632 = vunpack.c.h.b16 %v3096
    %v3633 = vunpack.c.l.b16 %v3097
    %v3634 = vunpack.c.l.b16 %v3098
    %v3635 = vunpack.c.h.b16 %v3098
    %v3636 = vunpack.c.l.b16 %v3099
    %v3637 = vunpack.c.l.b16 %v3100
    %v3638 = vunpack.c.h.b16 %v3100
    %v3639 = vunpack.c.l.b16 %v3101
    %v3640 = vunpack.c.l.b16 %v3102
    %v3641 = vunpack.c.h.b16 %v3102
    %v3642 = vunpack.c.l.b16 %v3103
    %v3643 = vunpack.c.l.b16 %v3104
    %v3644 = vunpack.c.h.b16 %v3104
    %v3645 = vunpack.c.l.b16 %v3105
    %v3646 = vunpack.c.l.b16 %v3106
    %v3647 = vunpack.c.h.b16 %v3106
    %v3648 = vunpack.c.l.b16 %v3107
    %v3649 = vunpack.c.l.b16 %v3108
    %v3650 = vunpack.c.h.b16 %v3108
    %v3651 = vunpack.c.l.b16 %v3109
    %v3652 = vunpack.c.l.b16 %v3110
    %v3653 = vunpack.c.h.b16 %v3110
    %v3654 = vunpack.c.l.b16 %v3111
    %v3655 = vunpack.c.l.b16 %v3112
    %v3656 = vunpack.c.h.b16 %v3112
    %v3657 = vunpack.c.l.b16 %v3113
    %v3658 = vunpack.c.l.b16 %v3114
    %v3659 = vunpack.c.h.b16 %v3114
    %v3660 = vunpack.c.l.b16 %v3115
    %v3661 = vunpack.c.l.b16 %v3116
    %v3662 = vunpack.c.h.b16 %v3116
    %v3663 = vunpack.c.l.b16 %v3117
    %v3664 = vunpack.c.l.b16 %v3118
    %v3665 = vunpack.c.h.b16 %v3118
    %v3666 = vunpack.c.l.b16 %v3119
    %v3667 = vunpack.c.l.b16 %v3120
    %v3668 = vunpack.c.h.b16 %v3120
    %v3669 = vunpack.c.l.b16 %v3121
    %v3670 = vunpack.c.l.b16 %v3122
    %v3671 = vunpack.c.h.b16 %v3122
    %v3672 = vunpack.c.l.b16 %v3123
    %v3673 = vunpack.c.l.b16 %v3124
    %v3674 = vunpack.c.h.b16 %v3124
    %v3675 = vunpack.c.l.b16 %v3125
    %v3676 = vunpack.c.l.b16 %v3126
    %v3677 = vunpack.c.h.b16 %v3126
    %v3678 = vunpack.c.l.b16 %v3127
    %v3679 = vunpack.c.l.b16 %v3128
    %v3680 = vunpack.c.h.b16 %v3128
    %v3681 = vunpack.c.l.b16 %v3129
    %v3682 = vunpack.c.l.b16 %v3130
    %v3683 = vunpack.c.h.b16 %v3130
    %v3684 = vunpack.c.l.b16 %v3131
    %v3685 = vunpack.c.l.b16 %v3132
    %v3686 = vunpack.c.h.b16 %v3132
    %v3687 = vunpack.c.l.b16 %v3133
    %v3688 = vunpack.c.l.b16 %v3134
    %v3689 = vunpack.c.h.b16 %v3134
    %v3690 = vunpack.c.l.b16 %v3135
    %v3691 = vunpack.c.l.b16 %v3136
    %v3692 = vunpack.c.h.b16 %v3136
    %v3693 = vunpack.c.l.b16 %v3137
    %v3694 = vunpack.c.l.b16 %v3138
    %v3695 = vunpack.c.h.b16 %v3138
    %v3696 = vunpack.c.l.b16 %v3139
    %v3697 = vunpack.c.l.b16 %v3140
    %v3698 = vunpack.c.h.b16 %v3140
    %v3699 = vunpack.c.l.b16 %v3141
    %v3700 = vunpack.c.l.b16 %v3142
    %v3701 = vunpack.c.h.b16 %v3142
    %v3702 = vunpack.c.l.b16 %v3143
    %v3703 = vunpack.c.l.b16 %v3144
    %v3704 = vunpack.c.h.b16 %v3144
    %v3705 = vunpack.c.l.b16 %v3145
    %v3706 = vunpack.c.l.b16 %v3146
    %v3707 = vunpack.c.h.b16 %v3146
    %v3708 = vunpack.c.l.b16 %v3147
    %v3709 = vunpack.c.l.b16 %v3148
    %v3710 = vunpack.c.h.b16 %v3148
    %v3711 = vunpack.c.l.b16 %v3149
    %v3712 = vunpack.c.l.b16 %v3150
    %v3713 = vunpack.c.h.b16 %v3150
    %v3714 = vunpack.c.l.b16 %v3151
    %v3715 = vunpack.c.l.b16 %v3152
    %v3716 = vunpack.c.h.b16 %v3152
    %v3717 = vunpack.c.l.b16 %v3153
    %v3718 = vunpack.c.l.b16 %v3154
    %v3719 = vunpack.c.h.b16 %v3154
    %v3720 = vunpack.c.l.b16 %v3155
    %v3721 = vunpack.c.l.b16 %v3156
    %v3722 = vunpack.c.h.b16 %v3156
    %v3723 = vunpack.c.l.b16 %v3157
    %v3724 = vunpack.c.l.b16 %v3158
    %v3725 = vunpack.c.h.b16 %v3158
    %v3726 = vunpack.c.l.b16 %v3159
    %v3727 = vunpack.c.l.b16 %v3160
    %v3728 = vunpack.c.h.b16 %v3160
    %v3729 = vunpack.c.l.b16 %v3161
    %v3730 = vunpack.c.l.b16 %v3162
    %v3731 = vunpack.c.h.b16 %v3162
    %v3732 = vunpack.c.l.b16 %v3163
    %v3733 = vunpack.c.l.b16 %v3164
    %v3734 = vunpack.c.h.b16 %v3164
    %v3735 = vunpack.c.l.b16 %v3165
    %v3736 = vunpack.c.l.b16 %v3166
    %v3737 = vunpack.c.h.b16 %v3166
    %v3738 = vunpack.c.l.b16 %v3167
    %v3739 = vunpack.c.l.b16 %v3168
    %v3740 = vunpack.c.h.b16 %v3168
    %v3741 = vunpack.c.l.b16 %v3169
    %v3742 = vunpack.c.l.b16 %v3170
    %v3743 = vunpack.c.h.b16 %v3170
    %v3744 = vunpack.c.l.b16 %v3171
    %v3745 = vunpack.c.l.b16 %v3172
    %v3746 = vunpack.c.h.b16 %v3172
    %v3747 = vunpack.c.l.b16 %v3173
    %v3748 = vunpack.c.l.b16 %v3174
    %v3749 = vunpack.c.h.b16 %v3174
    %v3750 = vunpack.c.l.b16 %v3175
    %v3751 = vunpack.c.l.b16 %v3176
    %v3752 = vunpack.c.h.b16 %v3176
    %v3753 = vunpack.c.l.b16 %v3177
    %v3754 = vunpack.c.l.b16 %v3178
    %v3755 = vunpack.c.h.b16 %v3178
    %v3756 = vunpack.c.l.b16 %v3179
    %v3757 = vunpack.c.l.b16 %v3180
    %v3758 = vunpack.c.h.b16 %v3180
    %v3759 = vunpack.c.l.b16 %v3181
    %v3760 = vunpack.c.l.b16 %v3182
    %v3761 = vunpack.c.h.b16 %v3182
    %v3762 = vunpack.c.l.b16 %v3183
    %v3763 = vunpack.c.l.b16 %v3184
    %v3764 = vunpack.c.h.b16 %v3184
    %v3765 = vunpack.c.l.b16 %v3185
    %v3766 = vunpack.c.l.b16 %v3186
    %v3767 = vunpack.c.h.b16 %v3186
    %v3768 = vunpack.c.l.b16 %v3187
    %v3769 = vunpack.c.l.b16 %v3188
    %v3770 = vunpack.c.h.b16 %v3188
    %v3771 = vunpack.c.l.b16 %v3189
    %v3772 = vunpack.c.l.b16 %v3190
    %v3773 = vunpack.c.h.b16 %v3190
    %v3774 = vunpack.c.l.b16 %v3191
    %v3775 = vunpack.c.l.b16 %v3192
    %v3776 = vunpack.c.h.b16 %v3192
    %v3777 = vunpack.c.l.b16 %v3193
    %v3778 = vunpack.c.l.b16 %v3194
    %v3779 = vunpack.c.h.b16 %v3194
    %v3780 = vunpack.c.l.b16 %v3195
    %v3781 = vunpack.c.l.b16 %v3196
    %v3782 = vunpack.c.h.b16 %v3196
    %v3783 = vunpack.c.l.b16 %v3197
    %v3784 = vunpack.c.l.b16 %v3198
    %v3785 = vunpack.c.h.b16 %v3198
    %v3786 = vunpack.c.l.b16 %v3199
    %v3787 = vunpack.c.l.b16 %v3200
    %v3788 = vunpack.c.h.b16 %v3200
    %v3789 = vunpack.c.l.b16 %v3201
    %v3790 = vunpack.c.l.b16 %v3202
    %v3791 = vunpack.c.h.b16 %v3202
    %v3792 = vunpack.c.l.b16 %v3203
    %v3793 = vunpack.c.l.b16 %v3204
    %v3794 = vunpack.c.h.b16 %v3204
    %v3795 = vunpack.c.l.b16 %v3205
    %v3796 = vunpack.c.l.b16 %v3206
    %v3797 = vunpack.c.h.b16 %v3206
    %v3798 = vunpack.c.l.b16 %v3207
    %v3799 = vunpack.c.l.b16 %v3208
    %v3800 = vunpack.c.h.b16 %v3208
    %v3801 = vunpack.c.l.b16 %v3209
    %v3802 = vunpack.c.l.b16 %v3210
    %v3803 = vunpack.c.h.b16 %v3210
    %v3804 = vunpack.c.l.b16 %v3211
    %v3805 = vunpack.c.l.b16 %v3212
    %v3806 = vunpack.c.h.b16 %v3212
    %v3807 = vunpack.c.l.b16 %v3213
    %v3808 = vunpack.c.l.b16 %v3214
    %v3809 = vunpack.c.h.b16 %v3214
    %v3810 = vunpack.c.l.b16 %v3215
    %v3811 = vunpack.c.l.b16 %v3216
    %v3812 = vunpack.c.h.b16 %v3216
    %v3813 = vunpack.c.l.b16 %v3217
    %v3814 = vunpack.c.l.b16 %v3218
    %v3815 = vunpack.c.h.b16 %v3218
    %v3816 = vunpack.c.l.b16 %v3219
    %v3817 = vunpack.c.l.b16 %v3220
    %v3818 = vunpack.c.h.b16 %v3220
    %v3819 = vunpack.c.l.b16 %v3221
    %v3820 = vunpack.c.l.b16 %v3222
    %v3821 = vunpack.c.h.b16 %v3222
    %v3822 = vunpack.c.l.b16 %v3223
    %v3823 = vunpack.c.l.b16 %v3224
    %v3824 = vunpack.c.h.b16 %v3224
    %v3825 = vunpack.c.l.b16 %v3225
    %v3826 = vunpack.c.l.b16 %v3226
    %v3827 = vunpack.c.h.b16 %v3226
    %v3828 = vunpack.c.l.b16 %v3227
    %v3829 = vunpack.c.l.b16 %v3228
    %v3830 = vunpack.c.h.b16 %v3228
    %v3831 = vunpack.c.l.b16 %v3229
    %v3832 = vunpack.c.l.b16 %v3230
    %v3833 = vunpack.c.h.b16 %v3230
    %v3834 = vunpack.c.l.b16 %v3231
    %v3835 = vunpack.c.l.b16 %v3232
    %v3836 = vunpack.c.h.b16 %v3232
    %v3837 = vunpack.c.l.b16 %v3233
    %v3838 = vunpack.c.l.b16 %v3234
    %v3839 = vunpack.c.h.b16 %v3234
    %v3840 = vunpack.c.l.b16 %v3235
    %v3841 = vunpack.c.l.b16 %v3236
    %v3842 = vunpack.c.h.b16 %v3236
    %v3843 = vunpack.c.l.b16 %v3237
    %v3844 = vunpack.c.l.b16 %v3238
    %v3845 = vunpack.c.h.b16 %v3238
    %v3846 = vunpack.c.l.b16 %v3239
    %v3847 = vunpack.c.l.b16 %v3240
    %v3848 = vunpack.c.h.b16 %v3240
    %v3849 = vunpack.c.l.b16 %v3241
    %v3850 = vunpack.c.l.b16 %v3242
    %v3851 = vunpack.c.h.b16 %v3242
    %v3852 = vunpack.c.l.b16 %v3243
    %v3853 = vunpack.c.l.b16 %v3244
    %v3854 = vunpack.c.h.b16 %v3244
    %v3855 = vunpack.c.l.b16 %v3245
    %v3856 = vunpack.c.l.b16 %v3246
    %v3857 = vunpack.c.h.b16 %v3246
    %v3858 = vunpack.c.l.b16 %v3247
    %v3859 = vunpack.c.l.b16 %v3248
    %v3860 = vunpack.c.h.b16 %v3248
    %v3861 = vunpack.c.l.b16 %v3249
    %v3862 = vunpack.c.l.b16 %v3250
    %v3863 = vunpack.c.h.b16 %v3250
    %v3864 = vunpack.c.l.b16 %v3251
    %v3865 = vunpack.c.l.b16 %v3252
    %v3866 = vunpack.c.h.b16 %v3252
    %v3867 = vunpack.c.l.b16 %v3253
    %v3868 = vunpack.c.l.b16 %v3254
    %v3869 = vunpack.c.h.b16 %v3254
    %v3870 = vunpack.c.l.b16 %v3255
    %v3871 = vunpack.c.l.b16 %v3256
    %v3872 = vunpack.c.h.b16 %v3256
    %v3873 = vunpack.c.l.b16 %v3257
    %v3874 = vunpack.c.l.b16 %v3258
    %v3875 = vunpack.c.h.b16 %v3258
    %v3876 = vunpack.c.l.b16 %v3259
    %v3877 = vunpack.c.l.b16 %v3260
    %v3878 = vunpack.c.h.b16 %v3260
    %v3879 = vunpack.c.l.b16 %v3261
    %v3880 = vunpack.c.l.b16 %v3262
    %v3881 = vunpack.c.h.b16 %v3262
    %v3882 = vunpack.c.l.b16 %v3263
    %v3883 = vunpack.c.l.b16 %v3264
    %v3884 = vunpack.c.h.b16 %v3264
    %v3885 = vunpack.c.l.b16 %v3265
    %v3886 = vunpack.c.l.b16 %v3266
    %v3887 = vunpack.c.h.b16 %v3266
    %v3888 = vunpack.c.l.b16 %v3267
    %v3889 = vunpack.c.l.b16 %v3268
    %v3890 = vunpack.c.h.b16 %v3268
    %v3891 = vunpack.c.l.b16 %v3269
    %v3892 = vunpack.c.l.b16 %v3270
    %v3893 = vunpack.c.h.b16 %v3270
    %v3894 = vunpack.c.l.b16 %v3271
    %v3895 = vunpack.c.l.b16 %v3272
    %v3896 = vunpack.c.h.b16 %v3272
    %v3897 = vunpack.c.l.b16 %v3273
    %v3898 = vunpack.c.l.b16 %v3274
    %v3899 = vunpack.c.h.b16 %v3274
    %v3900 = vunpack.c.l.b16 %v3275
    %v3901 = vunpack.c.l.b16 %v3276
    %v3902 = vunpack.c.h.b16 %v3276
    %v3903 = vunpack.c.l.b16 %v3277
    %v3904 = vunpack.c.l.b16 %v3278
    %v3905 = vunpack.c.h.b16 %v3278
    %v3906 = vunpack.c.l.b16 %v3279
    %v3907 = vunpack.c.l.b16 %v3280
    %v3908 = vunpack.c.h.b16 %v3280
    %v3909 = vunpack.c.l.b16 %v3281
    %v3910 = vunpack.c.l.b16 %v3282
    %v3911 = vunpack.c.h.b16 %v3282
    %v3912 = vunpack.c.l.b16 %v3283
    %v3913 = vunpack.c.l.b16 %v3284
    %v3914 = vunpack.c.h.b16 %v3284
    %v3915 = vunpack.c.l.b16 %v3285
    %v3916 = vunpack.c.l.b16 %v3286
    %v3917 = vunpack.c.h.b16 %v3286
    %v3918 = vunpack.c.l.b16 %v3287
    %v3919 = vunpack.c.l.b16 %v3288
    %v3920 = vunpack.c.h.b16 %v3288
    %v3921 = vunpack.c.l.b16 %v3289
    %v3922 = vunpack.c.l.b16 %v3290
    %v3923 = vunpack.c.h.b16 %v3290
    %v3924 = vunpack.c.l.b16 %v3291
    %v3925 = vunpack.c.l.b16 %v3292
    %v3926 = vunpack.c.h.b16 %v3292
    %v3927 = vunpack.c.l.b16 %v3293
    %v3928 = vunpack.c.l.b16 %v3294
    %v3929 = vunpack.c.h.b16 %v3294
    %v3930 = vunpack.c.l.b16 %v3295
    %v3931 = vunpack.c.l.b16 %v3296
    %v3932 = vunpack.c.h.b16 %v3296
    %v3933 = vunpack.c.l.b16 %v3297
    %v3934 = vunpack.c.l.b16 %v3298
    %v3935 = vunpack.c.h.b16 %v3298
    %v3936 = vunpack.c.l.b16 %v3299
    %v3937 = vunpack.c.l.b16 %v3300
    %v3938 = vunpack.c.h.b16 %v3300
    %v3939 = vunpack.c.l.b16 %v3301
    %v3940 = vunpack.c.l.b16 %v3302
    %v3941 = vunpack.c.h.b16 %v3302
    %v3942 = vunpack.c.l.b16 %v3303
    %v3943 = vunpack.c.l.b16 %v3304
    %v3944 = vunpack.c.h.b16 %v3304
    %v3945 = vunpack.c.l.b16 %v3305
    %v3946 = vunpack.c.l.b16 %v3306
    %v3947 = vunpack.c.h.b16 %v3306
    %v3948 = vunpack.c.l.b16 %v3307
    %v3949 = vunpack.c.l.b16 %v3308
    %v3950 = vunpack.c.h.b16 %v3308
    %v3951 = vunpack.c.l.b16 %v3309
    %v3952 = vunpack.c.l.b16 %v3310
    %v3953 = vunpack.c.h.b16 %v3310
    %v3954 = vunpack.c.l.b16 %v3311
    %v3955 = vunpack.c.l.b16 %v3312
    %v3956 = vunpack.c.h.b16 %v3312
    %v3957 = vunpack.c.l.b16 %v3313
    %v3958 = vunpack.c.l.b16 %v3314
    %v3959 = vunpack.c.h.b16 %v3314
    %v3960 = vunpack.c.l.b16 %v3315
    %v3961 = vunpack.c.l.b16 %v3316
    %v3962 = vunpack.c.h.b16 %v3316
    %v3963 = vunpack.c.l.b16 %v3317
    %v3964 = vunpack.c.l.b16 %v3318
    %v3965 = vunpack.c.h.b16 %v3318
    %v3966 = vunpack.c.l.b16 %v3319
    %v3967 = vunpack.c.l.b16 %v3320
    %v3968 = vunpack.c.h.b16 %v3320
    %v3969 = vunpack.c.l.b16 %v3321
    %v3970 = vunpack.c.l.b16 %v3322
    %v3971 = vunpack.c.h.b16 %v3322
    %v3972 = vunpack.c.l.b16 %v3323
    %v3973 = vunpack.c.l.b16 %v3324
    %v3974 = vunpack.c.h.b16 %v3324
    %v3975 = vunpack.c.l.b16 %v3325
    %v3976 = vunpack.c.l.b16 %v3326
    %v3977 = vunpack.c.h.b16 %v3326
    %v3978 = vunpack.c.l.b16 %v3327
    %v3979 = vunpack.c.l.b16 %v3328
    %v3980 = vunpack.c.h.b16 %v3328
    %v3981 = vunpack.c.l.b16 %v3329
    %v3982 = vunpack.c.l.b16 %v3330
    %v3983 = vunpack.c.h.b16 %v3330
    %v3984 = vunpack.c.l.b16 %v3331
    %v3985 = vunpack.c.l.b16 %v3332
    %v3986 = vunpack.c.h.b16 %v3332
    %v3987 = vunpack.c.l.b16 %v3333
    %v3988 = vunpack.c.l.b16 %v3334
    %v3989 = vunpack.c.h.b16 %v3334
    %v3990 = vunpack.c.l.b16 %v3335
    %v3991 = vunpack.c.l.b16 %v3336
    %v3992 = vunpack.c.h.b16 %v3336
    %v3993 = vunpack.c.l.b16 %v3337
    %v3994 = vunpack.c.l.b16 %v3338
    %v3995 = vunpack.c.h.b16 %v3338
    %v3996 = vunpack.c.l.b16 %v3339
    %v3997 = vpack.c.b16 %v3616, %v3613
    %v3998 = vpack.c.b16 %v3617, %v3614
    %v3999 = vpack.c.b16 %v3618, %v3615
    %v4000 = vpack.c.b16 %v3622, %v3619
    %v4001 = vpack.c.b16 %v3623, %v3620
    %v4002 = vpack.c.b16 %v3624, %v3621
    %v4003 = vpack.c.b16 %v3628, %v3625
    %v4004 = vpack.c.b16 %v3629, %v3626
    %v4005 = vpack.c.b16 %v3630, %v3627
    %v4006 = vpack.c.b16 %v3634, %v3631
    %v4007 = vpack.c.b16 %v3635, %v3632
    %v4008 = vpack.c.b16 %v3636, %v3633
    %v4009 = vpack.c.b16 %v3640, %v3637
    %v4010 = vpack.c.b16 %v3641, %v3638
    %v4011 = vpack.c.b16 %v3642, %v3639
    %v4012 = vpack.c.b16 %v3646, %v3643
    %v4013 = vpack.c.b16 %v3647, %v3644
    %v4014 = vpack.c.b16 %v3648, %v3645
    %v4015 = vpack.c.b16 %v3652, %v3649
    %v4016 = vpack.c.b16 %v3653, %v3650
    %v4017 = vpack.c.b16 %v3654, %v3651
    %v4018 = vpack.c.b16 %v3658, %v3655
    %v4019 = vpack.c.b16 %v3659, %v3656
    %v4020 = vpack.c.b16 %v3660, %v3657
    %v4021 = vpack.c.b16 %v3664, %v3661
    %v4022 = vpack.c.b16 %v3665, %v3662
    %v4023 = vpack.c.b16 %v3666, %v3663
    %v4024 = vpack.c.b16 %v3670, %v3667
    %v4025 = vpack.c.b16 %v3671, %v3668
    %v4026 = vpack.c.b16 %v3672, %v3669
    %v4027 = vpack.c.b16 %v3676, %v3673
    %v4028 = vpack.c.b16 %v3677, %v3674
    %v4029 = vpack.c.b16 %v3678, %v3675
    %v4030 = vpack.c.b16 %v3682, %v3679
    %v4031 = vpack.c.b16 %v3683, %v3680
    %v4032 = vpack.c.b16 %v3684, %v3681
    %v4033 = vpack.c.b16 %v3688, %v3685
    %v4034 = vpack.c.b16 %v3689, %v3686
    %v4035 = vpack.c.b16 %v3690, %v3687
    %v4036 = vpack.c.b16 %v3694, %v3691
    %v4037 = vpack.c.b16 %v3695, %v3692
    %v4038 = vpack.c.b16 %v3696, %v3693
    %v4039 = vpack.c.b16 %v3700, %v3697
    %v4040 = vpack.c.b16 %v3701, %v3698
    %v4041 = vpack.c.b16 %v3702, %v3699
    %v4042 = vpack.c.b16 %v3706, %v3703
    %v4043 = vpack.c.b16 %v3707, %v3704
    %v4044 = vpack.c.b16 %v3708, %v3705
    %v4045 = vpack.c.b16 %v3712, %v3709
    %v4046 = vpack.c.b16 %v3713, %v3710
    %v4047 = vpack.c.b16 %v3714, %v3711
    %v4048 = vpack.c.b16 %v3718, %v3715
    %v4049 = vpack.c.b16 %v3719, %v3716
    %v4050 = vpack.c.b16 %v3720, %v3717
    %v4051 = vpack.c.b16 %v3724, %v3721
    %v4052 = vpack.c.b16 %v3725, %v3722
    %v4053 = vpack.c.b16 %v3726, %v3723
    %v4054 = vpack.c.b16 %v3730, %v3727
    %v4055 = vpack.c.b16 %v3731, %v3728
    %v4056 = vpack.c.b16 %v3732, %v3729
    %v4057 = vpack.c.b16 %v3736, %v3733
    %v4058 = vpack.c.b16 %v3737, %v3734
    %v4059 = vpack.c.b16 %v3738, %v3735
    %v4060 = vpack.c.b16 %v3742, %v3739
    %v4061 = vpack.c.b16 %v3743, %v3740
    %v4062 = vpack.c.b16 %v3744, %v3741
    %v4063 = vpack.c.b16 %v3748, %v3745
    %v4064 = vpack.c.b16 %v3749, %v3746
    %v4065 = vpack.c.b16 %v3750, %v3747
    %v4066 = vpack.c.b16 %v3754, %v3751
    %v4067 = vpack.c.b16 %v3755, %v3752
    %v4068 = vpack.c.b16 %v3756, %v3753
    %v4069 = vpack.c.b16 %v3760, %v3757
    %v4070 = vpack.c.b16 %v3761, %v3758
    %v4071 = vpack.c.b16 %v3762, %v3759
    %v4072 = vpack.c.b16 %v3766, %v3763
    %v4073 = vpack.c.b16 %v3767, %v3764
    %v4074 = vpack.c.b16 %v3768, %v3765
    %v4075 = vpack.c.b16 %v3772, %v3769
    %v4076 = vpack.c.b16 %v3773, %v3770
    %v4077 = vpack.c.b16 %v3774, %v3771
    %v4078 = vpack.c.b16 %v3778, %v3775
    %v4079 = vpack.c.b16 %v3779, %v3776
    %v4080 = vpack.c.b16 %v3780, %v3777
    %v4081 = vpack.c.b16 %v3784, %v3781
    %v4082 = vpack.c.b16 %v3785, %v3782
    %v4083 = vpack.c.b16 %v3786, %v3783
    %v4084 = vpack.c.b16 %v3790, %v3787
    %v4085 = vpack.c.b16 %v3791, %v3788
    %v4086 = vpack.c.b16 %v3792, %v3789
    %v4087 = vpack.c.b16 %v3796, %v3793
    %v4088 = vpack.c.b16 %v3797, %v3794
    %v4089 = vpack.c.b16 %v3798, %v3795
    %v4090 = vpack.c.b16 %v3802, %v3799
    %v4091 = vpack.c.b16 %v3803, %v3800
    %v4092 = vpack.c.b16 %v3804, %v3801
    %v4093 = vpack.c.b16 %v3808, %v3805
    %v4094 = vpack.c.b16 %v3809, %v3806
    %v4095 = vpack.c.b16 %v3810, %v3807
    %v4096 = vpack.c.b16 %v3814, %v3811
    %v4097 = vpack.c.b16 %v3815, %v3812
    %v4098 = vpack.c.b16 %v3816, %v3813
    %v4099 = vpack.c.b16 %v3820, %v3817
    %v4100 = vpack.c.b16 %v3821, %v3818
    %v4101 = vpack.c.b16 %v3822, %v3819
    %v4102 = vpack.c.b16 %v3826, %v3823
    %v4103 = vpack.c.b16 %v3827, %v3824
    %v4104 = vpack.c.b16 %v3828, %v3825
    %v4105 = vpack.c.b16 %v3832, %v3829
    %v4106 = vpack.c.b16 %v3833, %v3830
    %v4107 = vpack.c.b16 %v3834, %v3831
    %v4108 = vpack.c.b16 %v3838, %v3835
    %v4109 = vpack.c.b16 %v3839, %v3836
    %v4110 = vpack.c.b16 %v3840, %v3837
    %v4111 = vpack.c.b16 %v3844, %v3841
    %v4112 = vpack.c.b16 %v3845, %v3842
    %v4113 = vpack.c.b16 %v3846, %v3843
    %v4114 = vpack.c.b16 %v3850, %v3847
    %v4115 = vpack.c.b16 %v3851, %v3848
    %v4116 = vpack.c.b16 %v3852, %v3849
    %v4117 = vpack.c.b16 %v3856, %v3853
    %v4118 = vpack.c.b16 %v3857, %v3854
    %v4119 = vpack.c.b16 %v3858, %v3855
    %v4120 = vpack.c.b16 %v3862, %v3859
    %v4121 = vpack.c.b16 %v3863, %v3860
    %v4122 = vpack.c.b16 %v3864, %v3861
    %v4123 = vpack.c.b16 %v3868, %v3865
    %v4124 = vpack.c.b16 %v3869, %v3866
    %v4125 = vpack.c.b16 %v3870, %v3867
    %v4126 = vpack.c.b16 %v3874, %v3871
    %v4127 = vpack.c.b16 %v3875, %v3872
    %v4128 = vpack.c.b16 %v3876, %v3873
    %v4129 = vpack.c.b16 %v3880, %v3877
    %v4130 = vpack.c.b16 %v3881, %v3878
    %v4131 = vpack.c.b16 %v3882, %v3879
    %v4132 = vpack.c.b16 %v3886, %v3883
    %v4133 = vpack.c.b16 %v3887, %v3884
    %v4134 = vpack.c.b16 %v3888, %v3885
    %v4135 = vpack.c.b16 %v3892, %v3889
    %v4136 = vpack.c.b16 %v3893, %v3890
    %v4137 = vpack.c.b16 %v3894, %v3891
    %v4138 = vpack.c.b16 %v3898, %v3895
    %v4139 = vpack.c.b16 %v3899, %v3896
    %v4140 = vpack.c.b16 %v3900, %v3897
    %v4141 = vpack.c.b16 %v3904, %v3901
    %v4142 = vpack.c.b16 %v3905, %v3902
    %v4143 = vpack.c.b16 %v3906, %v3903
    %v4144 = vpack.c.b16 %v3910, %v3907
    %v4145 = vpack.c.b16 %v3911, %v3908
    %v4146 = vpack.c.b16 %v3912, %v3909
    %v4147 = vpack.c.b16 %v3916, %v3913
    %v4148 = vpack.c.b16 %v3917, %v3914
    %v4149 = vpack.c.b16 %v3918, %v3915
    %v4150 = vpack.c.b16 %v3922, %v3919
    %v4151 = vpack.c.b16 %v3923, %v3920
    %v4152 = vpack.c.b16 %v3924, %v3921
    %v4153 = vpack.c.b16 %v3928, %v3925
    %v4154 = vpack.c.b16 %v3929, %v3926
    %v4155 = vpack.c.b16 %v3930, %v3927
    %v4156 = vpack.c.b16 %v3934, %v3931
    %v4157 = vpack.c.b16 %v3935, %v3932
    %v4158 = vpack.c.b16 %v3936, %v3933
    %v4159 = vpack.c.b16 %v3940, %v3937
    %v4160 = vpack.c.b16 %v3941, %v3938
    %v4161 = vpack.c.b16 %v3942, %v3939
    %v4162 = vpack.c.b16 %v3946, %v3943
    %v4163 = vpack.c.b16 %v3947, %v3944
    %v4164 = vpack.c.b16 %v3948, %v3945
    %v4165 = vpack.c.b16 %v3952, %v3949
    %v4166 = vpack.c.b16 %v3953, %v3950
    %v4167 = vpack.c.b16 %v3954, %v3951
    %v4168 = vpack.c.b16 %v3958, %v3955
    %v4169 = vpack.c.b16 %v3959, %v3956
    %v4170 = vpack.c.b16 %v3960, %v3957
    %v4171 = vpack.c.b16 %v3964, %v3961
    %v4172 = vpack.c.b16 %v3965, %v3962
    %v4173 = vpack.c.b16 %v3966, %v3963
    %v4174 = vpack.c.b16 %v3970, %v3967
    %v4175 = vpack.c.b16 %v3971, %v3968
    %v4176 = vpack.c.b16 %v3972, %v3969
    %v4177 = vpack.c.b16 %v3976, %v3973
    %v4178 = vpack.c.b16 %v3977, %v3974
    %v4179 = vpack.c.b16 %v3978, %v3975
    %v4180 = vpack.c.b16 %v3982, %v3979
    %v4181 = vpack.c.b16 %v3983, %v3980
    %v4182 = vpack.c.b16 %v3984, %v3981
    %v4183 = vpack.c.b16 %v3988, %v3985
    %v4184 = vpack.c.b16 %v3989, %v3986
    %v4185 = vpack.c.b16 %v3990, %v3987
    %v4186 = vpack.c.b16 %v3994, %v3991
    %v4187 = vpack.c.b16 %v3995, %v3992
    %v4188 = vpack.c.b16 %v3996, %v3993
    %4381 = vmatprep.subr.bf16.mxu0 %v4019
    %4382 = vmatpush1.bf16.msra.mxu0 %v4018
    %4383 = vmatprep.subr.bf16.mxu0 %v4016
    %4384 = vmatpush1.bf16.msra.mxu0 %v4015
    %4385 = vmatprep.subr.bf16.mxu0 %v4013
    %4386 = vmatpush1.bf16.msra.mxu0 %v4012
    %4387 = vmatprep.subr.bf16.mxu0 %v4010
    %4388 = vmatpush1.bf16.msra.mxu0 %v4009
    %4389 = vmatprep.subr.bf16.mxu0 %v4007
    %4390 = vmatpush1.bf16.msra.mxu0 %v4006
    %4391 = vmatprep.subr.bf16.mxu0 %v4004
    %4392 = vmatpush1.bf16.msra.mxu0 %v4003
    %4393 = vmatprep.subr.bf16.mxu0 %v4001
    %4394 = vmatpush1.bf16.msra.mxu0 %v4000
    %4395 = vmatprep.subr.bf16.mxu0 %v3998
    %4396 = vmatpush1.bf16.msra.mxu0 %v3997
    %4397 = vmatprep.subr.bf16.mxu0 %v4043
    %4398 = vmatpush2.bf16.msra.mxu0 %v4042
    %4399 = vmatprep.subr.bf16.mxu0 %v4040
    %4400 = vmatpush2.bf16.msra.mxu0 %v4039
    %4401 = vmatprep.subr.bf16.mxu0 %v4037
    %4402 = vmatpush2.bf16.msra.mxu0 %v4036
    %4403 = vmatprep.subr.bf16.mxu0 %v4034
    %4404 = vmatpush2.bf16.msra.mxu0 %v4033
    %4405 = vmatprep.subr.bf16.mxu0 %v4031
    %4406 = vmatpush2.bf16.msra.mxu0 %v4030
    %4407 = vmatprep.subr.bf16.mxu0 %v4028
    %4408 = vmatpush2.bf16.msra.mxu0 %v4027
    %4409 = vmatprep.subr.bf16.mxu0 %v4025
    %4410 = vmatpush2.bf16.msra.mxu0 %v4024
    %4411 = vmatprep.subr.bf16.mxu0 %v4022
    %4412 = vmatpush2.bf16.msra.mxu0 %v4021
    %4413 = vmatprep.mubr.bf16.mxu0 %v3077
    %4414 = vmatmul.mubr.bf16.gmra.mxu0 %v3076
    %v4415 = vpop.f32.mrf.mxu0
    %v4416 = vadd.f32 %v3345, %v4415
    %v4417 = vpop.f32.mrf.mxu0
    %v4418 = vadd.f32 %v3349, %v4417
    %v4419 = vpop.f32.mrf.mxu0
    %v4420 = vpop.f32.mrf.mxu0
    %4421 = vdwg.mxu0
    %4422 = vmatprep.subr.bf16.mxu0 %v4067
    %4423 = vmatpush1.bf16.msra.mxu0 %v4066
    %4424 = vmatprep.subr.bf16.mxu0 %v4064
    %4425 = vmatpush1.bf16.msra.mxu0 %v4063
    %4426 = vmatprep.subr.bf16.mxu0 %v4061
    %4427 = vmatpush1.bf16.msra.mxu0 %v4060
    %4428 = vmatprep.subr.bf16.mxu0 %v4058
    %4429 = vmatpush1.bf16.msra.mxu0 %v4057
    %4430 = vmatprep.subr.bf16.mxu0 %v4055
    %4431 = vmatpush1.bf16.msra.mxu0 %v4054
    %4432 = vmatprep.subr.bf16.mxu0 %v4052
    %4433 = vmatpush1.bf16.msra.mxu0 %v4051
    %4434 = vmatprep.subr.bf16.mxu0 %v4049
    %4435 = vmatpush1.bf16.msra.mxu0 %v4048
    %4436 = vmatprep.subr.bf16.mxu0 %v4046
    %4437 = vmatpush1.bf16.msra.mxu0 %v4045
    %4438 = vmatprep.subr.bf16.mxu0 %v4091
    %4439 = vmatpush2.bf16.msra.mxu0 %v4090
    %4440 = vmatprep.subr.bf16.mxu0 %v4088
    %4441 = vmatpush2.bf16.msra.mxu0 %v4087
    %4442 = vmatprep.subr.bf16.mxu0 %v4085
    %4443 = vmatpush2.bf16.msra.mxu0 %v4084
    %4444 = vmatprep.subr.bf16.mxu0 %v4082
    %4445 = vmatpush2.bf16.msra.mxu0 %v4081
    %4446 = vmatprep.subr.bf16.mxu0 %v4079
    %4447 = vmatpush2.bf16.msra.mxu0 %v4078
    %4448 = vmatprep.subr.bf16.mxu0 %v4076
    %4449 = vmatpush2.bf16.msra.mxu0 %v4075
    %4450 = vmatprep.subr.bf16.mxu0 %v4073
    %4451 = vmatpush2.bf16.msra.mxu0 %v4072
    %4452 = vmatprep.subr.bf16.mxu0 %v4070
    %4453 = vmatpush2.bf16.msra.mxu0 %v4069
    %4454 = vmatprep.mubr.bf16.mxu0 %v3079
    %4455 = vmatmul.mubr.bf16.gmra.mxu0 %v3078
    %v4456 = vpop.f32.mrf.mxu0
    %v4457 = vadd.f32 %v4416, %v4456
    %v4458 = vpop.f32.mrf.mxu0
    %v4459 = vadd.f32 %v4418, %v4458
    %v4460 = vpop.f32.mrf.mxu0
    %v4461 = vpop.f32.mrf.mxu0
    %4462 = vdwg.mxu0
    %4463 = vmatprep.subr.bf16.mxu0 %v4115
    %4464 = vmatpush1.bf16.msra.mxu0 %v4114
    %4465 = vmatprep.subr.bf16.mxu0 %v4112
    %4466 = vmatpush1.bf16.msra.mxu0 %v4111
    %4467 = vmatprep.subr.bf16.mxu0 %v4109
    %4468 = vmatpush1.bf16.msra.mxu0 %v4108
    %4469 = vmatprep.subr.bf16.mxu0 %v4106
    %4470 = vmatpush1.bf16.msra.mxu0 %v4105
    %4471 = vmatprep.subr.bf16.mxu0 %v4103
    %4472 = vmatpush1.bf16.msra.mxu0 %v4102
    %4473 = vmatprep.subr.bf16.mxu0 %v4100
    %4474 = vmatpush1.bf16.msra.mxu0 %v4099
    %4475 = vmatprep.subr.bf16.mxu0 %v4097
    %4476 = vmatpush1.bf16.msra.mxu0 %v4096
    %4477 = vmatprep.subr.bf16.mxu0 %v4094
    %4478 = vmatpush1.bf16.msra.mxu0 %v4093
    %4479 = vmatprep.subr.bf16.mxu0 %v4139
    %4480 = vmatpush2.bf16.msra.mxu0 %v4138
    %4481 = vmatprep.subr.bf16.mxu0 %v4136
    %4482 = vmatpush2.bf16.msra.mxu0 %v4135
    %4483 = vmatprep.subr.bf16.mxu0 %v4133
    %4484 = vmatpush2.bf16.msra.mxu0 %v4132
    %4485 = vmatprep.subr.bf16.mxu0 %v4130
    %4486 = vmatpush2.bf16.msra.mxu0 %v4129
    %4487 = vmatprep.subr.bf16.mxu0 %v4127
    %4488 = vmatpush2.bf16.msra.mxu0 %v4126
    %4489 = vmatprep.subr.bf16.mxu0 %v4124
    %4490 = vmatpush2.bf16.msra.mxu0 %v4123
    %4491 = vmatprep.subr.bf16.mxu0 %v4121
    %4492 = vmatpush2.bf16.msra.mxu0 %v4120
    %4493 = vmatprep.subr.bf16.mxu0 %v4118
    %4494 = vmatpush2.bf16.msra.mxu0 %v4117
    %4495 = vmatprep.mubr.bf16.mxu0 %v3081
    %4496 = vmatmul.mubr.bf16.gmra.mxu0 %v3080
    %v4497 = vpop.f32.mrf.mxu0
    %v4498 = vadd.f32 %v4457, %v4497
    %v4499 = vpop.f32.mrf.mxu0
    %v4500 = vadd.f32 %v4459, %v4499
    %v4501 = vpop.f32.mrf.mxu0
    %v4502 = vpop.f32.mrf.mxu0
    %4503 = vdwg.mxu0
    %4504 = vmatprep.subr.bf16.mxu0 %v4163
    %4505 = vmatpush1.bf16.msra.mxu0 %v4162
    %4506 = vmatprep.subr.bf16.mxu0 %v4160
    %4507 = vmatpush1.bf16.msra.mxu0 %v4159
    %4508 = vmatprep.subr.bf16.mxu0 %v4157
    %4509 = vmatpush1.bf16.msra.mxu0 %v4156
    %4510 = vmatprep.subr.bf16.mxu0 %v4154
    %4511 = vmatpush1.bf16.msra.mxu0 %v4153
    %4512 = vmatprep.subr.bf16.mxu0 %v4151
    %4513 = vmatpush1.bf16.msra.mxu0 %v4150
    %4514 = vmatprep.subr.bf16.mxu0 %v4148
    %4515 = vmatpush1.bf16.msra.mxu0 %v4147
    %4516 = vmatprep.subr.bf16.mxu0 %v4145
    %4517 = vmatpush1.bf16.msra.mxu0 %v4144
    %4518 = vmatprep.subr.bf16.mxu0 %v4142
    %4519 = vmatpush1.bf16.msra.mxu0 %v4141
    %4520 = vmatprep.subr.bf16.mxu0 %v4187
    %4521 = vmatpush2.bf16.msra.mxu0 %v4186
    %4522 = vmatprep.subr.bf16.mxu0 %v4184
    %4523 = vmatpush2.bf16.msra.mxu0 %v4183
    %4524 = vmatprep.subr.bf16.mxu0 %v4181
    %4525 = vmatpush2.bf16.msra.mxu0 %v4180
    %4526 = vmatprep.subr.bf16.mxu0 %v4178
    %4527 = vmatpush2.bf16.msra.mxu0 %v4177
    %4528 = vmatprep.subr.bf16.mxu0 %v4175
    %4529 = vmatpush2.bf16.msra.mxu0 %v4174
    %4530 = vmatprep.subr.bf16.mxu0 %v4172
    %4531 = vmatpush2.bf16.msra.mxu0 %v4171
    %4532 = vmatprep.subr.bf16.mxu0 %v4169
    %4533 = vmatpush2.bf16.msra.mxu0 %v4168
    %4534 = vmatprep.subr.bf16.mxu0 %v4166
    %4535 = vmatpush2.bf16.msra.mxu0 %v4165
    %4536 = vmatprep.mubr.bf16.mxu0 %v3083
    %4537 = vmatmul.mubr.bf16.gmra.mxu0 %v3082
    %v4538 = vpop.f32.mrf.mxu0
    %v4539 = vadd.f32 %v4498, %v4538
    %v4540 = vpop.f32.mrf.mxu0
    %v4541 = vadd.f32 %v4500, %v4540
    %v4542 = vpop.f32.mrf.mxu0
    %v4543 = vpop.f32.mrf.mxu0
    %4544 = vdwg.mxu0
    %4545 = vmatprep.subr.bf16.mxu0 0
    %4546 = vmatpush1.bf16.msra.mxu0 %v4020
    %4547 = vmatprep.subr.bf16.mxu0 0
    %4548 = vmatpush1.bf16.msra.mxu0 %v4017
    %4549 = vmatprep.subr.bf16.mxu0 0
    %4550 = vmatpush1.bf16.msra.mxu0 %v4014
    %4551 = vmatprep.subr.bf16.mxu0 0
    %4552 = vmatpush1.bf16.msra.mxu0 %v4011
    %4553 = vmatprep.subr.bf16.mxu0 0
    %4554 = vmatpush1.bf16.msra.mxu0 %v4008
    %4555 = vmatprep.subr.bf16.mxu0 0
    %4556 = vmatpush1.bf16.msra.mxu0 %v4005
    %4557 = vmatprep.subr.bf16.mxu0 0
    %4558 = vmatpush1.bf16.msra.mxu0 %v4002
    %4559 = vmatprep.subr.bf16.mxu0 0
    %4560 = vmatpush1.bf16.msra.mxu0 %v3999
    %4561 = vmatprep.subr.bf16.mxu0 0
    %4562 = vmatpush2.bf16.msra.mxu0 %v4044
    %4563 = vmatprep.subr.bf16.mxu0 0
    %4564 = vmatpush2.bf16.msra.mxu0 %v4041
    %4565 = vmatprep.subr.bf16.mxu0 0
    %4566 = vmatpush2.bf16.msra.mxu0 %v4038
    %4567 = vmatprep.subr.bf16.mxu0 0
    %4568 = vmatpush2.bf16.msra.mxu0 %v4035
    %4569 = vmatprep.subr.bf16.mxu0 0
    %4570 = vmatpush2.bf16.msra.mxu0 %v4032
    %4571 = vmatprep.subr.bf16.mxu0 0
    %4572 = vmatpush2.bf16.msra.mxu0 %v4029
    %4573 = vmatprep.subr.bf16.mxu0 0
    %4574 = vmatpush2.bf16.msra.mxu0 %v4026
    %4575 = vmatprep.subr.bf16.mxu0 0
    %4576 = vmatpush2.bf16.msra.mxu0 %v4023
    %4577 = vmatprep.mubr.bf16.mxu0 %v3077
    %4578 = vmatmul.mubr.bf16.gmra.mxu0 %v3076
    %v4579 = vpop.f32.mrf.mxu0
    %v4580 = vadd.f32 %v3353, %v4579
    %v4581 = vpop.f32.mrf.mxu0
    %v4582 = vpop.f32.mrf.mxu0
    %v4583 = vpop.f32.mrf.mxu0
    %4584 = vdwg.mxu0
    %4585 = vmatprep.subr.bf16.mxu0 0
    %4586 = vmatpush1.bf16.msra.mxu0 %v4068
    %4587 = vmatprep.subr.bf16.mxu0 0
    %4588 = vmatpush1.bf16.msra.mxu0 %v4065
    %4589 = vmatprep.subr.bf16.mxu0 0
    %4590 = vmatpush1.bf16.msra.mxu0 %v4062
    %4591 = vmatprep.subr.bf16.mxu0 0
    %4592 = vmatpush1.bf16.msra.mxu0 %v4059
    %4593 = vmatprep.subr.bf16.mxu0 0
    %4594 = vmatpush1.bf16.msra.mxu0 %v4056
    %4595 = vmatprep.subr.bf16.mxu0 0
    %4596 = vmatpush1.bf16.msra.mxu0 %v4053
    %4597 = vmatprep.subr.bf16.mxu0 0
    %4598 = vmatpush1.bf16.msra.mxu0 %v4050
    %4599 = vmatprep.subr.bf16.mxu0 0
    %4600 = vmatpush1.bf16.msra.mxu0 %v4047
    %4601 = vmatprep.subr.bf16.mxu0 0
    %4602 = vmatpush2.bf16.msra.mxu0 %v4092
    %4603 = vmatprep.subr.bf16.mxu0 0
    %4604 = vmatpush2.bf16.msra.mxu0 %v4089
    %4605 = vmatprep.subr.bf16.mxu0 0
    %4606 = vmatpush2.bf16.msra.mxu0 %v4086
    %4607 = vmatprep.subr.bf16.mxu0 0
    %4608 = vmatpush2.bf16.msra.mxu0 %v4083
    %4609 = vmatprep.subr.bf16.mxu0 0
    %4610 = vmatpush2.bf16.msra.mxu0 %v4080
    %4611 = vmatprep.subr.bf16.mxu0 0
    %4612 = vmatpush2.bf16.msra.mxu0 %v4077
    %4613 = vmatprep.subr.bf16.mxu0 0
    %4614 = vmatpush2.bf16.msra.mxu0 %v4074
    %4615 = vmatprep.subr.bf16.mxu0 0
    %4616 = vmatpush2.bf16.msra.mxu0 %v4071
    %4617 = vmatprep.mubr.bf16.mxu0 %v3079
    %4618 = vmatmul.mubr.bf16.gmra.mxu0 %v3078
    %v4619 = vpop.f32.mrf.mxu0
    %v4620 = vadd.f32 %v4580, %v4619
    %v4621 = vpop.f32.mrf.mxu0
    %v4622 = vpop.f32.mrf.mxu0
    %v4623 = vpop.f32.mrf.mxu0
    %4624 = vdwg.mxu0
    %4625 = vmatprep.subr.bf16.mxu0 0
    %4626 = vmatpush1.bf16.msra.mxu0 %v4116
    %4627 = vmatprep.subr.bf16.mxu0 0
    %4628 = vmatpush1.bf16.msra.mxu0 %v4113
    %4629 = vmatprep.subr.bf16.mxu0 0
    %4630 = vmatpush1.bf16.msra.mxu0 %v4110
    %4631 = vmatprep.subr.bf16.mxu0 0
    %4632 = vmatpush1.bf16.msra.mxu0 %v4107
    %4633 = vmatprep.subr.bf16.mxu0 0
    %4634 = vmatpush1.bf16.msra.mxu0 %v4104
    %4635 = vmatprep.subr.bf16.mxu0 0
    %4636 = vmatpush1.bf16.msra.mxu0 %v4101
    %4637 = vmatprep.subr.bf16.mxu0 0
    %4638 = vmatpush1.bf16.msra.mxu0 %v4098
    %4639 = vmatprep.subr.bf16.mxu0 0
    %4640 = vmatpush1.bf16.msra.mxu0 %v4095
    %4641 = vmatprep.subr.bf16.mxu0 0
    %4642 = vmatpush2.bf16.msra.mxu0 %v4140
    %4643 = vmatprep.subr.bf16.mxu0 0
    %4644 = vmatpush2.bf16.msra.mxu0 %v4137
    %4645 = vmatprep.subr.bf16.mxu0 0
    %4646 = vmatpush2.bf16.msra.mxu0 %v4134
    %4647 = vmatprep.subr.bf16.mxu0 0
    %4648 = vmatpush2.bf16.msra.mxu0 %v4131
    %4649 = vmatprep.subr.bf16.mxu0 0
    %4650 = vmatpush2.bf16.msra.mxu0 %v4128
    %4651 = vmatprep.subr.bf16.mxu0 0
    %4652 = vmatpush2.bf16.msra.mxu0 %v4125
    %4653 = vmatprep.subr.bf16.mxu0 0
    %4654 = vmatpush2.bf16.msra.mxu0 %v4122
    %4655 = vmatprep.subr.bf16.mxu0 0
    %4656 = vmatpush2.bf16.msra.mxu0 %v4119
    %4657 = vmatprep.mubr.bf16.mxu0 %v3081
    %4658 = vmatmul.mubr.bf16.gmra.mxu0 %v3080
    %v4659 = vpop.f32.mrf.mxu0
    %v4660 = vadd.f32 %v4620, %v4659
    %v4661 = vpop.f32.mrf.mxu0
    %v4662 = vpop.f32.mrf.mxu0
    %v4663 = vpop.f32.mrf.mxu0
    %4664 = vdwg.mxu0
    %4665 = vmatprep.subr.bf16.mxu0 0
    %4666 = vmatpush1.bf16.msra.mxu0 %v4164
    %4667 = vmatprep.subr.bf16.mxu0 0
    %4668 = vmatpush1.bf16.msra.mxu0 %v4161
    %4669 = vmatprep.subr.bf16.mxu0 0
    %4670 = vmatpush1.bf16.msra.mxu0 %v4158
    %4671 = vmatprep.subr.bf16.mxu0 0
    %4672 = vmatpush1.bf16.msra.mxu0 %v4155
    %4673 = vmatprep.subr.bf16.mxu0 0
    %4674 = vmatpush1.bf16.msra.mxu0 %v4152
    %4675 = vmatprep.subr.bf16.mxu0 0
    %4676 = vmatpush1.bf16.msra.mxu0 %v4149
    %4677 = vmatprep.subr.bf16.mxu0 0
    %4678 = vmatpush1.bf16.msra.mxu0 %v4146
    %4679 = vmatprep.subr.bf16.mxu0 0
    %4680 = vmatpush1.bf16.msra.mxu0 %v4143
    %4681 = vmatprep.subr.bf16.mxu0 0
    %4682 = vmatpush2.bf16.msra.mxu0 %v4188
    %4683 = vmatprep.subr.bf16.mxu0 0
    %4684 = vmatpush2.bf16.msra.mxu0 %v4185
    %4685 = vmatprep.subr.bf16.mxu0 0
    %4686 = vmatpush2.bf16.msra.mxu0 %v4182
    %4687 = vmatprep.subr.bf16.mxu0 0
    %4688 = vmatpush2.bf16.msra.mxu0 %v4179
    %4689 = vmatprep.subr.bf16.mxu0 0
    %4690 = vmatpush2.bf16.msra.mxu0 %v4176
    %4691 = vmatprep.subr.bf16.mxu0 0
    %4692 = vmatpush2.bf16.msra.mxu0 %v4173
    %4693 = vmatprep.subr.bf16.mxu0 0
    %4694 = vmatpush2.bf16.msra.mxu0 %v4170
    %4695 = vmatprep.subr.bf16.mxu0 0
    %4696 = vmatpush2.bf16.msra.mxu0 %v4167
    %4697 = vmatprep.mubr.bf16.mxu0 %v3083
    %4698 = vmatmul.mubr.bf16.gmra.mxu0 %v3082
    %v4699 = vpop.f32.mrf.mxu0
    %v4700 = vadd.f32 %v4660, %v4699
    %v4701 = vpop.f32.mrf.mxu0
    %v4702 = vpop.f32.mrf.mxu0
    %v4703 = vpop.f32.mrf.mxu0
    %4704 = vdwg.mxu0
    %v4705 = vmax.f32 %v4539, 0.0
    %v4706 = vmax.f32 %v4541, 0.0
    %v4707 = vmax.f32 %v4700, 0.0
    %v4708 = vpack.c.bf16 %v4705, %v4705
    %v4709 = vpack.c.bf16 %v4706, %v4706
    %v4710 = vpack.c.bf16 %v4707, %v4707
    %v4711 = vld [vmem:[#allocation11] sm:$0xff]
    %v4712 = vld [vmem:[#allocation11 + $0x8] sm:$0xff]
    %v4713 = vld [vmem:[#allocation11 + $0x10] sm:$0xff]
    %v4714 = vld [vmem:[#allocation11 + $0x18] sm:$0xff]
    %v4715 = vld [vmem:[#allocation11 + $0x20] sm:$0xff]
    %v4716 = vld [vmem:[#allocation11 + $0x28] sm:$0xff]
    %v4717 = vld [vmem:[#allocation11 + $0x30] sm:$0xff]
    %v4718 = vld [vmem:[#allocation11 + $0x38] sm:$0xff]
    %v4719 = vld [vmem:[#allocation11 + $0x40] sm:$0xff]
    %v4720 = vld [vmem:[#allocation11 + $0x48] sm:$0xff]
    %v4721 = vld [vmem:[#allocation11 + $0x50] sm:$0xff]
    %v4722 = vld [vmem:[#allocation11 + $0x58] sm:$0xff]
    %v4723 = vld [vmem:[#allocation11 + $0x60] sm:$0xff]
    %v4724 = vld [vmem:[#allocation11 + $0x68] sm:$0xff]
    %v4725 = vld [vmem:[#allocation11 + $0x70] sm:$0xff]
    %v4726 = vld [vmem:[#allocation11 + $0x78] sm:$0xff]
    %v4727 = vld [vmem:[#allocation11 + $0x80] sm:$0xff]
    %v4728 = vld [vmem:[#allocation11 + $0x88] sm:$0xff]
    %v4729 = vld [vmem:[#allocation11 + $0x90] sm:$0xff]
    %v4730 = vld [vmem:[#allocation11 + $0x98] sm:$0xff]
    %v4731 = vld [vmem:[#allocation11 + $0xa0] sm:$0xff]
    %v4732 = vld [vmem:[#allocation11 + $0xa8] sm:$0xff]
    %v4733 = vld [vmem:[#allocation11 + $0xb0] sm:$0xff]
    %v4734 = vld [vmem:[#allocation11 + $0xb8] sm:$0xff]
    %v4735 = vld [vmem:[#allocation11 + $0xc0] sm:$0xff]
    %v4736 = vld [vmem:[#allocation11 + $0xc8] sm:$0xff]
    %v4737 = vld [vmem:[#allocation11 + $0xd0] sm:$0xff]
    %v4738 = vld [vmem:[#allocation11 + $0xd8] sm:$0xff]
    %v4739 = vld [vmem:[#allocation11 + $0xe0] sm:$0xff]
    %v4740 = vld [vmem:[#allocation11 + $0xe8] sm:$0xff]
    %v4741 = vld [vmem:[#allocation11 + $0xf0] sm:$0xff]
    %v4742 = vld [vmem:[#allocation11 + $0xf8] sm:$0xff]
    %v4743 = vld [vmem:[#allocation11 + $0x100] sm:$0xff]
    %v4744 = vld [vmem:[#allocation11 + $0x108] sm:$0xff]
    %v4745 = vld [vmem:[#allocation11 + $0x110] sm:$0xff]
    %v4746 = vld [vmem:[#allocation11 + $0x118] sm:$0xff]
    %v4747 = vld [vmem:[#allocation11 + $0x120] sm:$0xff]
    %v4748 = vld [vmem:[#allocation11 + $0x128] sm:$0xff]
    %v4749 = vld [vmem:[#allocation11 + $0x130] sm:$0xff]
    %v4750 = vld [vmem:[#allocation11 + $0x138] sm:$0xff]
    %v4751 = vld [vmem:[#allocation11 + $0x140] sm:$0xff]
    %v4752 = vld [vmem:[#allocation11 + $0x148] sm:$0xff]
    %v4753 = vld [vmem:[#allocation11 + $0x150] sm:$0xff]
    %v4754 = vld [vmem:[#allocation11 + $0x158] sm:$0xff]
    %v4755 = vld [vmem:[#allocation11 + $0x160] sm:$0xff]
    %v4756 = vld [vmem:[#allocation11 + $0x168] sm:$0xff]
    %v4757 = vld [vmem:[#allocation11 + $0x170] sm:$0xff]
    %v4758 = vld [vmem:[#allocation11 + $0x178] sm:$0xff]
    %v4759 = vld [vmem:[#allocation11 + $0x180] sm:$0xff]
    %v4760 = vld [vmem:[#allocation11 + $0x188] sm:$0xff]
    %v4761 = vld [vmem:[#allocation11 + $0x190] sm:$0xff]
    %v4762 = vld [vmem:[#allocation11 + $0x198] sm:$0xff]
    %v4763 = vld [vmem:[#allocation11 + $0x1a0] sm:$0xff]
    %v4764 = vld [vmem:[#allocation11 + $0x1a8] sm:$0xff]
    %v4765 = vld [vmem:[#allocation11 + $0x1b0] sm:$0xff]
    %v4766 = vld [vmem:[#allocation11 + $0x1b8] sm:$0xff]
    %v4767 = vld [vmem:[#allocation11 + $0x1c0] sm:$0xff]
    %v4768 = vld [vmem:[#allocation11 + $0x1c8] sm:$0xff]
    %v4769 = vld [vmem:[#allocation11 + $0x1d0] sm:$0xff]
    %v4770 = vld [vmem:[#allocation11 + $0x1d8] sm:$0xff]
    %v4771 = vld [vmem:[#allocation11 + $0x1e0] sm:$0xff]
    %v4772 = vld [vmem:[#allocation11 + $0x1e8] sm:$0xff]
    %v4773 = vld [vmem:[#allocation11 + $0x1f0] sm:$0xff]
    %v4774 = vld [vmem:[#allocation11 + $0x1f8] sm:$0xff]
    %v4775 = vld [vmem:[#allocation11 + $0x200] sm:$0xff]
    %v4776 = vld [vmem:[#allocation11 + $0x208] sm:$0xff]
    %v4777 = vld [vmem:[#allocation11 + $0x210] sm:$0xff]
    %v4778 = vld [vmem:[#allocation11 + $0x218] sm:$0xff]
    %v4779 = vld [vmem:[#allocation11 + $0x220] sm:$0xff]
    %v4780 = vld [vmem:[#allocation11 + $0x228] sm:$0xff]
    %v4781 = vld [vmem:[#allocation11 + $0x230] sm:$0xff]
    %v4782 = vld [vmem:[#allocation11 + $0x238] sm:$0xff]
    %v4783 = vld [vmem:[#allocation11 + $0x240] sm:$0xff]
    %v4784 = vld [vmem:[#allocation11 + $0x248] sm:$0xff]
    %v4785 = vld [vmem:[#allocation11 + $0x250] sm:$0xff]
    %v4786 = vld [vmem:[#allocation11 + $0x258] sm:$0xff]
    %v4787 = vld [vmem:[#allocation11 + $0x260] sm:$0xff]
    %v4788 = vld [vmem:[#allocation11 + $0x268] sm:$0xff]
    %v4789 = vld [vmem:[#allocation11 + $0x270] sm:$0xff]
    %v4790 = vld [vmem:[#allocation11 + $0x278] sm:$0xff]
    %v4791 = vld [vmem:[#allocation11 + $0x280] sm:$0xff]
    %v4792 = vld [vmem:[#allocation11 + $0x288] sm:$0xff]
    %v4793 = vld [vmem:[#allocation11 + $0x290] sm:$0xff]
    %v4794 = vld [vmem:[#allocation11 + $0x298] sm:$0xff]
    %v4795 = vld [vmem:[#allocation11 + $0x2a0] sm:$0xff]
    %v4796 = vld [vmem:[#allocation11 + $0x2a8] sm:$0xff]
    %v4797 = vld [vmem:[#allocation11 + $0x2b0] sm:$0xff]
    %v4798 = vld [vmem:[#allocation11 + $0x2b8] sm:$0xff]
    %v4799 = vld [vmem:[#allocation11 + $0x2c0] sm:$0xff]
    %v4800 = vld [vmem:[#allocation11 + $0x2c8] sm:$0xff]
    %v4801 = vld [vmem:[#allocation11 + $0x2d0] sm:$0xff]
    %v4802 = vld [vmem:[#allocation11 + $0x2d8] sm:$0xff]
    %v4803 = vld [vmem:[#allocation11 + $0x2e0] sm:$0xff]
    %v4804 = vld [vmem:[#allocation11 + $0x2e8] sm:$0xff]
    %v4805 = vld [vmem:[#allocation11 + $0x2f0] sm:$0xff]
    %v4806 = vld [vmem:[#allocation11 + $0x2f8] sm:$0xff]
    %v4807 = vld [vmem:[#allocation11 + $0x300] sm:$0xff]
    %v4808 = vld [vmem:[#allocation11 + $0x308] sm:$0xff]
    %v4809 = vld [vmem:[#allocation11 + $0x310] sm:$0xff]
    %v4810 = vld [vmem:[#allocation11 + $0x318] sm:$0xff]
    %v4811 = vld [vmem:[#allocation11 + $0x320] sm:$0xff]
    %v4812 = vld [vmem:[#allocation11 + $0x328] sm:$0xff]
    %v4813 = vld [vmem:[#allocation11 + $0x330] sm:$0xff]
    %v4814 = vld [vmem:[#allocation11 + $0x338] sm:$0xff]
    %v4815 = vld [vmem:[#allocation11 + $0x340] sm:$0xff]
    %v4816 = vld [vmem:[#allocation11 + $0x348] sm:$0xff]
    %v4817 = vld [vmem:[#allocation11 + $0x350] sm:$0xff]
    %v4818 = vld [vmem:[#allocation11 + $0x358] sm:$0xff]
    %v4819 = vld [vmem:[#allocation11 + $0x360] sm:$0xff]
    %v4820 = vld [vmem:[#allocation11 + $0x368] sm:$0xff]
    %v4821 = vld [vmem:[#allocation11 + $0x370] sm:$0xff]
    %v4822 = vld [vmem:[#allocation11 + $0x378] sm:$0xff]
    %v4823 = vld [vmem:[#allocation11 + $0x380] sm:$0xff]
    %v4824 = vld [vmem:[#allocation11 + $0x388] sm:$0xff]
    %v4825 = vld [vmem:[#allocation11 + $0x390] sm:$0xff]
    %v4826 = vld [vmem:[#allocation11 + $0x398] sm:$0xff]
    %v4827 = vld [vmem:[#allocation11 + $0x3a0] sm:$0xff]
    %v4828 = vld [vmem:[#allocation11 + $0x3a8] sm:$0xff]
    %v4829 = vld [vmem:[#allocation11 + $0x3b0] sm:$0xff]
    %v4830 = vld [vmem:[#allocation11 + $0x3b8] sm:$0xff]
    %v4831 = vld [vmem:[#allocation11 + $0x3c0] sm:$0xff]
    %v4832 = vld [vmem:[#allocation11 + $0x3c8] sm:$0xff]
    %v4833 = vld [vmem:[#allocation11 + $0x3d0] sm:$0xff]
    %v4834 = vld [vmem:[#allocation11 + $0x3d8] sm:$0xff]
    %v4835 = vld [vmem:[#allocation11 + $0x3e0] sm:$0xff]
    %v4836 = vld [vmem:[#allocation11 + $0x3e8] sm:$0xff]
    %v4837 = vld [vmem:[#allocation11 + $0x3f0] sm:$0xff]
    %v4838 = vld [vmem:[#allocation11 + $0x3f8] sm:$0xff]
    %v4839 = vld [vmem:[#allocation11 + $0x400] sm:$0xff]
    %v4840 = vld [vmem:[#allocation11 + $0x408] sm:$0xff]
    %v4841 = vld [vmem:[#allocation11 + $0x410] sm:$0xff]
    %v4842 = vld [vmem:[#allocation11 + $0x418] sm:$0xff]
    %v4843 = vld [vmem:[#allocation11 + $0x420] sm:$0xff]
    %v4844 = vld [vmem:[#allocation11 + $0x428] sm:$0xff]
    %v4845 = vld [vmem:[#allocation11 + $0x430] sm:$0xff]
    %v4846 = vld [vmem:[#allocation11 + $0x438] sm:$0xff]
    %v4847 = vld [vmem:[#allocation11 + $0x440] sm:$0xff]
    %v4848 = vld [vmem:[#allocation11 + $0x448] sm:$0xff]
    %v4849 = vld [vmem:[#allocation11 + $0x450] sm:$0xff]
    %v4850 = vld [vmem:[#allocation11 + $0x458] sm:$0xff]
    %v4851 = vld [vmem:[#allocation11 + $0x460] sm:$0xff]
    %v4852 = vld [vmem:[#allocation11 + $0x468] sm:$0xff]
    %v4853 = vld [vmem:[#allocation11 + $0x470] sm:$0xff]
    %v4854 = vld [vmem:[#allocation11 + $0x478] sm:$0xff]
    %v4855 = vld [vmem:[#allocation11 + $0x480] sm:$0xff]
    %v4856 = vld [vmem:[#allocation11 + $0x488] sm:$0xff]
    %v4857 = vld [vmem:[#allocation11 + $0x490] sm:$0xff]
    %v4858 = vld [vmem:[#allocation11 + $0x498] sm:$0xff]
    %v4859 = vld [vmem:[#allocation11 + $0x4a0] sm:$0xff]
    %v4860 = vld [vmem:[#allocation11 + $0x4a8] sm:$0xff]
    %v4861 = vld [vmem:[#allocation11 + $0x4b0] sm:$0xff]
    %v4862 = vld [vmem:[#allocation11 + $0x4b8] sm:$0xff]
    %v4863 = vld [vmem:[#allocation11 + $0x4c0] sm:$0xff]
    %v4864 = vld [vmem:[#allocation11 + $0x4c8] sm:$0xff]
    %v4865 = vld [vmem:[#allocation11 + $0x4d0] sm:$0xff]
    %v4866 = vld [vmem:[#allocation11 + $0x4d8] sm:$0xff]
    %v4867 = vld [vmem:[#allocation11 + $0x4e0] sm:$0xff]
    %v4868 = vld [vmem:[#allocation11 + $0x4e8] sm:$0xff]
    %v4869 = vld [vmem:[#allocation11 + $0x4f0] sm:$0xff]
    %v4870 = vld [vmem:[#allocation11 + $0x4f8] sm:$0xff]
    %v4871 = vld [vmem:[#allocation11 + $0x500] sm:$0xff]
    %v4872 = vld [vmem:[#allocation11 + $0x508] sm:$0xff]
    %v4873 = vld [vmem:[#allocation11 + $0x510] sm:$0xff]
    %v4874 = vld [vmem:[#allocation11 + $0x518] sm:$0xff]
    %v4875 = vld [vmem:[#allocation11 + $0x520] sm:$0xff]
    %v4876 = vld [vmem:[#allocation11 + $0x528] sm:$0xff]
    %v4877 = vld [vmem:[#allocation11 + $0x530] sm:$0xff]
    %v4878 = vld [vmem:[#allocation11 + $0x538] sm:$0xff]
    %v4879 = vld [vmem:[#allocation11 + $0x540] sm:$0xff]
    %v4880 = vld [vmem:[#allocation11 + $0x548] sm:$0xff]
    %v4881 = vld [vmem:[#allocation11 + $0x550] sm:$0xff]
    %v4882 = vld [vmem:[#allocation11 + $0x558] sm:$0xff]
    %v4883 = vld [vmem:[#allocation11 + $0x560] sm:$0xff]
    %v4884 = vld [vmem:[#allocation11 + $0x568] sm:$0xff]
    %v4885 = vld [vmem:[#allocation11 + $0x570] sm:$0xff]
    %v4886 = vld [vmem:[#allocation11 + $0x578] sm:$0xff]
    %v4887 = vld [vmem:[#allocation11 + $0x580] sm:$0xff]
    %v4888 = vld [vmem:[#allocation11 + $0x588] sm:$0xff]
    %v4889 = vld [vmem:[#allocation11 + $0x590] sm:$0xff]
    %v4890 = vld [vmem:[#allocation11 + $0x598] sm:$0xff]
    %v4891 = vld [vmem:[#allocation11 + $0x5a0] sm:$0xff]
    %v4892 = vld [vmem:[#allocation11 + $0x5a8] sm:$0xff]
    %v4893 = vld [vmem:[#allocation11 + $0x5b0] sm:$0xff]
    %v4894 = vld [vmem:[#allocation11 + $0x5b8] sm:$0xff]
    %v4895 = vld [vmem:[#allocation11 + $0x5c0] sm:$0xff]
    %v4896 = vld [vmem:[#allocation11 + $0x5c8] sm:$0xff]
    %v4897 = vld [vmem:[#allocation11 + $0x5d0] sm:$0xff]
    %v4898 = vld [vmem:[#allocation11 + $0x5d8] sm:$0xff]
    %v4899 = vld [vmem:[#allocation11 + $0x5e0] sm:$0xff]
    %v4900 = vld [vmem:[#allocation11 + $0x5e8] sm:$0xff]
    %v4901 = vld [vmem:[#allocation11 + $0x5f0] sm:$0xff]
    %v4902 = vld [vmem:[#allocation11 + $0x5f8] sm:$0xff]
    %v4903 = vld [vmem:[#allocation13] sm:$0xff]
    %v4905 = vlaneseq
    %v4906 = vshrl.u32 %v4905, 7
    %v4907 = vsub.s32 0, %v4906
    %v4908 = vrot.slane %v4903, %v4907
    %v4909 = vlaneseq
    %v4910 = vshrl.u32 %v4909, 7
    %v4911 = vsub.s32 1, %v4910
    %v4912 = vrot.slane %v4903, %v4911
    %v4913 = vlaneseq
    %v4914 = vshrl.u32 %v4913, 7
    %v4915 = vsub.s32 2, %v4914
    %v4916 = vrot.slane %v4903, %v4915
    %v4917 = vlaneseq
    %v4918 = vshrl.u32 %v4917, 7
    %v4919 = vsub.s32 3, %v4918
    %v4920 = vrot.slane %v4903, %v4919
    %v4921 = vlaneseq
    %v4922 = vshrl.u32 %v4921, 7
    %v4923 = vsub.s32 4, %v4922
    %v4924 = vrot.slane %v4903, %v4923
    %v4925 = vlaneseq
    %v4926 = vshrl.u32 %v4925, 7
    %v4927 = vsub.s32 5, %v4926
    %v4928 = vrot.slane %v4903, %v4927
    %v4929 = vlaneseq
    %v4930 = vshrl.u32 %v4929, 7
    %v4931 = vsub.s32 6, %v4930
    %v4932 = vrot.slane %v4903, %v4931
    %v4933 = vlaneseq
    %v4934 = vshrl.u32 %v4933, 7
    %v4935 = vsub.s32 7, %v4934
    %v4936 = vrot.slane %v4903, %v4935
    %v5137 = vunpack.c.l.b16 %v4711
    %v5138 = vunpack.c.h.b16 %v4711
    %v5139 = vunpack.c.l.b16 %v4712
    %v5140 = vunpack.c.h.b16 %v4712
    %v5141 = vunpack.c.l.b16 %v4713
    %v5142 = vunpack.c.h.b16 %v4713
    %v5143 = vunpack.c.l.b16 %v4714
    %v5144 = vunpack.c.h.b16 %v4714
    %v5145 = vunpack.c.l.b16 %v4715
    %v5146 = vunpack.c.h.b16 %v4715
    %v5147 = vunpack.c.l.b16 %v4716
    %v5148 = vunpack.c.h.b16 %v4716
    %v5149 = vunpack.c.l.b16 %v4717
    %v5150 = vunpack.c.h.b16 %v4717
    %v5151 = vunpack.c.l.b16 %v4718
    %v5152 = vunpack.c.h.b16 %v4718
    %v5153 = vunpack.c.l.b16 %v4719
    %v5154 = vunpack.c.h.b16 %v4719
    %v5155 = vunpack.c.l.b16 %v4720
    %v5156 = vunpack.c.h.b16 %v4720
    %v5157 = vunpack.c.l.b16 %v4721
    %v5158 = vunpack.c.h.b16 %v4721
    %v5159 = vunpack.c.l.b16 %v4722
    %v5160 = vunpack.c.h.b16 %v4722
    %v5161 = vunpack.c.l.b16 %v4723
    %v5162 = vunpack.c.h.b16 %v4723
    %v5163 = vunpack.c.l.b16 %v4724
    %v5164 = vunpack.c.h.b16 %v4724
    %v5165 = vunpack.c.l.b16 %v4725
    %v5166 = vunpack.c.h.b16 %v4725
    %v5167 = vunpack.c.l.b16 %v4726
    %v5168 = vunpack.c.h.b16 %v4726
    %v5169 = vunpack.c.l.b16 %v4727
    %v5170 = vunpack.c.h.b16 %v4727
    %v5171 = vunpack.c.l.b16 %v4728
    %v5172 = vunpack.c.h.b16 %v4728
    %v5173 = vunpack.c.l.b16 %v4729
    %v5174 = vunpack.c.h.b16 %v4729
    %v5175 = vunpack.c.l.b16 %v4730
    %v5176 = vunpack.c.h.b16 %v4730
    %v5177 = vunpack.c.l.b16 %v4731
    %v5178 = vunpack.c.h.b16 %v4731
    %v5179 = vunpack.c.l.b16 %v4732
    %v5180 = vunpack.c.h.b16 %v4732
    %v5181 = vunpack.c.l.b16 %v4733
    %v5182 = vunpack.c.h.b16 %v4733
    %v5183 = vunpack.c.l.b16 %v4734
    %v5184 = vunpack.c.h.b16 %v4734
    %v5185 = vunpack.c.l.b16 %v4735
    %v5186 = vunpack.c.h.b16 %v4735
    %v5187 = vunpack.c.l.b16 %v4736
    %v5188 = vunpack.c.h.b16 %v4736
    %v5189 = vunpack.c.l.b16 %v4737
    %v5190 = vunpack.c.h.b16 %v4737
    %v5191 = vunpack.c.l.b16 %v4738
    %v5192 = vunpack.c.h.b16 %v4738
    %v5193 = vunpack.c.l.b16 %v4739
    %v5194 = vunpack.c.h.b16 %v4739
    %v5195 = vunpack.c.l.b16 %v4740
    %v5196 = vunpack.c.h.b16 %v4740
    %v5197 = vunpack.c.l.b16 %v4741
    %v5198 = vunpack.c.h.b16 %v4741
    %v5199 = vunpack.c.l.b16 %v4742
    %v5200 = vunpack.c.h.b16 %v4742
    %v5201 = vunpack.c.l.b16 %v4743
    %v5202 = vunpack.c.h.b16 %v4743
    %v5203 = vunpack.c.l.b16 %v4744
    %v5204 = vunpack.c.h.b16 %v4744
    %v5205 = vunpack.c.l.b16 %v4745
    %v5206 = vunpack.c.h.b16 %v4745
    %v5207 = vunpack.c.l.b16 %v4746
    %v5208 = vunpack.c.h.b16 %v4746
    %v5209 = vunpack.c.l.b16 %v4747
    %v5210 = vunpack.c.h.b16 %v4747
    %v5211 = vunpack.c.l.b16 %v4748
    %v5212 = vunpack.c.h.b16 %v4748
    %v5213 = vunpack.c.l.b16 %v4749
    %v5214 = vunpack.c.h.b16 %v4749
    %v5215 = vunpack.c.l.b16 %v4750
    %v5216 = vunpack.c.h.b16 %v4750
    %v5217 = vunpack.c.l.b16 %v4751
    %v5218 = vunpack.c.h.b16 %v4751
    %v5219 = vunpack.c.l.b16 %v4752
    %v5220 = vunpack.c.h.b16 %v4752
    %v5221 = vunpack.c.l.b16 %v4753
    %v5222 = vunpack.c.h.b16 %v4753
    %v5223 = vunpack.c.l.b16 %v4754
    %v5224 = vunpack.c.h.b16 %v4754
    %v5225 = vunpack.c.l.b16 %v4755
    %v5226 = vunpack.c.h.b16 %v4755
    %v5227 = vunpack.c.l.b16 %v4756
    %v5228 = vunpack.c.h.b16 %v4756
    %v5229 = vunpack.c.l.b16 %v4757
    %v5230 = vunpack.c.h.b16 %v4757
    %v5231 = vunpack.c.l.b16 %v4758
    %v5232 = vunpack.c.h.b16 %v4758
    %v5233 = vunpack.c.l.b16 %v4759
    %v5234 = vunpack.c.h.b16 %v4759
    %v5235 = vunpack.c.l.b16 %v4760
    %v5236 = vunpack.c.h.b16 %v4760
    %v5237 = vunpack.c.l.b16 %v4761
    %v5238 = vunpack.c.h.b16 %v4761
    %v5239 = vunpack.c.l.b16 %v4762
    %v5240 = vunpack.c.h.b16 %v4762
    %v5241 = vunpack.c.l.b16 %v4763
    %v5242 = vunpack.c.h.b16 %v4763
    %v5243 = vunpack.c.l.b16 %v4764
    %v5244 = vunpack.c.h.b16 %v4764
    %v5245 = vunpack.c.l.b16 %v4765
    %v5246 = vunpack.c.h.b16 %v4765
    %v5247 = vunpack.c.l.b16 %v4766
    %v5248 = vunpack.c.h.b16 %v4766
    %v5249 = vunpack.c.l.b16 %v4767
    %v5250 = vunpack.c.h.b16 %v4767
    %v5251 = vunpack.c.l.b16 %v4768
    %v5252 = vunpack.c.h.b16 %v4768
    %v5253 = vunpack.c.l.b16 %v4769
    %v5254 = vunpack.c.h.b16 %v4769
    %v5255 = vunpack.c.l.b16 %v4770
    %v5256 = vunpack.c.h.b16 %v4770
    %v5257 = vunpack.c.l.b16 %v4771
    %v5258 = vunpack.c.h.b16 %v4771
    %v5259 = vunpack.c.l.b16 %v4772
    %v5260 = vunpack.c.h.b16 %v4772
    %v5261 = vunpack.c.l.b16 %v4773
    %v5262 = vunpack.c.h.b16 %v4773
    %v5263 = vunpack.c.l.b16 %v4774
    %v5264 = vunpack.c.h.b16 %v4774
    %v5265 = vunpack.c.l.b16 %v4775
    %v5266 = vunpack.c.h.b16 %v4775
    %v5267 = vunpack.c.l.b16 %v4776
    %v5268 = vunpack.c.h.b16 %v4776
    %v5269 = vunpack.c.l.b16 %v4777
    %v5270 = vunpack.c.h.b16 %v4777
    %v5271 = vunpack.c.l.b16 %v4778
    %v5272 = vunpack.c.h.b16 %v4778
    %v5273 = vunpack.c.l.b16 %v4779
    %v5274 = vunpack.c.h.b16 %v4779
    %v5275 = vunpack.c.l.b16 %v4780
    %v5276 = vunpack.c.h.b16 %v4780
    %v5277 = vunpack.c.l.b16 %v4781
    %v5278 = vunpack.c.h.b16 %v4781
    %v5279 = vunpack.c.l.b16 %v4782
    %v5280 = vunpack.c.h.b16 %v4782
    %v5281 = vunpack.c.l.b16 %v4783
    %v5282 = vunpack.c.h.b16 %v4783
    %v5283 = vunpack.c.l.b16 %v4784
    %v5284 = vunpack.c.h.b16 %v4784
    %v5285 = vunpack.c.l.b16 %v4785
    %v5286 = vunpack.c.h.b16 %v4785
    %v5287 = vunpack.c.l.b16 %v4786
    %v5288 = vunpack.c.h.b16 %v4786
    %v5289 = vunpack.c.l.b16 %v4787
    %v5290 = vunpack.c.h.b16 %v4787
    %v5291 = vunpack.c.l.b16 %v4788
    %v5292 = vunpack.c.h.b16 %v4788
    %v5293 = vunpack.c.l.b16 %v4789
    %v5294 = vunpack.c.h.b16 %v4789
    %v5295 = vunpack.c.l.b16 %v4790
    %v5296 = vunpack.c.h.b16 %v4790
    %v5297 = vunpack.c.l.b16 %v4791
    %v5298 = vunpack.c.h.b16 %v4791
    %v5299 = vunpack.c.l.b16 %v4792
    %v5300 = vunpack.c.h.b16 %v4792
    %v5301 = vunpack.c.l.b16 %v4793
    %v5302 = vunpack.c.h.b16 %v4793
    %v5303 = vunpack.c.l.b16 %v4794
    %v5304 = vunpack.c.h.b16 %v4794
    %v5305 = vunpack.c.l.b16 %v4795
    %v5306 = vunpack.c.h.b16 %v4795
    %v5307 = vunpack.c.l.b16 %v4796
    %v5308 = vunpack.c.h.b16 %v4796
    %v5309 = vunpack.c.l.b16 %v4797
    %v5310 = vunpack.c.h.b16 %v4797
    %v5311 = vunpack.c.l.b16 %v4798
    %v5312 = vunpack.c.h.b16 %v4798
    %v5313 = vunpack.c.l.b16 %v4799
    %v5314 = vunpack.c.h.b16 %v4799
    %v5315 = vunpack.c.l.b16 %v4800
    %v5316 = vunpack.c.h.b16 %v4800
    %v5317 = vunpack.c.l.b16 %v4801
    %v5318 = vunpack.c.h.b16 %v4801
    %v5319 = vunpack.c.l.b16 %v4802
    %v5320 = vunpack.c.h.b16 %v4802
    %v5321 = vunpack.c.l.b16 %v4803
    %v5322 = vunpack.c.h.b16 %v4803
    %v5323 = vunpack.c.l.b16 %v4804
    %v5324 = vunpack.c.h.b16 %v4804
    %v5325 = vunpack.c.l.b16 %v4805
    %v5326 = vunpack.c.h.b16 %v4805
    %v5327 = vunpack.c.l.b16 %v4806
    %v5328 = vunpack.c.h.b16 %v4806
    %v5329 = vunpack.c.l.b16 %v4807
    %v5330 = vunpack.c.h.b16 %v4807
    %v5331 = vunpack.c.l.b16 %v4808
    %v5332 = vunpack.c.h.b16 %v4808
    %v5333 = vunpack.c.l.b16 %v4809
    %v5334 = vunpack.c.h.b16 %v4809
    %v5335 = vunpack.c.l.b16 %v4810
    %v5336 = vunpack.c.h.b16 %v4810
    %v5337 = vunpack.c.l.b16 %v4811
    %v5338 = vunpack.c.h.b16 %v4811
    %v5339 = vunpack.c.l.b16 %v4812
    %v5340 = vunpack.c.h.b16 %v4812
    %v5341 = vunpack.c.l.b16 %v4813
    %v5342 = vunpack.c.h.b16 %v4813
    %v5343 = vunpack.c.l.b16 %v4814
    %v5344 = vunpack.c.h.b16 %v4814
    %v5345 = vunpack.c.l.b16 %v4815
    %v5346 = vunpack.c.h.b16 %v4815
    %v5347 = vunpack.c.l.b16 %v4816
    %v5348 = vunpack.c.h.b16 %v4816
    %v5349 = vunpack.c.l.b16 %v4817
    %v5350 = vunpack.c.h.b16 %v4817
    %v5351 = vunpack.c.l.b16 %v4818
    %v5352 = vunpack.c.h.b16 %v4818
    %v5353 = vunpack.c.l.b16 %v4819
    %v5354 = vunpack.c.h.b16 %v4819
    %v5355 = vunpack.c.l.b16 %v4820
    %v5356 = vunpack.c.h.b16 %v4820
    %v5357 = vunpack.c.l.b16 %v4821
    %v5358 = vunpack.c.h.b16 %v4821
    %v5359 = vunpack.c.l.b16 %v4822
    %v5360 = vunpack.c.h.b16 %v4822
    %v5361 = vunpack.c.l.b16 %v4823
    %v5362 = vunpack.c.h.b16 %v4823
    %v5363 = vunpack.c.l.b16 %v4824
    %v5364 = vunpack.c.h.b16 %v4824
    %v5365 = vunpack.c.l.b16 %v4825
    %v5366 = vunpack.c.h.b16 %v4825
    %v5367 = vunpack.c.l.b16 %v4826
    %v5368 = vunpack.c.h.b16 %v4826
    %v5369 = vunpack.c.l.b16 %v4827
    %v5370 = vunpack.c.h.b16 %v4827
    %v5371 = vunpack.c.l.b16 %v4828
    %v5372 = vunpack.c.h.b16 %v4828
    %v5373 = vunpack.c.l.b16 %v4829
    %v5374 = vunpack.c.h.b16 %v4829
    %v5375 = vunpack.c.l.b16 %v4830
    %v5376 = vunpack.c.h.b16 %v4830
    %v5377 = vunpack.c.l.b16 %v4831
    %v5378 = vunpack.c.h.b16 %v4831
    %v5379 = vunpack.c.l.b16 %v4832
    %v5380 = vunpack.c.h.b16 %v4832
    %v5381 = vunpack.c.l.b16 %v4833
    %v5382 = vunpack.c.h.b16 %v4833
    %v5383 = vunpack.c.l.b16 %v4834
    %v5384 = vunpack.c.h.b16 %v4834
    %v5385 = vunpack.c.l.b16 %v4835
    %v5386 = vunpack.c.h.b16 %v4835
    %v5387 = vunpack.c.l.b16 %v4836
    %v5388 = vunpack.c.h.b16 %v4836
    %v5389 = vunpack.c.l.b16 %v4837
    %v5390 = vunpack.c.h.b16 %v4837
    %v5391 = vunpack.c.l.b16 %v4838
    %v5392 = vunpack.c.h.b16 %v4838
    %v5393 = vunpack.c.l.b16 %v4839
    %v5394 = vunpack.c.h.b16 %v4839
    %v5395 = vunpack.c.l.b16 %v4840
    %v5396 = vunpack.c.h.b16 %v4840
    %v5397 = vunpack.c.l.b16 %v4841
    %v5398 = vunpack.c.h.b16 %v4841
    %v5399 = vunpack.c.l.b16 %v4842
    %v5400 = vunpack.c.h.b16 %v4842
    %v5401 = vunpack.c.l.b16 %v4843
    %v5402 = vunpack.c.h.b16 %v4843
    %v5403 = vunpack.c.l.b16 %v4844
    %v5404 = vunpack.c.h.b16 %v4844
    %v5405 = vunpack.c.l.b16 %v4845
    %v5406 = vunpack.c.h.b16 %v4845
    %v5407 = vunpack.c.l.b16 %v4846
    %v5408 = vunpack.c.h.b16 %v4846
    %v5409 = vunpack.c.l.b16 %v4847
    %v5410 = vunpack.c.h.b16 %v4847
    %v5411 = vunpack.c.l.b16 %v4848
    %v5412 = vunpack.c.h.b16 %v4848
    %v5413 = vunpack.c.l.b16 %v4849
    %v5414 = vunpack.c.h.b16 %v4849
    %v5415 = vunpack.c.l.b16 %v4850
    %v5416 = vunpack.c.h.b16 %v4850
    %v5417 = vunpack.c.l.b16 %v4851
    %v5418 = vunpack.c.h.b16 %v4851
    %v5419 = vunpack.c.l.b16 %v4852
    %v5420 = vunpack.c.h.b16 %v4852
    %v5421 = vunpack.c.l.b16 %v4853
    %v5422 = vunpack.c.h.b16 %v4853
    %v5423 = vunpack.c.l.b16 %v4854
    %v5424 = vunpack.c.h.b16 %v4854
    %v5425 = vunpack.c.l.b16 %v4855
    %v5426 = vunpack.c.h.b16 %v4855
    %v5427 = vunpack.c.l.b16 %v4856
    %v5428 = vunpack.c.h.b16 %v4856
    %v5429 = vunpack.c.l.b16 %v4857
    %v5430 = vunpack.c.h.b16 %v4857
    %v5431 = vunpack.c.l.b16 %v4858
    %v5432 = vunpack.c.h.b16 %v4858
    %v5433 = vunpack.c.l.b16 %v4859
    %v5434 = vunpack.c.h.b16 %v4859
    %v5435 = vunpack.c.l.b16 %v4860
    %v5436 = vunpack.c.h.b16 %v4860
    %v5437 = vunpack.c.l.b16 %v4861
    %v5438 = vunpack.c.h.b16 %v4861
    %v5439 = vunpack.c.l.b16 %v4862
    %v5440 = vunpack.c.h.b16 %v4862
    %v5441 = vunpack.c.l.b16 %v4863
    %v5442 = vunpack.c.h.b16 %v4863
    %v5443 = vunpack.c.l.b16 %v4864
    %v5444 = vunpack.c.h.b16 %v4864
    %v5445 = vunpack.c.l.b16 %v4865
    %v5446 = vunpack.c.h.b16 %v4865
    %v5447 = vunpack.c.l.b16 %v4866
    %v5448 = vunpack.c.h.b16 %v4866
    %v5449 = vunpack.c.l.b16 %v4867
    %v5450 = vunpack.c.h.b16 %v4867
    %v5451 = vunpack.c.l.b16 %v4868
    %v5452 = vunpack.c.h.b16 %v4868
    %v5453 = vunpack.c.l.b16 %v4869
    %v5454 = vunpack.c.h.b16 %v4869
    %v5455 = vunpack.c.l.b16 %v4870
    %v5456 = vunpack.c.h.b16 %v4870
    %v5457 = vunpack.c.l.b16 %v4871
    %v5458 = vunpack.c.h.b16 %v4871
    %v5459 = vunpack.c.l.b16 %v4872
    %v5460 = vunpack.c.h.b16 %v4872
    %v5461 = vunpack.c.l.b16 %v4873
    %v5462 = vunpack.c.h.b16 %v4873
    %v5463 = vunpack.c.l.b16 %v4874
    %v5464 = vunpack.c.h.b16 %v4874
    %v5465 = vunpack.c.l.b16 %v4875
    %v5466 = vunpack.c.h.b16 %v4875
    %v5467 = vunpack.c.l.b16 %v4876
    %v5468 = vunpack.c.h.b16 %v4876
    %v5469 = vunpack.c.l.b16 %v4877
    %v5470 = vunpack.c.h.b16 %v4877
    %v5471 = vunpack.c.l.b16 %v4878
    %v5472 = vunpack.c.h.b16 %v4878
    %v5473 = vunpack.c.l.b16 %v4879
    %v5474 = vunpack.c.h.b16 %v4879
    %v5475 = vunpack.c.l.b16 %v4880
    %v5476 = vunpack.c.h.b16 %v4880
    %v5477 = vunpack.c.l.b16 %v4881
    %v5478 = vunpack.c.h.b16 %v4881
    %v5479 = vunpack.c.l.b16 %v4882
    %v5480 = vunpack.c.h.b16 %v4882
    %v5481 = vunpack.c.l.b16 %v4883
    %v5482 = vunpack.c.h.b16 %v4883
    %v5483 = vunpack.c.l.b16 %v4884
    %v5484 = vunpack.c.h.b16 %v4884
    %v5485 = vunpack.c.l.b16 %v4885
    %v5486 = vunpack.c.h.b16 %v4885
    %v5487 = vunpack.c.l.b16 %v4886
    %v5488 = vunpack.c.h.b16 %v4886
    %v5489 = vunpack.c.l.b16 %v4887
    %v5490 = vunpack.c.h.b16 %v4887
    %v5491 = vunpack.c.l.b16 %v4888
    %v5492 = vunpack.c.h.b16 %v4888
    %v5493 = vunpack.c.l.b16 %v4889
    %v5494 = vunpack.c.h.b16 %v4889
    %v5495 = vunpack.c.l.b16 %v4890
    %v5496 = vunpack.c.h.b16 %v4890
    %v5497 = vunpack.c.l.b16 %v4891
    %v5498 = vunpack.c.h.b16 %v4891
    %v5499 = vunpack.c.l.b16 %v4892
    %v5500 = vunpack.c.h.b16 %v4892
    %v5501 = vunpack.c.l.b16 %v4893
    %v5502 = vunpack.c.h.b16 %v4893
    %v5503 = vunpack.c.l.b16 %v4894
    %v5504 = vunpack.c.h.b16 %v4894
    %v5505 = vunpack.c.l.b16 %v4895
    %v5506 = vunpack.c.h.b16 %v4895
    %v5507 = vunpack.c.l.b16 %v4896
    %v5508 = vunpack.c.h.b16 %v4896
    %v5509 = vunpack.c.l.b16 %v4897
    %v5510 = vunpack.c.h.b16 %v4897
    %v5511 = vunpack.c.l.b16 %v4898
    %v5512 = vunpack.c.h.b16 %v4898
    %v5513 = vunpack.c.l.b16 %v4899
    %v5514 = vunpack.c.h.b16 %v4899
    %v5515 = vunpack.c.l.b16 %v4900
    %v5516 = vunpack.c.h.b16 %v4900
    %v5517 = vunpack.c.l.b16 %v4901
    %v5518 = vunpack.c.h.b16 %v4901
    %v5519 = vunpack.c.l.b16 %v4902
    %v5520 = vunpack.c.h.b16 %v4902
    %v5521 = vpack.c.b16 %v5145, %v5137
    %v5522 = vpack.c.b16 %v5146, %v5138
    %v5523 = vpack.c.b16 %v5147, %v5139
    %v5524 = vpack.c.b16 %v5148, %v5140
    %v5525 = vpack.c.b16 %v5149, %v5141
    %v5526 = vpack.c.b16 %v5150, %v5142
    %v5527 = vpack.c.b16 %v5151, %v5143
    %v5528 = vpack.c.b16 %v5152, %v5144
    %v5529 = vpack.c.b16 %v5161, %v5153
    %v5530 = vpack.c.b16 %v5162, %v5154
    %v5531 = vpack.c.b16 %v5163, %v5155
    %v5532 = vpack.c.b16 %v5164, %v5156
    %v5533 = vpack.c.b16 %v5165, %v5157
    %v5534 = vpack.c.b16 %v5166, %v5158
    %v5535 = vpack.c.b16 %v5167, %v5159
    %v5536 = vpack.c.b16 %v5168, %v5160
    %v5537 = vpack.c.b16 %v5177, %v5169
    %v5538 = vpack.c.b16 %v5178, %v5170
    %v5539 = vpack.c.b16 %v5179, %v5171
    %v5540 = vpack.c.b16 %v5180, %v5172
    %v5541 = vpack.c.b16 %v5181, %v5173
    %v5542 = vpack.c.b16 %v5182, %v5174
    %v5543 = vpack.c.b16 %v5183, %v5175
    %v5544 = vpack.c.b16 %v5184, %v5176
    %v5545 = vpack.c.b16 %v5193, %v5185
    %v5546 = vpack.c.b16 %v5194, %v5186
    %v5547 = vpack.c.b16 %v5195, %v5187
    %v5548 = vpack.c.b16 %v5196, %v5188
    %v5549 = vpack.c.b16 %v5197, %v5189
    %v5550 = vpack.c.b16 %v5198, %v5190
    %v5551 = vpack.c.b16 %v5199, %v5191
    %v5552 = vpack.c.b16 %v5200, %v5192
    %v5553 = vpack.c.b16 %v5209, %v5201
    %v5554 = vpack.c.b16 %v5210, %v5202
    %v5555 = vpack.c.b16 %v5211, %v5203
    %v5556 = vpack.c.b16 %v5212, %v5204
    %v5557 = vpack.c.b16 %v5213, %v5205
    %v5558 = vpack.c.b16 %v5214, %v5206
    %v5559 = vpack.c.b16 %v5215, %v5207
    %v5560 = vpack.c.b16 %v5216, %v5208
    %v5561 = vpack.c.b16 %v5225, %v5217
    %v5562 = vpack.c.b16 %v5226, %v5218
    %v5563 = vpack.c.b16 %v5227, %v5219
    %v5564 = vpack.c.b16 %v5228, %v5220
    %v5565 = vpack.c.b16 %v5229, %v5221
    %v5566 = vpack.c.b16 %v5230, %v5222
    %v5567 = vpack.c.b16 %v5231, %v5223
    %v5568 = vpack.c.b16 %v5232, %v5224
    %v5569 = vpack.c.b16 %v5241, %v5233
    %v5570 = vpack.c.b16 %v5242, %v5234
    %v5571 = vpack.c.b16 %v5243, %v5235
    %v5572 = vpack.c.b16 %v5244, %v5236
    %v5573 = vpack.c.b16 %v5245, %v5237
    %v5574 = vpack.c.b16 %v5246, %v5238
    %v5575 = vpack.c.b16 %v5247, %v5239
    %v5576 = vpack.c.b16 %v5248, %v5240
    %v5577 = vpack.c.b16 %v5257, %v5249
    %v5578 = vpack.c.b16 %v5258, %v5250
    %v5579 = vpack.c.b16 %v5259, %v5251
    %v5580 = vpack.c.b16 %v5260, %v5252
    %v5581 = vpack.c.b16 %v5261, %v5253
    %v5582 = vpack.c.b16 %v5262, %v5254
    %v5583 = vpack.c.b16 %v5263, %v5255
    %v5584 = vpack.c.b16 %v5264, %v5256
    %v5585 = vpack.c.b16 %v5273, %v5265
    %v5586 = vpack.c.b16 %v5274, %v5266
    %v5587 = vpack.c.b16 %v5275, %v5267
    %v5588 = vpack.c.b16 %v5276, %v5268
    %v5589 = vpack.c.b16 %v5277, %v5269
    %v5590 = vpack.c.b16 %v5278, %v5270
    %v5591 = vpack.c.b16 %v5279, %v5271
    %v5592 = vpack.c.b16 %v5280, %v5272
    %v5593 = vpack.c.b16 %v5289, %v5281
    %v5594 = vpack.c.b16 %v5290, %v5282
    %v5595 = vpack.c.b16 %v5291, %v5283
    %v5596 = vpack.c.b16 %v5292, %v5284
    %v5597 = vpack.c.b16 %v5293, %v5285
    %v5598 = vpack.c.b16 %v5294, %v5286
    %v5599 = vpack.c.b16 %v5295, %v5287
    %v5600 = vpack.c.b16 %v5296, %v5288
    %v5601 = vpack.c.b16 %v5305, %v5297
    %v5602 = vpack.c.b16 %v5306, %v5298
    %v5603 = vpack.c.b16 %v5307, %v5299
    %v5604 = vpack.c.b16 %v5308, %v5300
    %v5605 = vpack.c.b16 %v5309, %v5301
    %v5606 = vpack.c.b16 %v5310, %v5302
    %v5607 = vpack.c.b16 %v5311, %v5303
    %v5608 = vpack.c.b16 %v5312, %v5304
    %v5609 = vpack.c.b16 %v5321, %v5313
    %v5610 = vpack.c.b16 %v5322, %v5314
    %v5611 = vpack.c.b16 %v5323, %v5315
    %v5612 = vpack.c.b16 %v5324, %v5316
    %v5613 = vpack.c.b16 %v5325, %v5317
    %v5614 = vpack.c.b16 %v5326, %v5318
    %v5615 = vpack.c.b16 %v5327, %v5319
    %v5616 = vpack.c.b16 %v5328, %v5320
    %v5617 = vpack.c.b16 %v5337, %v5329
    %v5618 = vpack.c.b16 %v5338, %v5330
    %v5619 = vpack.c.b16 %v5339, %v5331
    %v5620 = vpack.c.b16 %v5340, %v5332
    %v5621 = vpack.c.b16 %v5341, %v5333
    %v5622 = vpack.c.b16 %v5342, %v5334
    %v5623 = vpack.c.b16 %v5343, %v5335
    %v5624 = vpack.c.b16 %v5344, %v5336
    %v5625 = vpack.c.b16 %v5353, %v5345
    %v5626 = vpack.c.b16 %v5354, %v5346
    %v5627 = vpack.c.b16 %v5355, %v5347
    %v5628 = vpack.c.b16 %v5356, %v5348
    %v5629 = vpack.c.b16 %v5357, %v5349
    %v5630 = vpack.c.b16 %v5358, %v5350
    %v5631 = vpack.c.b16 %v5359, %v5351
    %v5632 = vpack.c.b16 %v5360, %v5352
    %v5633 = vpack.c.b16 %v5369, %v5361
    %v5634 = vpack.c.b16 %v5370, %v5362
    %v5635 = vpack.c.b16 %v5371, %v5363
    %v5636 = vpack.c.b16 %v5372, %v5364
    %v5637 = vpack.c.b16 %v5373, %v5365
    %v5638 = vpack.c.b16 %v5374, %v5366
    %v5639 = vpack.c.b16 %v5375, %v5367
    %v5640 = vpack.c.b16 %v5376, %v5368
    %v5641 = vpack.c.b16 %v5385, %v5377
    %v5642 = vpack.c.b16 %v5386, %v5378
    %v5643 = vpack.c.b16 %v5387, %v5379
    %v5644 = vpack.c.b16 %v5388, %v5380
    %v5645 = vpack.c.b16 %v5389, %v5381
    %v5646 = vpack.c.b16 %v5390, %v5382
    %v5647 = vpack.c.b16 %v5391, %v5383
    %v5648 = vpack.c.b16 %v5392, %v5384
    %v5649 = vpack.c.b16 %v5401, %v5393
    %v5650 = vpack.c.b16 %v5402, %v5394
    %v5651 = vpack.c.b16 %v5403, %v5395
    %v5652 = vpack.c.b16 %v5404, %v5396
    %v5653 = vpack.c.b16 %v5405, %v5397
    %v5654 = vpack.c.b16 %v5406, %v5398
    %v5655 = vpack.c.b16 %v5407, %v5399
    %v5656 = vpack.c.b16 %v5408, %v5400
    %v5657 = vpack.c.b16 %v5417, %v5409
    %v5658 = vpack.c.b16 %v5418, %v5410
    %v5659 = vpack.c.b16 %v5419, %v5411
    %v5660 = vpack.c.b16 %v5420, %v5412
    %v5661 = vpack.c.b16 %v5421, %v5413
    %v5662 = vpack.c.b16 %v5422, %v5414
    %v5663 = vpack.c.b16 %v5423, %v5415
    %v5664 = vpack.c.b16 %v5424, %v5416
    %v5665 = vpack.c.b16 %v5433, %v5425
    %v5666 = vpack.c.b16 %v5434, %v5426
    %v5667 = vpack.c.b16 %v5435, %v5427
    %v5668 = vpack.c.b16 %v5436, %v5428
    %v5669 = vpack.c.b16 %v5437, %v5429
    %v5670 = vpack.c.b16 %v5438, %v5430
    %v5671 = vpack.c.b16 %v5439, %v5431
    %v5672 = vpack.c.b16 %v5440, %v5432
    %v5673 = vpack.c.b16 %v5449, %v5441
    %v5674 = vpack.c.b16 %v5450, %v5442
    %v5675 = vpack.c.b16 %v5451, %v5443
    %v5676 = vpack.c.b16 %v5452, %v5444
    %v5677 = vpack.c.b16 %v5453, %v5445
    %v5678 = vpack.c.b16 %v5454, %v5446
    %v5679 = vpack.c.b16 %v5455, %v5447
    %v5680 = vpack.c.b16 %v5456, %v5448
    %v5681 = vpack.c.b16 %v5465, %v5457
    %v5682 = vpack.c.b16 %v5466, %v5458
    %v5683 = vpack.c.b16 %v5467, %v5459
    %v5684 = vpack.c.b16 %v5468, %v5460
    %v5685 = vpack.c.b16 %v5469, %v5461
    %v5686 = vpack.c.b16 %v5470, %v5462
    %v5687 = vpack.c.b16 %v5471, %v5463
    %v5688 = vpack.c.b16 %v5472, %v5464
    %v5689 = vpack.c.b16 %v5481, %v5473
    %v5690 = vpack.c.b16 %v5482, %v5474
    %v5691 = vpack.c.b16 %v5483, %v5475
    %v5692 = vpack.c.b16 %v5484, %v5476
    %v5693 = vpack.c.b16 %v5485, %v5477
    %v5694 = vpack.c.b16 %v5486, %v5478
    %v5695 = vpack.c.b16 %v5487, %v5479
    %v5696 = vpack.c.b16 %v5488, %v5480
    %v5697 = vpack.c.b16 %v5497, %v5489
    %v5698 = vpack.c.b16 %v5498, %v5490
    %v5699 = vpack.c.b16 %v5499, %v5491
    %v5700 = vpack.c.b16 %v5500, %v5492
    %v5701 = vpack.c.b16 %v5501, %v5493
    %v5702 = vpack.c.b16 %v5502, %v5494
    %v5703 = vpack.c.b16 %v5503, %v5495
    %v5704 = vpack.c.b16 %v5504, %v5496
    %v5705 = vpack.c.b16 %v5513, %v5505
    %v5706 = vpack.c.b16 %v5514, %v5506
    %v5707 = vpack.c.b16 %v5515, %v5507
    %v5708 = vpack.c.b16 %v5516, %v5508
    %v5709 = vpack.c.b16 %v5517, %v5509
    %v5710 = vpack.c.b16 %v5518, %v5510
    %v5711 = vpack.c.b16 %v5519, %v5511
    %v5712 = vpack.c.b16 %v5520, %v5512
    %5905 = vmatprep.subr.bf16.mxu0 %v5578
    %5906 = vmatpush1.bf16.msra.mxu0 %v5577
    %5907 = vmatprep.subr.bf16.mxu0 %v5570
    %5908 = vmatpush1.bf16.msra.mxu0 %v5569
    %5909 = vmatprep.subr.bf16.mxu0 %v5562
    %5910 = vmatpush1.bf16.msra.mxu0 %v5561
    %5911 = vmatprep.subr.bf16.mxu0 %v5554
    %5912 = vmatpush1.bf16.msra.mxu0 %v5553
    %5913 = vmatprep.subr.bf16.mxu0 %v5546
    %5914 = vmatpush1.bf16.msra.mxu0 %v5545
    %5915 = vmatprep.subr.bf16.mxu0 %v5538
    %5916 = vmatpush1.bf16.msra.mxu0 %v5537
    %5917 = vmatprep.subr.bf16.mxu0 %v5530
    %5918 = vmatpush1.bf16.msra.mxu0 %v5529
    %5919 = vmatprep.subr.bf16.mxu0 %v5522
    %5920 = vmatpush1.bf16.msra.mxu0 %v5521
    %5921 = vmatprep.subr.bf16.mxu0 %v5642
    %5922 = vmatpush2.bf16.msra.mxu0 %v5641
    %5923 = vmatprep.subr.bf16.mxu0 %v5634
    %5924 = vmatpush2.bf16.msra.mxu0 %v5633
    %5925 = vmatprep.subr.bf16.mxu0 %v5626
    %5926 = vmatpush2.bf16.msra.mxu0 %v5625
    %5927 = vmatprep.subr.bf16.mxu0 %v5618
    %5928 = vmatpush2.bf16.msra.mxu0 %v5617
    %5929 = vmatprep.subr.bf16.mxu0 %v5610
    %5930 = vmatpush2.bf16.msra.mxu0 %v5609
    %5931 = vmatprep.subr.bf16.mxu0 %v5602
    %5932 = vmatpush2.bf16.msra.mxu0 %v5601
    %5933 = vmatprep.subr.bf16.mxu0 %v5594
    %5934 = vmatpush2.bf16.msra.mxu0 %v5593
    %5935 = vmatprep.subr.bf16.mxu0 %v5586
    %5936 = vmatpush2.bf16.msra.mxu0 %v5585
    %5937 = vmatprep.mubr.bf16.mxu0 %v4709
    %5938 = vmatmul.mubr.bf16.gmra.mxu0 %v4708
    %v5939 = vpop.f32.mrf.mxu0
    %v5940 = vadd.f32 %v4908, %v5939
    %v5941 = vpop.f32.mrf.mxu0
    %v5942 = vadd.f32 %v4912, %v5941
    %v5943 = vpop.f32.mrf.mxu0
    %v5944 = vpop.f32.mrf.mxu0
    %5945 = vdwg.mxu0
    %5946 = vmatprep.subr.bf16.mxu0 %v5706
    %5947 = vmatpush1.bf16.msra.mxu0 %v5705
    %5948 = vmatprep.subr.bf16.mxu0 %v5698
    %5949 = vmatpush1.bf16.msra.mxu0 %v5697
    %5950 = vmatprep.subr.bf16.mxu0 %v5690
    %5951 = vmatpush1.bf16.msra.mxu0 %v5689
    %5952 = vmatprep.subr.bf16.mxu0 %v5682
    %5953 = vmatpush1.bf16.msra.mxu0 %v5681
    %5954 = vmatprep.subr.bf16.mxu0 %v5674
    %5955 = vmatpush1.bf16.msra.mxu0 %v5673
    %5956 = vmatprep.subr.bf16.mxu0 %v5666
    %5957 = vmatpush1.bf16.msra.mxu0 %v5665
    %5958 = vmatprep.subr.bf16.mxu0 %v5658
    %5959 = vmatpush1.bf16.msra.mxu0 %v5657
    %5960 = vmatprep.subr.bf16.mxu0 %v5650
    %5961 = vmatpush1.bf16.msra.mxu0 %v5649
    %5962 = vmatprep.subr.bf16.mxu0 0
    %5963 = vmatpush2.bf16.msra.mxu0 0
    %5964 = vmatprep.subr.bf16.mxu0 0
    %5965 = vmatpush2.bf16.msra.mxu0 0
    %5966 = vmatprep.subr.bf16.mxu0 0
    %5967 = vmatpush2.bf16.msra.mxu0 0
    %5968 = vmatprep.subr.bf16.mxu0 0
    %5969 = vmatpush2.bf16.msra.mxu0 0
    %5970 = vmatprep.subr.bf16.mxu0 0
    %5971 = vmatpush2.bf16.msra.mxu0 0
    %5972 = vmatprep.subr.bf16.mxu0 0
    %5973 = vmatpush2.bf16.msra.mxu0 0
    %5974 = vmatprep.subr.bf16.mxu0 0
    %5975 = vmatpush2.bf16.msra.mxu0 0
    %5976 = vmatprep.subr.bf16.mxu0 0
    %5977 = vmatpush2.bf16.msra.mxu0 0
    %5978 = vmatprep.mubr.bf16.mxu0 0
    %5979 = vmatmul.mubr.bf16.gmra.mxu0 %v4710
    %v5980 = vpop.f32.mrf.mxu0
    %v5981 = vadd.f32 %v5940, %v5980
    %v5982 = vpop.f32.mrf.mxu0
    %v5983 = vadd.f32 %v5942, %v5982
    %v5984 = vpop.f32.mrf.mxu0
    %v5985 = vpop.f32.mrf.mxu0
    %5986 = vdwg.mxu0
    %5987 = vmatprep.subr.bf16.mxu0 %v5580
    %5988 = vmatpush1.bf16.msra.mxu0 %v5579
    %5989 = vmatprep.subr.bf16.mxu0 %v5572
    %5990 = vmatpush1.bf16.msra.mxu0 %v5571
    %5991 = vmatprep.subr.bf16.mxu0 %v5564
    %5992 = vmatpush1.bf16.msra.mxu0 %v5563
    %5993 = vmatprep.subr.bf16.mxu0 %v5556
    %5994 = vmatpush1.bf16.msra.mxu0 %v5555
    %5995 = vmatprep.subr.bf16.mxu0 %v5548
    %5996 = vmatpush1.bf16.msra.mxu0 %v5547
    %5997 = vmatprep.subr.bf16.mxu0 %v5540
    %5998 = vmatpush1.bf16.msra.mxu0 %v5539
    %5999 = vmatprep.subr.bf16.mxu0 %v5532
    %6000 = vmatpush1.bf16.msra.mxu0 %v5531
    %6001 = vmatprep.subr.bf16.mxu0 %v5524
    %6002 = vmatpush1.bf16.msra.mxu0 %v5523
    %6003 = vmatprep.subr.bf16.mxu0 %v5644
    %6004 = vmatpush2.bf16.msra.mxu0 %v5643
    %6005 = vmatprep.subr.bf16.mxu0 %v5636
    %6006 = vmatpush2.bf16.msra.mxu0 %v5635
    %6007 = vmatprep.subr.bf16.mxu0 %v5628
    %6008 = vmatpush2.bf16.msra.mxu0 %v5627
    %6009 = vmatprep.subr.bf16.mxu0 %v5620
    %6010 = vmatpush2.bf16.msra.mxu0 %v5619
    %6011 = vmatprep.subr.bf16.mxu0 %v5612
    %6012 = vmatpush2.bf16.msra.mxu0 %v5611
    %6013 = vmatprep.subr.bf16.mxu0 %v5604
    %6014 = vmatpush2.bf16.msra.mxu0 %v5603
    %6015 = vmatprep.subr.bf16.mxu0 %v5596
    %6016 = vmatpush2.bf16.msra.mxu0 %v5595
    %6017 = vmatprep.subr.bf16.mxu0 %v5588
    %6018 = vmatpush2.bf16.msra.mxu0 %v5587
    %6019 = vmatprep.mubr.bf16.mxu0 %v4709
    %6020 = vmatmul.mubr.bf16.gmra.mxu0 %v4708
    %v6021 = vpop.f32.mrf.mxu0
    %v6022 = vadd.f32 %v4916, %v6021
    %v6023 = vpop.f32.mrf.mxu0
    %v6024 = vadd.f32 %v4920, %v6023
    %v6025 = vpop.f32.mrf.mxu0
    %v6026 = vpop.f32.mrf.mxu0
    %6027 = vdwg.mxu0
    %6028 = vmatprep.subr.bf16.mxu0 %v5708
    %6029 = vmatpush1.bf16.msra.mxu0 %v5707
    %6030 = vmatprep.subr.bf16.mxu0 %v5700
    %6031 = vmatpush1.bf16.msra.mxu0 %v5699
    %6032 = vmatprep.subr.bf16.mxu0 %v5692
    %6033 = vmatpush1.bf16.msra.mxu0 %v5691
    %6034 = vmatprep.subr.bf16.mxu0 %v5684
    %6035 = vmatpush1.bf16.msra.mxu0 %v5683
    %6036 = vmatprep.subr.bf16.mxu0 %v5676
    %6037 = vmatpush1.bf16.msra.mxu0 %v5675
    %6038 = vmatprep.subr.bf16.mxu0 %v5668
    %6039 = vmatpush1.bf16.msra.mxu0 %v5667
    %6040 = vmatprep.subr.bf16.mxu0 %v5660
    %6041 = vmatpush1.bf16.msra.mxu0 %v5659
    %6042 = vmatprep.subr.bf16.mxu0 %v5652
    %6043 = vmatpush1.bf16.msra.mxu0 %v5651
    %6044 = vmatprep.subr.bf16.mxu0 0
    %6045 = vmatpush2.bf16.msra.mxu0 0
    %6046 = vmatprep.subr.bf16.mxu0 0
    %6047 = vmatpush2.bf16.msra.mxu0 0
    %6048 = vmatprep.subr.bf16.mxu0 0
    %6049 = vmatpush2.bf16.msra.mxu0 0
    %6050 = vmatprep.subr.bf16.mxu0 0
    %6051 = vmatpush2.bf16.msra.mxu0 0
    %6052 = vmatprep.subr.bf16.mxu0 0
    %6053 = vmatpush2.bf16.msra.mxu0 0
    %6054 = vmatprep.subr.bf16.mxu0 0
    %6055 = vmatpush2.bf16.msra.mxu0 0
    %6056 = vmatprep.subr.bf16.mxu0 0
    %6057 = vmatpush2.bf16.msra.mxu0 0
    %6058 = vmatprep.subr.bf16.mxu0 0
    %6059 = vmatpush2.bf16.msra.mxu0 0
    %6060 = vmatprep.mubr.bf16.mxu0 0
    %6061 = vmatmul.mubr.bf16.gmra.mxu0 %v4710
    %v6062 = vpop.f32.mrf.mxu0
    %v6063 = vadd.f32 %v6022, %v6062
    %v6064 = vpop.f32.mrf.mxu0
    %v6065 = vadd.f32 %v6024, %v6064
    %v6066 = vpop.f32.mrf.mxu0
    %v6067 = vpop.f32.mrf.mxu0
    %6068 = vdwg.mxu0
    %6069 = vmatprep.subr.bf16.mxu0 %v5582
    %6070 = vmatpush1.bf16.msra.mxu0 %v5581
    %6071 = vmatprep.subr.bf16.mxu0 %v5574
    %6072 = vmatpush1.bf16.msra.mxu0 %v5573
    %6073 = vmatprep.subr.bf16.mxu0 %v5566
    %6074 = vmatpush1.bf16.msra.mxu0 %v5565
    %6075 = vmatprep.subr.bf16.mxu0 %v5558
    %6076 = vmatpush1.bf16.msra.mxu0 %v5557
    %6077 = vmatprep.subr.bf16.mxu0 %v5550
    %6078 = vmatpush1.bf16.msra.mxu0 %v5549
    %6079 = vmatprep.subr.bf16.mxu0 %v5542
    %6080 = vmatpush1.bf16.msra.mxu0 %v5541
    %6081 = vmatprep.subr.bf16.mxu0 %v5534
    %6082 = vmatpush1.bf16.msra.mxu0 %v5533
    %6083 = vmatprep.subr.bf16.mxu0 %v5526
    %6084 = vmatpush1.bf16.msra.mxu0 %v5525
    %6085 = vmatprep.subr.bf16.mxu0 %v5646
    %6086 = vmatpush2.bf16.msra.mxu0 %v5645
    %6087 = vmatprep.subr.bf16.mxu0 %v5638
    %6088 = vmatpush2.bf16.msra.mxu0 %v5637
    %6089 = vmatprep.subr.bf16.mxu0 %v5630
    %6090 = vmatpush2.bf16.msra.mxu0 %v5629
    %6091 = vmatprep.subr.bf16.mxu0 %v5622
    %6092 = vmatpush2.bf16.msra.mxu0 %v5621
    %6093 = vmatprep.subr.bf16.mxu0 %v5614
    %6094 = vmatpush2.bf16.msra.mxu0 %v5613
    %6095 = vmatprep.subr.bf16.mxu0 %v5606
    %6096 = vmatpush2.bf16.msra.mxu0 %v5605
    %6097 = vmatprep.subr.bf16.mxu0 %v5598
    %6098 = vmatpush2.bf16.msra.mxu0 %v5597
    %6099 = vmatprep.subr.bf16.mxu0 %v5590
    %6100 = vmatpush2.bf16.msra.mxu0 %v5589
    %6101 = vmatprep.mubr.bf16.mxu0 %v4709
    %6102 = vmatmul.mubr.bf16.gmra.mxu0 %v4708
    %v6103 = vpop.f32.mrf.mxu0
    %v6104 = vadd.f32 %v4924, %v6103
    %v6105 = vpop.f32.mrf.mxu0
    %v6106 = vadd.f32 %v4928, %v6105
    %v6107 = vpop.f32.mrf.mxu0
    %v6108 = vpop.f32.mrf.mxu0
    %6109 = vdwg.mxu0
    %6110 = vmatprep.subr.bf16.mxu0 %v5710
    %6111 = vmatpush1.bf16.msra.mxu0 %v5709
    %6112 = vmatprep.subr.bf16.mxu0 %v5702
    %6113 = vmatpush1.bf16.msra.mxu0 %v5701
    %6114 = vmatprep.subr.bf16.mxu0 %v5694
    %6115 = vmatpush1.bf16.msra.mxu0 %v5693
    %6116 = vmatprep.subr.bf16.mxu0 %v5686
    %6117 = vmatpush1.bf16.msra.mxu0 %v5685
    %6118 = vmatprep.subr.bf16.mxu0 %v5678
    %6119 = vmatpush1.bf16.msra.mxu0 %v5677
    %6120 = vmatprep.subr.bf16.mxu0 %v5670
    %6121 = vmatpush1.bf16.msra.mxu0 %v5669
    %6122 = vmatprep.subr.bf16.mxu0 %v5662
    %6123 = vmatpush1.bf16.msra.mxu0 %v5661
    %6124 = vmatprep.subr.bf16.mxu0 %v5654
    %6125 = vmatpush1.bf16.msra.mxu0 %v5653
    %6126 = vmatprep.subr.bf16.mxu0 0
    %6127 = vmatpush2.bf16.msra.mxu0 0
    %6128 = vmatprep.subr.bf16.mxu0 0
    %6129 = vmatpush2.bf16.msra.mxu0 0
    %6130 = vmatprep.subr.bf16.mxu0 0
    %6131 = vmatpush2.bf16.msra.mxu0 0
    %6132 = vmatprep.subr.bf16.mxu0 0
    %6133 = vmatpush2.bf16.msra.mxu0 0
    %6134 = vmatprep.subr.bf16.mxu0 0
    %6135 = vmatpush2.bf16.msra.mxu0 0
    %6136 = vmatprep.subr.bf16.mxu0 0
    %6137 = vmatpush2.bf16.msra.mxu0 0
    %6138 = vmatprep.subr.bf16.mxu0 0
    %6139 = vmatpush2.bf16.msra.mxu0 0
    %6140 = vmatprep.subr.bf16.mxu0 0
    %6141 = vmatpush2.bf16.msra.mxu0 0
    %6142 = vmatprep.mubr.bf16.mxu0 0
    %6143 = vmatmul.mubr.bf16.gmra.mxu0 %v4710
    %v6144 = vpop.f32.mrf.mxu0
    %v6145 = vadd.f32 %v6104, %v6144
    %v6146 = vpop.f32.mrf.mxu0
    %v6147 = vadd.f32 %v6106, %v6146
    %v6148 = vpop.f32.mrf.mxu0
    %v6149 = vpop.f32.mrf.mxu0
    %6150 = vdwg.mxu0
    %6151 = vmatprep.subr.bf16.mxu0 %v5584
    %6152 = vmatpush1.bf16.msra.mxu0 %v5583
    %6153 = vmatprep.subr.bf16.mxu0 %v5576
    %6154 = vmatpush1.bf16.msra.mxu0 %v5575
    %6155 = vmatprep.subr.bf16.mxu0 %v5568
    %6156 = vmatpush1.bf16.msra.mxu0 %v5567
    %6157 = vmatprep.subr.bf16.mxu0 %v5560
    %6158 = vmatpush1.bf16.msra.mxu0 %v5559
    %6159 = vmatprep.subr.bf16.mxu0 %v5552
    %6160 = vmatpush1.bf16.msra.mxu0 %v5551
    %6161 = vmatprep.subr.bf16.mxu0 %v5544
    %6162 = vmatpush1.bf16.msra.mxu0 %v5543
    %6163 = vmatprep.subr.bf16.mxu0 %v5536
    %6164 = vmatpush1.bf16.msra.mxu0 %v5535
    %6165 = vmatprep.subr.bf16.mxu0 %v5528
    %6166 = vmatpush1.bf16.msra.mxu0 %v5527
    %6167 = vmatprep.subr.bf16.mxu0 %v5648
    %6168 = vmatpush2.bf16.msra.mxu0 %v5647
    %6169 = vmatprep.subr.bf16.mxu0 %v5640
    %6170 = vmatpush2.bf16.msra.mxu0 %v5639
    %6171 = vmatprep.subr.bf16.mxu0 %v5632
    %6172 = vmatpush2.bf16.msra.mxu0 %v5631
    %6173 = vmatprep.subr.bf16.mxu0 %v5624
    %6174 = vmatpush2.bf16.msra.mxu0 %v5623
    %6175 = vmatprep.subr.bf16.mxu0 %v5616
    %6176 = vmatpush2.bf16.msra.mxu0 %v5615
    %6177 = vmatprep.subr.bf16.mxu0 %v5608
    %6178 = vmatpush2.bf16.msra.mxu0 %v5607
    %6179 = vmatprep.subr.bf16.mxu0 %v5600
    %6180 = vmatpush2.bf16.msra.mxu0 %v5599
    %6181 = vmatprep.subr.bf16.mxu0 %v5592
    %6182 = vmatpush2.bf16.msra.mxu0 %v5591
    %6183 = vmatprep.mubr.bf16.mxu0 %v4709
    %6184 = vmatmul.mubr.bf16.gmra.mxu0 %v4708
    %v6185 = vpop.f32.mrf.mxu0
    %v6186 = vadd.f32 %v4932, %v6185
    %v6187 = vpop.f32.mrf.mxu0
    %v6188 = vadd.f32 %v4936, %v6187
    %v6189 = vpop.f32.mrf.mxu0
    %v6190 = vpop.f32.mrf.mxu0
    %6191 = vdwg.mxu0
    %6192 = vmatprep.subr.bf16.mxu0 %v5712
    %6193 = vmatpush1.bf16.msra.mxu0 %v5711
    %6194 = vmatprep.subr.bf16.mxu0 %v5704
    %6195 = vmatpush1.bf16.msra.mxu0 %v5703
    %6196 = vmatprep.subr.bf16.mxu0 %v5696
    %6197 = vmatpush1.bf16.msra.mxu0 %v5695
    %6198 = vmatprep.subr.bf16.mxu0 %v5688
    %6199 = vmatpush1.bf16.msra.mxu0 %v5687
    %6200 = vmatprep.subr.bf16.mxu0 %v5680
    %6201 = vmatpush1.bf16.msra.mxu0 %v5679
    %6202 = vmatprep.subr.bf16.mxu0 %v5672
    %6203 = vmatpush1.bf16.msra.mxu0 %v5671
    %6204 = vmatprep.subr.bf16.mxu0 %v5664
    %6205 = vmatpush1.bf16.msra.mxu0 %v5663
    %6206 = vmatprep.subr.bf16.mxu0 %v5656
    %6207 = vmatpush1.bf16.msra.mxu0 %v5655
    %6208 = vmatprep.subr.bf16.mxu0 0
    %6209 = vmatpush2.bf16.msra.mxu0 0
    %6210 = vmatprep.subr.bf16.mxu0 0
    %6211 = vmatpush2.bf16.msra.mxu0 0
    %6212 = vmatprep.subr.bf16.mxu0 0
    %6213 = vmatpush2.bf16.msra.mxu0 0
    %6214 = vmatprep.subr.bf16.mxu0 0
    %6215 = vmatpush2.bf16.msra.mxu0 0
    %6216 = vmatprep.subr.bf16.mxu0 0
    %6217 = vmatpush2.bf16.msra.mxu0 0
    %6218 = vmatprep.subr.bf16.mxu0 0
    %6219 = vmatpush2.bf16.msra.mxu0 0
    %6220 = vmatprep.subr.bf16.mxu0 0
    %6221 = vmatpush2.bf16.msra.mxu0 0
    %6222 = vmatprep.subr.bf16.mxu0 0
    %6223 = vmatpush2.bf16.msra.mxu0 0
    %6224 = vmatprep.mubr.bf16.mxu0 0
    %6225 = vmatmul.mubr.bf16.gmra.mxu0 %v4710
    %v6226 = vpop.f32.mrf.mxu0
    %v6227 = vadd.f32 %v6186, %v6226
    %v6228 = vpop.f32.mrf.mxu0
    %v6229 = vadd.f32 %v6188, %v6228
    %v6230 = vpop.f32.mrf.mxu0
    %v6231 = vpop.f32.mrf.mxu0
    %6232 = vdwg.mxu0
    %v6233 = vmax.f32 %v5981, 0.0
    %v6234 = vmax.f32 %v5983, 0.0
    %v6235 = vmax.f32 %v6063, 0.0
    %v6236 = vmax.f32 %v6065, 0.0
    %v6237 = vmax.f32 %v6145, 0.0
    %v6238 = vmax.f32 %v6147, 0.0
    %v6239 = vmax.f32 %v6227, 0.0
    %v6240 = vmax.f32 %v6229, 0.0
    %v6241 = vpack.c.bf16 %v6233, %v6233
    %v6242 = vpack.c.bf16 %v6234, %v6234
    %v6243 = vpack.c.bf16 %v6235, %v6235
    %v6244 = vpack.c.bf16 %v6236, %v6236
    %v6245 = vpack.c.bf16 %v6237, %v6237
    %v6246 = vpack.c.bf16 %v6238, %v6238
    %v6247 = vpack.c.bf16 %v6239, %v6239
    %v6248 = vpack.c.bf16 %v6240, %v6240
    %v6249 = vld [vmem:[#allocation14] sm:$0xf]
    %v6250 = vld [vmem:[#allocation14 + $0x4] sm:$0xf]
    %v6251 = vld [vmem:[#allocation14 + $0x8] sm:$0xf]
    %v6252 = vld [vmem:[#allocation14 + $0xc] sm:$0xf]
    %v6253 = vld [vmem:[#allocation14 + $0x10] sm:$0xf]
    %v6254 = vld [vmem:[#allocation14 + $0x14] sm:$0xf]
    %v6255 = vld [vmem:[#allocation14 + $0x18] sm:$0xf]
    %v6256 = vld [vmem:[#allocation14 + $0x1c] sm:$0xf]
    %v6257 = vld [vmem:[#allocation14 + $0x20] sm:$0xf]
    %v6258 = vld [vmem:[#allocation14 + $0x24] sm:$0xf]
    %v6259 = vld [vmem:[#allocation14 + $0x28] sm:$0xf]
    %v6260 = vld [vmem:[#allocation14 + $0x2c] sm:$0xf]
    %v6261 = vld [vmem:[#allocation14 + $0x30] sm:$0xf]
    %v6262 = vld [vmem:[#allocation14 + $0x34] sm:$0xf]
    %v6263 = vld [vmem:[#allocation14 + $0x38] sm:$0xf]
    %v6264 = vld [vmem:[#allocation14 + $0x3c] sm:$0xf]
    %v6265 = vld [vmem:[#allocation14 + $0x40] sm:$0xf]
    %v6266 = vld [vmem:[#allocation14 + $0x44] sm:$0xf]
    %v6267 = vld [vmem:[#allocation14 + $0x48] sm:$0xf]
    %v6268 = vld [vmem:[#allocation14 + $0x4c] sm:$0xf]
    %v6269 = vld [vmem:[#allocation14 + $0x50] sm:$0xf]
    %v6270 = vld [vmem:[#allocation14 + $0x54] sm:$0xf]
    %v6271 = vld [vmem:[#allocation14 + $0x58] sm:$0xf]
    %v6272 = vld [vmem:[#allocation14 + $0x5c] sm:$0xf]
    %v6273 = vld [vmem:[#allocation14 + $0x60] sm:$0xf]
    %v6274 = vld [vmem:[#allocation14 + $0x64] sm:$0xf]
    %v6275 = vld [vmem:[#allocation14 + $0x68] sm:$0xf]
    %v6276 = vld [vmem:[#allocation14 + $0x6c] sm:$0xf]
    %v6277 = vld [vmem:[#allocation14 + $0x70] sm:$0xf]
    %v6278 = vld [vmem:[#allocation14 + $0x74] sm:$0xf]
    %v6279 = vld [vmem:[#allocation14 + $0x78] sm:$0xf]
    %v6280 = vld [vmem:[#allocation14 + $0x7c] sm:$0xf]
    %v6281 = vld [vmem:[#allocation14 + $0x80] sm:$0xf]
    %v6282 = vld [vmem:[#allocation14 + $0x84] sm:$0xf]
    %v6283 = vld [vmem:[#allocation14 + $0x88] sm:$0xf]
    %v6284 = vld [vmem:[#allocation14 + $0x8c] sm:$0xf]
    %v6285 = vld [vmem:[#allocation14 + $0x90] sm:$0xf]
    %v6286 = vld [vmem:[#allocation14 + $0x94] sm:$0xf]
    %v6287 = vld [vmem:[#allocation14 + $0x98] sm:$0xf]
    %v6288 = vld [vmem:[#allocation14 + $0x9c] sm:$0xf]
    %v6289 = vld [vmem:[#allocation14 + $0xa0] sm:$0xf]
    %v6290 = vld [vmem:[#allocation14 + $0xa4] sm:$0xf]
    %v6291 = vld [vmem:[#allocation14 + $0xa8] sm:$0xf]
    %v6292 = vld [vmem:[#allocation14 + $0xac] sm:$0xf]
    %v6293 = vld [vmem:[#allocation14 + $0xb0] sm:$0xf]
    %v6294 = vld [vmem:[#allocation14 + $0xb4] sm:$0xf]
    %v6295 = vld [vmem:[#allocation14 + $0xb8] sm:$0xf]
    %v6296 = vld [vmem:[#allocation14 + $0xbc] sm:$0xf]
    %v6297 = vld [vmem:[#allocation14 + $0xc0] sm:$0xf]
    %v6298 = vld [vmem:[#allocation14 + $0xc4] sm:$0xf]
    %v6299 = vld [vmem:[#allocation14 + $0xc8] sm:$0xf]
    %v6300 = vld [vmem:[#allocation14 + $0xcc] sm:$0xf]
    %v6301 = vld [vmem:[#allocation14 + $0xd0] sm:$0xf]
    %v6302 = vld [vmem:[#allocation14 + $0xd4] sm:$0xf]
    %v6303 = vld [vmem:[#allocation14 + $0xd8] sm:$0xf]
    %v6304 = vld [vmem:[#allocation14 + $0xdc] sm:$0xf]
    %v6305 = vld [vmem:[#allocation14 + $0xe0] sm:$0xf]
    %v6306 = vld [vmem:[#allocation14 + $0xe4] sm:$0xf]
    %v6307 = vld [vmem:[#allocation14 + $0xe8] sm:$0xf]
    %v6308 = vld [vmem:[#allocation14 + $0xec] sm:$0xf]
    %v6309 = vld [vmem:[#allocation14 + $0xf0] sm:$0xf]
    %v6310 = vld [vmem:[#allocation14 + $0xf4] sm:$0xf]
    %v6311 = vld [vmem:[#allocation14 + $0xf8] sm:$0xf]
    %v6312 = vld [vmem:[#allocation14 + $0xfc] sm:$0xf]
    %v6313 = vld [vmem:[#allocation14 + $0x100] sm:$0xf]
    %v6314 = vld [vmem:[#allocation14 + $0x104] sm:$0xf]
    %v6315 = vld [vmem:[#allocation14 + $0x108] sm:$0xf]
    %v6316 = vld [vmem:[#allocation14 + $0x10c] sm:$0xf]
    %v6317 = vld [vmem:[#allocation14 + $0x110] sm:$0xf]
    %v6318 = vld [vmem:[#allocation14 + $0x114] sm:$0xf]
    %v6319 = vld [vmem:[#allocation14 + $0x118] sm:$0xf]
    %v6320 = vld [vmem:[#allocation14 + $0x11c] sm:$0xf]
    %v6321 = vld [vmem:[#allocation14 + $0x120] sm:$0xf]
    %v6322 = vld [vmem:[#allocation14 + $0x124] sm:$0xf]
    %v6323 = vld [vmem:[#allocation14 + $0x128] sm:$0xf]
    %v6324 = vld [vmem:[#allocation14 + $0x12c] sm:$0xf]
    %v6325 = vld [vmem:[#allocation14 + $0x130] sm:$0xf]
    %v6326 = vld [vmem:[#allocation14 + $0x134] sm:$0xf]
    %v6327 = vld [vmem:[#allocation14 + $0x138] sm:$0xf]
    %v6328 = vld [vmem:[#allocation14 + $0x13c] sm:$0xf]
    %v6329 = vld [vmem:[#allocation14 + $0x140] sm:$0xf]
    %v6330 = vld [vmem:[#allocation14 + $0x144] sm:$0xf]
    %v6331 = vld [vmem:[#allocation14 + $0x148] sm:$0xf]
    %v6332 = vld [vmem:[#allocation14 + $0x14c] sm:$0xf]
    %v6333 = vld [vmem:[#allocation14 + $0x150] sm:$0xf]
    %v6334 = vld [vmem:[#allocation14 + $0x154] sm:$0xf]
    %v6335 = vld [vmem:[#allocation14 + $0x158] sm:$0xf]
    %v6336 = vld [vmem:[#allocation14 + $0x15c] sm:$0xf]
    %v6337 = vld [vmem:[#allocation14 + $0x160] sm:$0xf]
    %v6338 = vld [vmem:[#allocation14 + $0x164] sm:$0xf]
    %v6339 = vld [vmem:[#allocation14 + $0x168] sm:$0xf]
    %v6340 = vld [vmem:[#allocation14 + $0x16c] sm:$0xf]
    %v6341 = vld [vmem:[#allocation14 + $0x170] sm:$0xf]
    %v6342 = vld [vmem:[#allocation14 + $0x174] sm:$0xf]
    %v6343 = vld [vmem:[#allocation14 + $0x178] sm:$0xf]
    %v6344 = vld [vmem:[#allocation14 + $0x17c] sm:$0xf]
    %v6345 = vld [vmem:[#allocation14 + $0x180] sm:$0xf]
    %v6346 = vld [vmem:[#allocation14 + $0x184] sm:$0xf]
    %v6347 = vld [vmem:[#allocation14 + $0x188] sm:$0xf]
    %v6348 = vld [vmem:[#allocation14 + $0x18c] sm:$0xf]
    %v6349 = vld [vmem:[#allocation14 + $0x190] sm:$0xf]
    %v6350 = vld [vmem:[#allocation14 + $0x194] sm:$0xf]
    %v6351 = vld [vmem:[#allocation14 + $0x198] sm:$0xf]
    %v6352 = vld [vmem:[#allocation14 + $0x19c] sm:$0xf]
    %v6353 = vld [vmem:[#allocation14 + $0x1a0] sm:$0xf]
    %v6354 = vld [vmem:[#allocation14 + $0x1a4] sm:$0xf]
    %v6355 = vld [vmem:[#allocation14 + $0x1a8] sm:$0xf]
    %v6356 = vld [vmem:[#allocation14 + $0x1ac] sm:$0xf]
    %v6357 = vld [vmem:[#allocation14 + $0x1b0] sm:$0xf]
    %v6358 = vld [vmem:[#allocation14 + $0x1b4] sm:$0xf]
    %v6359 = vld [vmem:[#allocation14 + $0x1b8] sm:$0xf]
    %v6360 = vld [vmem:[#allocation14 + $0x1bc] sm:$0xf]
    %v6361 = vld [vmem:[#allocation14 + $0x1c0] sm:$0xf]
    %v6362 = vld [vmem:[#allocation14 + $0x1c4] sm:$0xf]
    %v6363 = vld [vmem:[#allocation14 + $0x1c8] sm:$0xf]
    %v6364 = vld [vmem:[#allocation14 + $0x1cc] sm:$0xf]
    %v6365 = vld [vmem:[#allocation14 + $0x1d0] sm:$0xf]
    %v6366 = vld [vmem:[#allocation14 + $0x1d4] sm:$0xf]
    %v6367 = vld [vmem:[#allocation14 + $0x1d8] sm:$0xf]
    %v6368 = vld [vmem:[#allocation14 + $0x1dc] sm:$0xf]
    %v6369 = vld [vmem:[#allocation14 + $0x1e0] sm:$0xf]
    %v6370 = vld [vmem:[#allocation14 + $0x1e4] sm:$0xf]
    %v6371 = vld [vmem:[#allocation14 + $0x1e8] sm:$0xf]
    %v6372 = vld [vmem:[#allocation14 + $0x1ec] sm:$0xf]
    %v6373 = vld [vmem:[#allocation14 + $0x1f0] sm:$0xf]
    %v6374 = vld [vmem:[#allocation14 + $0x1f4] sm:$0xf]
    %v6375 = vld [vmem:[#allocation14 + $0x1f8] sm:$0xf]
    %v6376 = vld [vmem:[#allocation14 + $0x1fc] sm:$0xf]
    %v6377 = vld [vmem:[#allocation16] sm:$0x1]
    %v6379 = vlaneseq
    %v6380 = vshrl.u32 %v6379, 7
    %v6381 = vsub.s32 0, %v6380
    %v6382 = vrot.slane %v6377, %v6381
    %v6512 = vunpack.c.l.b16 %v6249
    %v6513 = vunpack.c.l.b16 %v6250
    %v6514 = vunpack.c.l.b16 %v6251
    %v6515 = vunpack.c.l.b16 %v6252
    %v6516 = vunpack.c.l.b16 %v6253
    %v6517 = vunpack.c.l.b16 %v6254
    %v6518 = vunpack.c.l.b16 %v6255
    %v6519 = vunpack.c.l.b16 %v6256
    %v6520 = vunpack.c.l.b16 %v6257
    %v6521 = vunpack.c.l.b16 %v6258
    %v6522 = vunpack.c.l.b16 %v6259
    %v6523 = vunpack.c.l.b16 %v6260
    %v6524 = vunpack.c.l.b16 %v6261
    %v6525 = vunpack.c.l.b16 %v6262
    %v6526 = vunpack.c.l.b16 %v6263
    %v6527 = vunpack.c.l.b16 %v6264
    %v6528 = vunpack.c.l.b16 %v6265
    %v6529 = vunpack.c.l.b16 %v6266
    %v6530 = vunpack.c.l.b16 %v6267
    %v6531 = vunpack.c.l.b16 %v6268
    %v6532 = vunpack.c.l.b16 %v6269
    %v6533 = vunpack.c.l.b16 %v6270
    %v6534 = vunpack.c.l.b16 %v6271
    %v6535 = vunpack.c.l.b16 %v6272
    %v6536 = vunpack.c.l.b16 %v6273
    %v6537 = vunpack.c.l.b16 %v6274
    %v6538 = vunpack.c.l.b16 %v6275
    %v6539 = vunpack.c.l.b16 %v6276
    %v6540 = vunpack.c.l.b16 %v6277
    %v6541 = vunpack.c.l.b16 %v6278
    %v6542 = vunpack.c.l.b16 %v6279
    %v6543 = vunpack.c.l.b16 %v6280
    %v6544 = vunpack.c.l.b16 %v6281
    %v6545 = vunpack.c.l.b16 %v6282
    %v6546 = vunpack.c.l.b16 %v6283
    %v6547 = vunpack.c.l.b16 %v6284
    %v6548 = vunpack.c.l.b16 %v6285
    %v6549 = vunpack.c.l.b16 %v6286
    %v6550 = vunpack.c.l.b16 %v6287
    %v6551 = vunpack.c.l.b16 %v6288
    %v6552 = vunpack.c.l.b16 %v6289
    %v6553 = vunpack.c.l.b16 %v6290
    %v6554 = vunpack.c.l.b16 %v6291
    %v6555 = vunpack.c.l.b16 %v6292
    %v6556 = vunpack.c.l.b16 %v6293
    %v6557 = vunpack.c.l.b16 %v6294
    %v6558 = vunpack.c.l.b16 %v6295
    %v6559 = vunpack.c.l.b16 %v6296
    %v6560 = vunpack.c.l.b16 %v6297
    %v6561 = vunpack.c.l.b16 %v6298
    %v6562 = vunpack.c.l.b16 %v6299
    %v6563 = vunpack.c.l.b16 %v6300
    %v6564 = vunpack.c.l.b16 %v6301
    %v6565 = vunpack.c.l.b16 %v6302
    %v6566 = vunpack.c.l.b16 %v6303
    %v6567 = vunpack.c.l.b16 %v6304
    %v6568 = vunpack.c.l.b16 %v6305
    %v6569 = vunpack.c.l.b16 %v6306
    %v6570 = vunpack.c.l.b16 %v6307
    %v6571 = vunpack.c.l.b16 %v6308
    %v6572 = vunpack.c.l.b16 %v6309
    %v6573 = vunpack.c.l.b16 %v6310
    %v6574 = vunpack.c.l.b16 %v6311
    %v6575 = vunpack.c.l.b16 %v6312
    %v6576 = vunpack.c.l.b16 %v6313
    %v6577 = vunpack.c.l.b16 %v6314
    %v6578 = vunpack.c.l.b16 %v6315
    %v6579 = vunpack.c.l.b16 %v6316
    %v6580 = vunpack.c.l.b16 %v6317
    %v6581 = vunpack.c.l.b16 %v6318
    %v6582 = vunpack.c.l.b16 %v6319
    %v6583 = vunpack.c.l.b16 %v6320
    %v6584 = vunpack.c.l.b16 %v6321
    %v6585 = vunpack.c.l.b16 %v6322
    %v6586 = vunpack.c.l.b16 %v6323
    %v6587 = vunpack.c.l.b16 %v6324
    %v6588 = vunpack.c.l.b16 %v6325
    %v6589 = vunpack.c.l.b16 %v6326
    %v6590 = vunpack.c.l.b16 %v6327
    %v6591 = vunpack.c.l.b16 %v6328
    %v6592 = vunpack.c.l.b16 %v6329
    %v6593 = vunpack.c.l.b16 %v6330
    %v6594 = vunpack.c.l.b16 %v6331
    %v6595 = vunpack.c.l.b16 %v6332
    %v6596 = vunpack.c.l.b16 %v6333
    %v6597 = vunpack.c.l.b16 %v6334
    %v6598 = vunpack.c.l.b16 %v6335
    %v6599 = vunpack.c.l.b16 %v6336
    %v6600 = vunpack.c.l.b16 %v6337
    %v6601 = vunpack.c.l.b16 %v6338
    %v6602 = vunpack.c.l.b16 %v6339
    %v6603 = vunpack.c.l.b16 %v6340
    %v6604 = vunpack.c.l.b16 %v6341
    %v6605 = vunpack.c.l.b16 %v6342
    %v6606 = vunpack.c.l.b16 %v6343
    %v6607 = vunpack.c.l.b16 %v6344
    %v6608 = vunpack.c.l.b16 %v6345
    %v6609 = vunpack.c.l.b16 %v6346
    %v6610 = vunpack.c.l.b16 %v6347
    %v6611 = vunpack.c.l.b16 %v6348
    %v6612 = vunpack.c.l.b16 %v6349
    %v6613 = vunpack.c.l.b16 %v6350
    %v6614 = vunpack.c.l.b16 %v6351
    %v6615 = vunpack.c.l.b16 %v6352
    %v6616 = vunpack.c.l.b16 %v6353
    %v6617 = vunpack.c.l.b16 %v6354
    %v6618 = vunpack.c.l.b16 %v6355
    %v6619 = vunpack.c.l.b16 %v6356
    %v6620 = vunpack.c.l.b16 %v6357
    %v6621 = vunpack.c.l.b16 %v6358
    %v6622 = vunpack.c.l.b16 %v6359
    %v6623 = vunpack.c.l.b16 %v6360
    %v6624 = vunpack.c.l.b16 %v6361
    %v6625 = vunpack.c.l.b16 %v6362
    %v6626 = vunpack.c.l.b16 %v6363
    %v6627 = vunpack.c.l.b16 %v6364
    %v6628 = vunpack.c.l.b16 %v6365
    %v6629 = vunpack.c.l.b16 %v6366
    %v6630 = vunpack.c.l.b16 %v6367
    %v6631 = vunpack.c.l.b16 %v6368
    %v6632 = vunpack.c.l.b16 %v6369
    %v6633 = vunpack.c.l.b16 %v6370
    %v6634 = vunpack.c.l.b16 %v6371
    %v6635 = vunpack.c.l.b16 %v6372
    %v6636 = vunpack.c.l.b16 %v6373
    %v6637 = vunpack.c.l.b16 %v6374
    %v6638 = vunpack.c.l.b16 %v6375
    %v6639 = vunpack.c.l.b16 %v6376
    %v6640 = vpack.c.b16 %v6513, %v6512
    %v6641 = vpack.c.b16 %v6515, %v6514
    %v6642 = vpack.c.b16 %v6517, %v6516
    %v6643 = vpack.c.b16 %v6519, %v6518
    %v6644 = vpack.c.b16 %v6521, %v6520
    %v6645 = vpack.c.b16 %v6523, %v6522
    %v6646 = vpack.c.b16 %v6525, %v6524
    %v6647 = vpack.c.b16 %v6527, %v6526
    %v6648 = vpack.c.b16 %v6529, %v6528
    %v6649 = vpack.c.b16 %v6531, %v6530
    %v6650 = vpack.c.b16 %v6533, %v6532
    %v6651 = vpack.c.b16 %v6535, %v6534
    %v6652 = vpack.c.b16 %v6537, %v6536
    %v6653 = vpack.c.b16 %v6539, %v6538
    %v6654 = vpack.c.b16 %v6541, %v6540
    %v6655 = vpack.c.b16 %v6543, %v6542
    %v6656 = vpack.c.b16 %v6545, %v6544
    %v6657 = vpack.c.b16 %v6547, %v6546
    %v6658 = vpack.c.b16 %v6549, %v6548
    %v6659 = vpack.c.b16 %v6551, %v6550
    %v6660 = vpack.c.b16 %v6553, %v6552
    %v6661 = vpack.c.b16 %v6555, %v6554
    %v6662 = vpack.c.b16 %v6557, %v6556
    %v6663 = vpack.c.b16 %v6559, %v6558
    %v6664 = vpack.c.b16 %v6561, %v6560
    %v6665 = vpack.c.b16 %v6563, %v6562
    %v6666 = vpack.c.b16 %v6565, %v6564
    %v6667 = vpack.c.b16 %v6567, %v6566
    %v6668 = vpack.c.b16 %v6569, %v6568
    %v6669 = vpack.c.b16 %v6571, %v6570
    %v6670 = vpack.c.b16 %v6573, %v6572
    %v6671 = vpack.c.b16 %v6575, %v6574
    %v6672 = vpack.c.b16 %v6577, %v6576
    %v6673 = vpack.c.b16 %v6579, %v6578
    %v6674 = vpack.c.b16 %v6581, %v6580
    %v6675 = vpack.c.b16 %v6583, %v6582
    %v6676 = vpack.c.b16 %v6585, %v6584
    %v6677 = vpack.c.b16 %v6587, %v6586
    %v6678 = vpack.c.b16 %v6589, %v6588
    %v6679 = vpack.c.b16 %v6591, %v6590
    %v6680 = vpack.c.b16 %v6593, %v6592
    %v6681 = vpack.c.b16 %v6595, %v6594
    %v6682 = vpack.c.b16 %v6597, %v6596
    %v6683 = vpack.c.b16 %v6599, %v6598
    %v6684 = vpack.c.b16 %v6601, %v6600
    %v6685 = vpack.c.b16 %v6603, %v6602
    %v6686 = vpack.c.b16 %v6605, %v6604
    %v6687 = vpack.c.b16 %v6607, %v6606
    %v6688 = vpack.c.b16 %v6609, %v6608
    %v6689 = vpack.c.b16 %v6611, %v6610
    %v6690 = vpack.c.b16 %v6613, %v6612
    %v6691 = vpack.c.b16 %v6615, %v6614
    %v6692 = vpack.c.b16 %v6617, %v6616
    %v6693 = vpack.c.b16 %v6619, %v6618
    %v6694 = vpack.c.b16 %v6621, %v6620
    %v6695 = vpack.c.b16 %v6623, %v6622
    %v6696 = vpack.c.b16 %v6625, %v6624
    %v6697 = vpack.c.b16 %v6627, %v6626
    %v6698 = vpack.c.b16 %v6629, %v6628
    %v6699 = vpack.c.b16 %v6631, %v6630
    %v6700 = vpack.c.b16 %v6633, %v6632
    %v6701 = vpack.c.b16 %v6635, %v6634
    %v6702 = vpack.c.b16 %v6637, %v6636
    %v6703 = vpack.c.b16 %v6639, %v6638
    %6768 = vmatprep.subr.bf16.mxu0 0
    %6769 = vmatpush1.bf16.msra.mxu0 %v6647
    %6770 = vmatprep.subr.bf16.mxu0 0
    %6771 = vmatpush1.bf16.msra.mxu0 %v6646
    %6772 = vmatprep.subr.bf16.mxu0 0
    %6773 = vmatpush1.bf16.msra.mxu0 %v6645
    %6774 = vmatprep.subr.bf16.mxu0 0
    %6775 = vmatpush1.bf16.msra.mxu0 %v6644
    %6776 = vmatprep.subr.bf16.mxu0 0
    %6777 = vmatpush1.bf16.msra.mxu0 %v6643
    %6778 = vmatprep.subr.bf16.mxu0 0
    %6779 = vmatpush1.bf16.msra.mxu0 %v6642
    %6780 = vmatprep.subr.bf16.mxu0 0
    %6781 = vmatpush1.bf16.msra.mxu0 %v6641
    %6782 = vmatprep.subr.bf16.mxu0 0
    %6783 = vmatpush1.bf16.msra.mxu0 %v6640
    %6784 = vmatprep.subr.bf16.mxu0 0
    %6785 = vmatpush2.bf16.msra.mxu0 %v6655
    %6786 = vmatprep.subr.bf16.mxu0 0
    %6787 = vmatpush2.bf16.msra.mxu0 %v6654
    %6788 = vmatprep.subr.bf16.mxu0 0
    %6789 = vmatpush2.bf16.msra.mxu0 %v6653
    %6790 = vmatprep.subr.bf16.mxu0 0
    %6791 = vmatpush2.bf16.msra.mxu0 %v6652
    %6792 = vmatprep.subr.bf16.mxu0 0
    %6793 = vmatpush2.bf16.msra.mxu0 %v6651
    %6794 = vmatprep.subr.bf16.mxu0 0
    %6795 = vmatpush2.bf16.msra.mxu0 %v6650
    %6796 = vmatprep.subr.bf16.mxu0 0
    %6797 = vmatpush2.bf16.msra.mxu0 %v6649
    %6798 = vmatprep.subr.bf16.mxu0 0
    %6799 = vmatpush2.bf16.msra.mxu0 %v6648
    %6800 = vmatprep.mubr.bf16.mxu0 %v6242
    %6801 = vmatmul.mubr.bf16.gmra.mxu0 %v6241
    %v6802 = vpop.f32.mrf.mxu0
    %v6803 = vadd.f32 %v6382, %v6802
    %v6804 = vpop.f32.mrf.mxu0
    %v6805 = vpop.f32.mrf.mxu0
    %v6806 = vpop.f32.mrf.mxu0
    %6807 = vdwg.mxu0
    %6808 = vmatprep.subr.bf16.mxu0 0
    %6809 = vmatpush1.bf16.msra.mxu0 %v6663
    %6810 = vmatprep.subr.bf16.mxu0 0
    %6811 = vmatpush1.bf16.msra.mxu0 %v6662
    %6812 = vmatprep.subr.bf16.mxu0 0
    %6813 = vmatpush1.bf16.msra.mxu0 %v6661
    %6814 = vmatprep.subr.bf16.mxu0 0
    %6815 = vmatpush1.bf16.msra.mxu0 %v6660
    %6816 = vmatprep.subr.bf16.mxu0 0
    %6817 = vmatpush1.bf16.msra.mxu0 %v6659
    %6818 = vmatprep.subr.bf16.mxu0 0
    %6819 = vmatpush1.bf16.msra.mxu0 %v6658
    %6820 = vmatprep.subr.bf16.mxu0 0
    %6821 = vmatpush1.bf16.msra.mxu0 %v6657
    %6822 = vmatprep.subr.bf16.mxu0 0
    %6823 = vmatpush1.bf16.msra.mxu0 %v6656
    %6824 = vmatprep.subr.bf16.mxu0 0
    %6825 = vmatpush2.bf16.msra.mxu0 %v6671
    %6826 = vmatprep.subr.bf16.mxu0 0
    %6827 = vmatpush2.bf16.msra.mxu0 %v6670
    %6828 = vmatprep.subr.bf16.mxu0 0
    %6829 = vmatpush2.bf16.msra.mxu0 %v6669
    %6830 = vmatprep.subr.bf16.mxu0 0
    %6831 = vmatpush2.bf16.msra.mxu0 %v6668
    %6832 = vmatprep.subr.bf16.mxu0 0
    %6833 = vmatpush2.bf16.msra.mxu0 %v6667
    %6834 = vmatprep.subr.bf16.mxu0 0
    %6835 = vmatpush2.bf16.msra.mxu0 %v6666
    %6836 = vmatprep.subr.bf16.mxu0 0
    %6837 = vmatpush2.bf16.msra.mxu0 %v6665
    %6838 = vmatprep.subr.bf16.mxu0 0
    %6839 = vmatpush2.bf16.msra.mxu0 %v6664
    %6840 = vmatprep.mubr.bf16.mxu0 %v6244
    %6841 = vmatmul.mubr.bf16.gmra.mxu0 %v6243
    %v6842 = vpop.f32.mrf.mxu0
    %v6843 = vadd.f32 %v6803, %v6842
    %v6844 = vpop.f32.mrf.mxu0
    %v6845 = vpop.f32.mrf.mxu0
    %v6846 = vpop.f32.mrf.mxu0
    %6847 = vdwg.mxu0
    %6848 = vmatprep.subr.bf16.mxu0 0
    %6849 = vmatpush1.bf16.msra.mxu0 %v6679
    %6850 = vmatprep.subr.bf16.mxu0 0
    %6851 = vmatpush1.bf16.msra.mxu0 %v6678
    %6852 = vmatprep.subr.bf16.mxu0 0
    %6853 = vmatpush1.bf16.msra.mxu0 %v6677
    %6854 = vmatprep.subr.bf16.mxu0 0
    %6855 = vmatpush1.bf16.msra.mxu0 %v6676
    %6856 = vmatprep.subr.bf16.mxu0 0
    %6857 = vmatpush1.bf16.msra.mxu0 %v6675
    %6858 = vmatprep.subr.bf16.mxu0 0
    %6859 = vmatpush1.bf16.msra.mxu0 %v6674
    %6860 = vmatprep.subr.bf16.mxu0 0
    %6861 = vmatpush1.bf16.msra.mxu0 %v6673
    %6862 = vmatprep.subr.bf16.mxu0 0
    %6863 = vmatpush1.bf16.msra.mxu0 %v6672
    %6864 = vmatprep.subr.bf16.mxu0 0
    %6865 = vmatpush2.bf16.msra.mxu0 %v6687
    %6866 = vmatprep.subr.bf16.mxu0 0
    %6867 = vmatpush2.bf16.msra.mxu0 %v6686
    %6868 = vmatprep.subr.bf16.mxu0 0
    %6869 = vmatpush2.bf16.msra.mxu0 %v6685
    %6870 = vmatprep.subr.bf16.mxu0 0
    %6871 = vmatpush2.bf16.msra.mxu0 %v6684
    %6872 = vmatprep.subr.bf16.mxu0 0
    %6873 = vmatpush2.bf16.msra.mxu0 %v6683
    %6874 = vmatprep.subr.bf16.mxu0 0
    %6875 = vmatpush2.bf16.msra.mxu0 %v6682
    %6876 = vmatprep.subr.bf16.mxu0 0
    %6877 = vmatpush2.bf16.msra.mxu0 %v6681
    %6878 = vmatprep.subr.bf16.mxu0 0
    %6879 = vmatpush2.bf16.msra.mxu0 %v6680
    %6880 = vmatprep.mubr.bf16.mxu0 %v6246
    %6881 = vmatmul.mubr.bf16.gmra.mxu0 %v6245
    %v6882 = vpop.f32.mrf.mxu0
    %v6883 = vadd.f32 %v6843, %v6882
    %v6884 = vpop.f32.mrf.mxu0
    %v6885 = vpop.f32.mrf.mxu0
    %v6886 = vpop.f32.mrf.mxu0
    %6887 = vdwg.mxu0
    %6888 = vmatprep.subr.bf16.mxu0 0
    %6889 = vmatpush1.bf16.msra.mxu0 %v6695
    %6890 = vmatprep.subr.bf16.mxu0 0
    %6891 = vmatpush1.bf16.msra.mxu0 %v6694
    %6892 = vmatprep.subr.bf16.mxu0 0
    %6893 = vmatpush1.bf16.msra.mxu0 %v6693
    %6894 = vmatprep.subr.bf16.mxu0 0
    %6895 = vmatpush1.bf16.msra.mxu0 %v6692
    %6896 = vmatprep.subr.bf16.mxu0 0
    %6897 = vmatpush1.bf16.msra.mxu0 %v6691
    %6898 = vmatprep.subr.bf16.mxu0 0
    %6899 = vmatpush1.bf16.msra.mxu0 %v6690
    %6900 = vmatprep.subr.bf16.mxu0 0
    %6901 = vmatpush1.bf16.msra.mxu0 %v6689
    %6902 = vmatprep.subr.bf16.mxu0 0
    %6903 = vmatpush1.bf16.msra.mxu0 %v6688
    %6904 = vmatprep.subr.bf16.mxu0 0
    %6905 = vmatpush2.bf16.msra.mxu0 %v6703
    %6906 = vmatprep.subr.bf16.mxu0 0
    %6907 = vmatpush2.bf16.msra.mxu0 %v6702
    %6908 = vmatprep.subr.bf16.mxu0 0
    %6909 = vmatpush2.bf16.msra.mxu0 %v6701
    %6910 = vmatprep.subr.bf16.mxu0 0
    %6911 = vmatpush2.bf16.msra.mxu0 %v6700
    %6912 = vmatprep.subr.bf16.mxu0 0
    %6913 = vmatpush2.bf16.msra.mxu0 %v6699
    %6914 = vmatprep.subr.bf16.mxu0 0
    %6915 = vmatpush2.bf16.msra.mxu0 %v6698
    %6916 = vmatprep.subr.bf16.mxu0 0
    %6917 = vmatpush2.bf16.msra.mxu0 %v6697
    %6918 = vmatprep.subr.bf16.mxu0 0
    %6919 = vmatpush2.bf16.msra.mxu0 %v6696
    %6920 = vmatprep.mubr.bf16.mxu0 %v6248
    %6921 = vmatmul.mubr.bf16.gmra.mxu0 %v6247
    %v6922 = vpop.f32.mrf.mxu0
    %v6923 = vadd.f32 %v6883, %v6922
    %v6924 = vpop.f32.mrf.mxu0
    %v6925 = vpop.f32.mrf.mxu0
    %v6926 = vpop.f32.mrf.mxu0
    %6927 = vdwg.mxu0
    %6928 = vst [vmem:[#allocation17] sm:$0xff] %v6923
    // Predicated region
    $region74: #{tpu_custom_call.1} parent=1 // pred_check
      _
    $region75: #{tpu_custom_call.1} parent=1 // pred_check_branch
      %6930 = sbr.rel (0) target = $region77
    $region76: #{tpu_custom_call.1} parent=1 // pred_region
      %s6932 = ssub.s32 128, 32
      %6933 = vsyncadd [#allocation4], %s6932
      %s6934 = sshll.u32 [#allocation17], 4
      %s6935 = int_to_ptr.vmem [resolvable:$true] %s6934
      %6940 = dma.vmem_to_hbm [thread:$0]  %s6935, 32, %s9, [#allocation4], 32, 32, 2
    $region77: #{tpu_custom_call.1} parent=1 // pred_fallthru
      _
    // Predicated region
    $region78: #{tpu_custom_call.1} parent=1 // pred_check
      _
    $region79: #{tpu_custom_call.1} parent=1 // pred_check_branch
      %6942 = sbr.rel (0) target = $region81
    $region80: #{tpu_custom_call.1} parent=1 // pred_region
      %6943 = dma.done [#allocation4], 128
    $region81: #{tpu_custom_call.1} parent=1 // pred_fallthru
      _
    %6944 = vsyncpa [#allocation3], 1
    %6945 = vsyncpa [#allocation6], 1
    %6946 = vsyncpa [#allocation9], 1
    %6947 = vsyncpa [#allocation12], 1
    %6948 = vsyncpa [#allocation15], 1
    %6949 = vsyncpa [#allocation4], 1

</llo_original>
